<compile_context>
chip_gen: v6e
topology: v6e:2x2x1
jax: 0.10.0
libtpu: 0.0.40
codegen_flags: <defaults>
</compile_context>

<pallas_src>
import numpy as np
import jax
import jax.numpy as jnp
from jax.experimental import pallas as pl
from jax.experimental.pallas import tpu as pltpu

LANE = 128


def _leaky_relu(v, slope=0.2):
    return jnp.where(v >= 0, v, slope * v)


def _batchnorm_train(v, gamma, beta, eps=0.8):
    # Training-mode BatchNorm1d: batch statistics, biased variance, eps=0.8.
    # Fused apply: one mul + one add on the (B, N) tensor, rest on (1, N).
    mu = jnp.mean(v, axis=0, keepdims=True)
    var = jnp.mean((v - mu) ** 2, axis=0, keepdims=True)
    scale = gamma * jax.lax.rsqrt(var + eps)
    shift = beta - mu * scale
    return v * scale + shift


def generator_kernel(labels_ref, noise_ref, vec_ref,
                     w1a_ref, w1b_ref, w2_ref, w3_ref, w4_ref, w5_ref,
                     out_ref):
    B = labels_ref.shape[0]
    n1 = w1a_ref.shape[1]      # 128
    n2 = w2_ref.shape[1]       # 256
    n3 = w3_ref.shape[1]       # 512
    n4 = w4_ref.shape[1]       # 1024
    n5 = w5_ref.shape[1]       # lane-padded output dim

    # --- packed per-layer vectors (single f32 slab, one DMA) ---
    b1  = vec_ref[0:1,  0:n1]
    b2  = vec_ref[1:2,  0:n2]
    g2  = vec_ref[2:3,  0:n2]
    be2 = vec_ref[3:4,  0:n2]
    b3  = vec_ref[4:5,  0:n3]
    g3  = vec_ref[5:6,  0:n3]
    be3 = vec_ref[6:7,  0:n3]
    b4  = vec_ref[7:8,  0:n4]
    g4  = vec_ref[8:9,  0:n4]
    be4 = vec_ref[9:10, 0:n4]
    b5  = vec_ref[10:11, 0:n5]

    # --- label one-hot over a full 128-lane tile (labels < num_classes <= 128) ---
    labels = labels_ref[...]                                      # (B, 1) int32
    iota = jax.lax.broadcasted_iota(jnp.int32, (B, LANE), 1)
    one_hot = (iota == labels).astype(jnp.bfloat16)               # (B, 128)

    # --- block(110, 128, normalize=False): folded, lane-aligned layer 1 ---
    # one_hot @ (emb @ W1[:NC])  +  noise_pad @ pad(W1[NC:])  + b1
    h = (jnp.dot(one_hot, w1a_ref[...], preferred_element_type=jnp.float32)
         + jnp.dot(noise_ref[...].astype(jnp.bfloat16), w1b_ref[...],
                   preferred_element_type=jnp.float32)
         + b1)
    h = _leaky_relu(h)

    # --- block(128, 256): Linear + BatchNorm1d(eps=0.8) + LeakyReLU ---
    h = jnp.dot(h.astype(jnp.bfloat16), w2_ref[...],
                preferred_element_type=jnp.float32) + b2
    h = _leaky_relu(_batchnorm_train(h, g2, be2))

    # --- block(256, 512) ---
    h = jnp.dot(h.astype(jnp.bfloat16), w3_ref[...],
                preferred_element_type=jnp.float32) + b3
    h = _leaky_relu(_batchnorm_train(h, g3, be3))

    # --- block(512, 1024) ---
    h = jnp.dot(h.astype(jnp.bfloat16), w4_ref[...],
                preferred_element_type=jnp.float32) + b4
    h = _leaky_relu(_batchnorm_train(h, g4, be4))

    # --- Linear(1024, prod(img_shape)) + Tanh (lane-padded output) ---
    img = jnp.tanh(jnp.dot(h.astype(jnp.bfloat16), w5_ref[...],
                           preferred_element_type=jnp.float32) + b5)
    out_ref[...] = img


def _pack_vectors(vecs, width):
    """Pack 1-D vectors as rows of a (rows_padded_to_8, width) f32 slab."""
    rows = []
    for v in vecs:
        v = jnp.asarray(v, jnp.float32).reshape(-1)
        rows.append(jnp.pad(v, (0, width - v.shape[0])))
    n_pad = -(-len(rows) // 8) * 8
    rows += [jnp.zeros((width,), jnp.float32)] * (n_pad - len(rows))
    return jnp.stack(rows)


def prepare_params(params, img_shape):
    """Fold / pad / repack the f32 PyTorch-equivalent params into kernel-ready form."""
    out_dim = int(np.prod(img_shape))
    out_pad = -(-out_dim // LANE) * LANE
    nc = params["emb"].shape[0]
    noise_dim = params["w1b"].shape[0]
    assert nc <= LANE and noise_dim <= LANE

    # Parameter-only constant: embedding folded into the first Linear's label rows.
    table = params["emb"] @ params["w1a"]                            # (nc, 128)  f32
    w1a = jnp.zeros((LANE, table.shape[1]), jnp.float32).at[:nc].set(table)
    w1b = jnp.zeros((LANE, params["w1b"].shape[1]), jnp.float32).at[:noise_dim].set(params["w1b"])
    w5 = jnp.zeros((params["w5"].shape[0], out_pad), jnp.float32).at[:, :out_dim].set(params["w5"])
    b5 = jnp.zeros((out_pad,), jnp.float32).at[:out_dim].set(params["b5"].reshape(-1))

    vec_w = max(1024, out_pad, params["w4"].shape[1])
    vec = _pack_vectors(
        [params["b1"], params["b2"], params["g2"], params["be2"],
         params["b3"], params["g3"], params["be3"],
         params["b4"], params["g4"], params["be4"], b5],
        vec_w)

    bf = jnp.bfloat16
    return {
        "vec": vec,
        "w1a": w1a.astype(bf), "w1b": w1b.astype(bf),
        "w2": params["w2"].astype(bf), "w3": params["w3"].astype(bf),
        "w4": params["w4"].astype(bf), "w5": w5.astype(bf),
        "out_dim": out_dim, "out_pad": out_pad,
    }


def generator_forward(noise, labels, prep, img_shape):
    B = noise.shape[0]
    out_dim = prep["out_dim"]
    out_pad = prep["out_pad"]
    labels2d = labels.reshape(B, 1).astype(jnp.int32)
    noise_pad = jnp.pad(noise.astype(jnp.float32),
                        ((0, 0), (0, LANE - noise.shape[1])))

    args = (labels2d, noise_pad, prep["vec"],
            prep["w1a"], prep["w1b"], prep["w2"], prep["w3"], prep["w4"], prep["w5"])
    vmem = pl.BlockSpec(memory_space=pltpu.MemorySpace.VMEM)
    out_flat = pl.pallas_call(
        generator_kernel,
        out_shape=jax.ShapeDtypeStruct((B, out_pad), jnp.float32),
        in_specs=[vmem] * len(args),
        out_specs=vmem,
        compiler_params=pltpu.CompilerParams(vmem_limit_bytes=16 << 20),
    )(*args)
    return out_flat[:, :out_dim].reshape(B, *img_shape)


def init_params(key, num_classes, img_shape, noise_dim=100):
    """Deterministic init mirroring the PyTorch module's parameter shapes (f32).
    Linear weights stored transposed: (in_feat, out_feat)."""
    out_dim = int(np.prod(img_shape))
    in1 = noise_dim + num_classes
    dims = [(in1, 128), (128, 256), (256, 512), (512, 1024), (1024, out_dim)]
    keys = jax.random.split(key, 16)

    def linear(kw, kb, fan_in, fan_out):
        bound = 1.0 / np.sqrt(fan_in)
        w = jax.random.uniform(kw, (fan_in, fan_out), jnp.float32, -bound, bound)
        b = jax.random.uniform(kb, (fan_out,), jnp.float32, -bound, bound)
        return w, b

    emb = jax.random.normal(keys[0], (num_classes, num_classes), jnp.float32)
    w1, b1 = linear(keys[1], keys[2], *dims[0])
    w2, b2 = linear(keys[3], keys[4], *dims[1])
    w3, b3 = linear(keys[5], keys[6], *dims[2])
    w4, b4 = linear(keys[7], keys[8], *dims[3])
    w5, b5 = linear(keys[9], keys[10], *dims[4])

    return {
        "emb": emb,
        # split W1 rows: first num_classes rows multiply the label embedding,
        # remaining rows multiply the noise (== cat(emb, noise) @ W1)
        "w1a": w1[:num_classes], "w1b": w1[num_classes:], "b1": b1,
        "w2": w2, "b2": b2,
        "g2": jnp.ones((256,), jnp.float32), "be2": jnp.zeros((256,), jnp.float32),
        "w3": w3, "b3": b3,
        "g3": jnp.ones((512,), jnp.float32), "be3": jnp.zeros((512,), jnp.float32),
        "w4": w4, "b4": b4,
        "g4": jnp.ones((1024,), jnp.float32), "be4": jnp.zeros((1024,), jnp.float32),
        "w5": w5, "b5": b5,
    }


def reference_forward_f32(noise, labels, params, img_shape):
    """PyTorch-faithful full-f32 reference (embedding gather + concat)."""
    emb = params["emb"][labels]
    x = jnp.concatenate([emb, noise], axis=-1)
    w1 = jnp.concatenate([params["w1a"], params["w1b"]], axis=0)
    h = _leaky_relu(x @ w1 + params["b1"])
    h = _leaky_relu(_batchnorm_train(h @ params["w2"] + params["b2"], params["g2"], params["be2"]))
    h = _leaky_relu(_batchnorm_train(h @ params["w3"] + params["b3"], params["g3"], params["be3"]))
    h = _leaky_relu(_batchnorm_train(h @ params["w4"] + params["b4"], params["g4"], params["be4"]))
    img = jnp.tanh(h @ params["w5"] + params["b5"])
    return img.reshape(noise.shape[0], *img_shape)


def reference_forward_mirrored(noise, labels, prep, params, img_shape):
    """Pure-JAX reference mirroring the kernel's precision policy (bf16 MXU inputs,
    f32 accumulation, f32 element-wise) — used for the tight correctness check."""
    bf = jnp.bfloat16
    out_dim = prep["out_dim"]

    def mm(a, w):
        return jnp.dot(a.astype(bf), w, preferred_element_type=jnp.float32)

    noise_pad = jnp.pad(noise, ((0, 0), (0, LANE - noise.shape[1])))
    one_hot = jax.nn.one_hot(labels, LANE, dtype=bf)
    b5_pad = jnp.zeros((prep["out_pad"],), jnp.float32).at[:out_dim].set(params["b5"])

    h = mm(one_hot, prep["w1a"]) + mm(noise_pad, prep["w1b"]) + params["b1"]
    h = _leaky_relu(h)
    h = _leaky_relu(_batchnorm_train(mm(h, prep["w2"]) + params["b2"], params["g2"], params["be2"]))
    h = _leaky_relu(_batchnorm_train(mm(h, prep["w3"]) + params["b3"], params["g3"], params["be3"]))
    h = _leaky_relu(_batchnorm_train(mm(h, prep["w4"]) + params["b4"], params["g4"], params["be4"]))
    img = jnp.tanh(mm(h, prep["w5"]) + b5_pad)
    return img[:, :out_dim].reshape(noise.shape[0], *img_shape)


if __name__ == "__main__":
    B = 8
    NUM_CLASSES = 10
    NOISE_DIM = 100           # fixed by the module (Linear(100 + num_classes, 128))
    IMG_SHAPE = (1, 8, 8)     # small synthetic image shape (C, H, W)

    key = jax.random.PRNGKey(0)
    k_param, k_noise, k_lab = jax.random.split(key, 3)

    params = init_params(k_param, NUM_CLASSES, IMG_SHAPE, NOISE_DIM)
    prep = prepare_params(params, IMG_SHAPE)
    noise = jax.random.normal(k_noise, (B, NOISE_DIM), jnp.float32)
    labels = jax.random.randint(k_lab, (B,), 0, NUM_CLASSES, jnp.int32)

    out = generator_forward(noise, labels, prep, IMG_SHAPE)
    out = jax.block_until_ready(out)
    assert out.shape == (B, *IMG_SHAPE), out.shape

    # Tight check vs. a reference that mirrors the kernel's bf16-weight precision policy.
    ref_m = reference_forward_mirrored(noise, labels, prep, params, IMG_SHAPE)
    np.testing.assert_allclose(np.asarray(out), np.asarray(ref_m), rtol=1e-3, atol=1e-3)

    # Loose check vs. the PyTorch-faithful full-f32 forward (bf16 weight rounding only).
    ref_f32 = reference_forward_f32(noise, labels, params, IMG_SHAPE)
    np.testing.assert_allclose(np.asarray(out), np.asarray(ref_f32), rtol=0.0, atol=5e-2)

    print("KERNEL_OK")
</pallas_src>

<mosaic_0001>
module attributes {stable_mosaic.version = 11 : i64} {
  func.func @generator_kernel(%arg0: memref<8x1xi32, #tpu.memory_space<vmem>>, %arg1: memref<8x128xf32, #tpu.memory_space<vmem>>, %arg2: memref<16x1024xf32, #tpu.memory_space<vmem>>, %arg3: memref<128x128xbf16, #tpu.memory_space<vmem>>, %arg4: memref<128x128xbf16, #tpu.memory_space<vmem>>, %arg5: memref<128x256xbf16, #tpu.memory_space<vmem>>, %arg6: memref<256x512xbf16, #tpu.memory_space<vmem>>, %arg7: memref<512x1024xbf16, #tpu.memory_space<vmem>>, %arg8: memref<1024x128xbf16, #tpu.memory_space<vmem>>, %arg9: memref<8x128xf32, #tpu.memory_space<vmem>>) attributes {dimension_semantics = [], scalar_prefetch = 0 : i64, scratch_operands = 0 : i64, tpu.core_type = #tpu.core_type<tc>} {
    %c0 = arith.constant 0 : index
    %c0_0 = arith.constant 0 : index
    %0 = vector.load %arg2[%c0, %c0_0] : memref<16x1024xf32, #tpu.memory_space<vmem>>, vector<1x128xf32>
    %c1 = arith.constant 1 : index
    %c0_1 = arith.constant 0 : index
    %1 = vector.load %arg2[%c1, %c0_1] : memref<16x1024xf32, #tpu.memory_space<vmem>>, vector<1x256xf32>
    %c2 = arith.constant 2 : index
    %c0_2 = arith.constant 0 : index
    %2 = vector.load %arg2[%c2, %c0_2] : memref<16x1024xf32, #tpu.memory_space<vmem>>, vector<1x256xf32>
    %c3 = arith.constant 3 : index
    %c0_3 = arith.constant 0 : index
    %3 = vector.load %arg2[%c3, %c0_3] : memref<16x1024xf32, #tpu.memory_space<vmem>>, vector<1x256xf32>
    %c4 = arith.constant 4 : index
    %c0_4 = arith.constant 0 : index
    %4 = vector.load %arg2[%c4, %c0_4] : memref<16x1024xf32, #tpu.memory_space<vmem>>, vector<1x512xf32>
    %c5 = arith.constant 5 : index
    %c0_5 = arith.constant 0 : index
    %5 = vector.load %arg2[%c5, %c0_5] : memref<16x1024xf32, #tpu.memory_space<vmem>>, vector<1x512xf32>
    %c6 = arith.constant 6 : index
    %c0_6 = arith.constant 0 : index
    %6 = vector.load %arg2[%c6, %c0_6] : memref<16x1024xf32, #tpu.memory_space<vmem>>, vector<1x512xf32>
    %c7 = arith.constant 7 : index
    %c0_7 = arith.constant 0 : index
    %7 = vector.load %arg2[%c7, %c0_7] : memref<16x1024xf32, #tpu.memory_space<vmem>>, vector<1x1024xf32>
    %c8 = arith.constant 8 : index
    %c0_8 = arith.constant 0 : index
    %8 = vector.load %arg2[%c8, %c0_8] : memref<16x1024xf32, #tpu.memory_space<vmem>>, vector<1x1024xf32>
    %c9 = arith.constant 9 : index
    %c0_9 = arith.constant 0 : index
    %9 = vector.load %arg2[%c9, %c0_9] : memref<16x1024xf32, #tpu.memory_space<vmem>>, vector<1x1024xf32>
    %c10 = arith.constant 10 : index
    %c0_10 = arith.constant 0 : index
    %10 = vector.load %arg2[%c10, %c0_10] : memref<16x1024xf32, #tpu.memory_space<vmem>>, vector<1x128xf32>
    %c0_11 = arith.constant 0 : index
    %c0_12 = arith.constant 0 : index
    %11 = vector.load %arg0[%c0_11, %c0_12] : memref<8x1xi32, #tpu.memory_space<vmem>>, vector<8x1xi32>
    %12 = tpu.iota {dimensions = array<i32: 1>} : vector<8x128xi32>
    %13 = vector.broadcast %11 : vector<8x1xi32> to vector<8x128xi32>
    %14 = arith.cmpi eq, %12, %13 : vector<8x128xi32>
    %15 = arith.extui %14 : vector<8x128xi1> to vector<8x128xi32>
    %16 = arith.sitofp %15 : vector<8x128xi32> to vector<8x128xf32>
    %17 = arith.truncf %16 : vector<8x128xf32> to vector<8x128xbf16>
    %c0_13 = arith.constant 0 : index
    %c0_14 = arith.constant 0 : index
    %18 = vector.load %arg3[%c0_13, %c0_14] : memref<128x128xbf16, #tpu.memory_space<vmem>>, vector<128x128xbf16>
    %cst = arith.constant dense<0.000000e+00> : vector<8x128xf32>
    %19 = tpu.matmul %17, %18, %cst {dimension_numbers = #tpu.dot_dimension_numbers<[1], [0], [0], [1], [0, 0, 1, 1], [], []>} : vector<8x128xbf16>, vector<128x128xbf16>, vector<8x128xf32> -> vector<8x128xf32>
    %c0_15 = arith.constant 0 : index
    %c0_16 = arith.constant 0 : index
    %20 = vector.load %arg1[%c0_15, %c0_16] : memref<8x128xf32, #tpu.memory_space<vmem>>, vector<8x128xf32>
    %21 = arith.truncf %20 : vector<8x128xf32> to vector<8x128xbf16>
    %c0_17 = arith.constant 0 : index
    %c0_18 = arith.constant 0 : index
    %22 = vector.load %arg4[%c0_17, %c0_18] : memref<128x128xbf16, #tpu.memory_space<vmem>>, vector<128x128xbf16>
    %cst_19 = arith.constant dense<0.000000e+00> : vector<8x128xf32>
    %23 = tpu.matmul %21, %22, %cst_19 {dimension_numbers = #tpu.dot_dimension_numbers<[1], [0], [0], [1], [0, 0, 1, 1], [], []>} : vector<8x128xbf16>, vector<128x128xbf16>, vector<8x128xf32> -> vector<8x128xf32>
    %24 = arith.addf %19, %23 : vector<8x128xf32>
    %25 = vector.broadcast %0 : vector<1x128xf32> to vector<8x128xf32>
    %26 = arith.addf %24, %25 : vector<8x128xf32>
    %cst_20 = arith.constant 0.000000e+00 : f32
    %27 = vector.broadcast %cst_20 : f32 to vector<8x128xf32>
    %28 = arith.cmpf oge, %26, %27 : vector<8x128xf32>
    %cst_21 = arith.constant 2.000000e-01 : f32
    %29 = vector.broadcast %cst_21 : f32 to vector<8x128xf32>
    %30 = arith.mulf %29, %26 : vector<8x128xf32>
    %31 = arith.select %28, %26, %30 : vector<8x128xi1>, vector<8x128xf32>
    %32 = arith.truncf %31 : vector<8x128xf32> to vector<8x128xbf16>
    %c0_22 = arith.constant 0 : index
    %c0_23 = arith.constant 0 : index
    %33 = vector.load %arg5[%c0_22, %c0_23] : memref<128x256xbf16, #tpu.memory_space<vmem>>, vector<128x256xbf16>
    %cst_24 = arith.constant dense<0.000000e+00> : vector<8x256xf32>
    %34 = tpu.matmul %32, %33, %cst_24 {dimension_numbers = #tpu.dot_dimension_numbers<[1], [0], [0], [1], [0, 0, 1, 1], [], []>} : vector<8x128xbf16>, vector<128x256xbf16>, vector<8x256xf32> -> vector<8x256xf32>
    %35 = vector.broadcast %1 : vector<1x256xf32> to vector<8x256xf32>
    %36 = arith.addf %34, %35 : vector<8x256xf32>
    %cst_25 = arith.constant dense<0.000000e+00> : vector<256xf32>
    %37 = vector.multi_reduction <add>, %36, %cst_25 [0] : vector<8x256xf32> to vector<256xf32>
    %38 = vector.shape_cast %37 : vector<256xf32> to vector<1x256xf32>
    %cst_26 = arith.constant 8.000000e+00 : f32
    %39 = vector.broadcast %cst_26 : f32 to vector<1x256xf32>
    %40 = arith.divf %38, %39 : vector<1x256xf32>
    %41 = vector.broadcast %40 : vector<1x256xf32> to vector<8x256xf32>
    %42 = arith.subf %36, %41 : vector<8x256xf32>
    %43 = arith.mulf %42, %42 : vector<8x256xf32>
    %cst_27 = arith.constant dense<0.000000e+00> : vector<256xf32>
    %44 = vector.multi_reduction <add>, %43, %cst_27 [0] : vector<8x256xf32> to vector<256xf32>
    %45 = vector.shape_cast %44 : vector<256xf32> to vector<1x256xf32>
    %cst_28 = arith.constant 8.000000e+00 : f32
    %46 = vector.broadcast %cst_28 : f32 to vector<1x256xf32>
    %47 = arith.divf %45, %46 : vector<1x256xf32>
    %cst_29 = arith.constant 8.000000e-01 : f32
    %48 = vector.broadcast %cst_29 : f32 to vector<1x256xf32>
    %49 = arith.addf %47, %48 : vector<1x256xf32>
    %50 = math.rsqrt %49 : vector<1x256xf32>
    %51 = arith.mulf %2, %50 : vector<1x256xf32>
    %52 = arith.mulf %40, %51 : vector<1x256xf32>
    %53 = arith.subf %3, %52 : vector<1x256xf32>
    %54 = vector.broadcast %51 : vector<1x256xf32> to vector<8x256xf32>
    %55 = arith.mulf %36, %54 : vector<8x256xf32>
    %56 = vector.broadcast %53 : vector<1x256xf32> to vector<8x256xf32>
    %57 = arith.addf %55, %56 : vector<8x256xf32>
    %cst_30 = arith.constant 0.000000e+00 : f32
    %58 = vector.broadcast %cst_30 : f32 to vector<8x256xf32>
    %59 = arith.cmpf oge, %57, %58 : vector<8x256xf32>
    %cst_31 = arith.constant 2.000000e-01 : f32
    %60 = vector.broadcast %cst_31 : f32 to vector<8x256xf32>
    %61 = arith.mulf %60, %57 : vector<8x256xf32>
    %62 = arith.select %59, %57, %61 : vector<8x256xi1>, vector<8x256xf32>
    %63 = arith.truncf %62 : vector<8x256xf32> to vector<8x256xbf16>
    %c0_32 = arith.constant 0 : index
    %c0_33 = arith.constant 0 : index
    %64 = vector.load %arg6[%c0_32, %c0_33] : memref<256x512xbf16, #tpu.memory_space<vmem>>, vector<256x512xbf16>
    %cst_34 = arith.constant dense<0.000000e+00> : vector<8x512xf32>
    %65 = tpu.matmul %63, %64, %cst_34 {dimension_numbers = #tpu.dot_dimension_numbers<[1], [0], [0], [1], [0, 0, 1, 1], [], []>} : vector<8x256xbf16>, vector<256x512xbf16>, vector<8x512xf32> -> vector<8x512xf32>
    %66 = vector.broadcast %4 : vector<1x512xf32> to vector<8x512xf32>
    %67 = arith.addf %65, %66 : vector<8x512xf32>
    %cst_35 = arith.constant dense<0.000000e+00> : vector<512xf32>
    %68 = vector.multi_reduction <add>, %67, %cst_35 [0] : vector<8x512xf32> to vector<512xf32>
    %69 = vector.shape_cast %68 : vector<512xf32> to vector<1x512xf32>
    %cst_36 = arith.constant 8.000000e+00 : f32
    %70 = vector.broadcast %cst_36 : f32 to vector<1x512xf32>
    %71 = arith.divf %69, %70 : vector<1x512xf32>
    %72 = vector.broadcast %71 : vector<1x512xf32> to vector<8x512xf32>
    %73 = arith.subf %67, %72 : vector<8x512xf32>
    %74 = arith.mulf %73, %73 : vector<8x512xf32>
    %cst_37 = arith.constant dense<0.000000e+00> : vector<512xf32>
    %75 = vector.multi_reduction <add>, %74, %cst_37 [0] : vector<8x512xf32> to vector<512xf32>
    %76 = vector.shape_cast %75 : vector<512xf32> to vector<1x512xf32>
    %cst_38 = arith.constant 8.000000e+00 : f32
    %77 = vector.broadcast %cst_38 : f32 to vector<1x512xf32>
    %78 = arith.divf %76, %77 : vector<1x512xf32>
    %cst_39 = arith.constant 8.000000e-01 : f32
    %79 = vector.broadcast %cst_39 : f32 to vector<1x512xf32>
    %80 = arith.addf %78, %79 : vector<1x512xf32>
    %81 = math.rsqrt %80 : vector<1x512xf32>
    %82 = arith.mulf %5, %81 : vector<1x512xf32>
    %83 = arith.mulf %71, %82 : vector<1x512xf32>
    %84 = arith.subf %6, %83 : vector<1x512xf32>
    %85 = vector.broadcast %82 : vector<1x512xf32> to vector<8x512xf32>
    %86 = arith.mulf %67, %85 : vector<8x512xf32>
    %87 = vector.broadcast %84 : vector<1x512xf32> to vector<8x512xf32>
    %88 = arith.addf %86, %87 : vector<8x512xf32>
    %cst_40 = arith.constant 0.000000e+00 : f32
    %89 = vector.broadcast %cst_40 : f32 to vector<8x512xf32>
    %90 = arith.cmpf oge, %88, %89 : vector<8x512xf32>
    %cst_41 = arith.constant 2.000000e-01 : f32
    %91 = vector.broadcast %cst_41 : f32 to vector<8x512xf32>
    %92 = arith.mulf %91, %88 : vector<8x512xf32>
    %93 = arith.select %90, %88, %92 : vector<8x512xi1>, vector<8x512xf32>
    %94 = arith.truncf %93 : vector<8x512xf32> to vector<8x512xbf16>
    %c0_42 = arith.constant 0 : index
    %c0_43 = arith.constant 0 : index
    %95 = vector.load %arg7[%c0_42, %c0_43] : memref<512x1024xbf16, #tpu.memory_space<vmem>>, vector<512x1024xbf16>
    %cst_44 = arith.constant dense<0.000000e+00> : vector<8x1024xf32>
    %96 = tpu.matmul %94, %95, %cst_44 {dimension_numbers = #tpu.dot_dimension_numbers<[1], [0], [0], [1], [0, 0, 1, 1], [], []>} : vector<8x512xbf16>, vector<512x1024xbf16>, vector<8x1024xf32> -> vector<8x1024xf32>
    %97 = vector.broadcast %7 : vector<1x1024xf32> to vector<8x1024xf32>
    %98 = arith.addf %96, %97 : vector<8x1024xf32>
    %cst_45 = arith.constant dense<0.000000e+00> : vector<1024xf32>
    %99 = vector.multi_reduction <add>, %98, %cst_45 [0] : vector<8x1024xf32> to vector<1024xf32>
    %100 = vector.shape_cast %99 : vector<1024xf32> to vector<1x1024xf32>
    %cst_46 = arith.constant 8.000000e+00 : f32
    %101 = vector.broadcast %cst_46 : f32 to vector<1x1024xf32>
    %102 = arith.divf %100, %101 : vector<1x1024xf32>
    %103 = vector.broadcast %102 : vector<1x1024xf32> to vector<8x1024xf32>
    %104 = arith.subf %98, %103 : vector<8x1024xf32>
    %105 = arith.mulf %104, %104 : vector<8x1024xf32>
    %cst_47 = arith.constant dense<0.000000e+00> : vector<1024xf32>
    %106 = vector.multi_reduction <add>, %105, %cst_47 [0] : vector<8x1024xf32> to vector<1024xf32>
    %107 = vector.shape_cast %106 : vector<1024xf32> to vector<1x1024xf32>
    %cst_48 = arith.constant 8.000000e+00 : f32
    %108 = vector.broadcast %cst_48 : f32 to vector<1x1024xf32>
    %109 = arith.divf %107, %108 : vector<1x1024xf32>
    %cst_49 = arith.constant 8.000000e-01 : f32
    %110 = vector.broadcast %cst_49 : f32 to vector<1x1024xf32>
    %111 = arith.addf %109, %110 : vector<1x1024xf32>
    %112 = math.rsqrt %111 : vector<1x1024xf32>
    %113 = arith.mulf %8, %112 : vector<1x1024xf32>
    %114 = arith.mulf %102, %113 : vector<1x1024xf32>
    %115 = arith.subf %9, %114 : vector<1x1024xf32>
    %116 = vector.broadcast %113 : vector<1x1024xf32> to vector<8x1024xf32>
    %117 = arith.mulf %98, %116 : vector<8x1024xf32>
    %118 = vector.broadcast %115 : vector<1x1024xf32> to vector<8x1024xf32>
    %119 = arith.addf %117, %118 : vector<8x1024xf32>
    %cst_50 = arith.constant 0.000000e+00 : f32
    %120 = vector.broadcast %cst_50 : f32 to vector<8x1024xf32>
    %121 = arith.cmpf oge, %119, %120 : vector<8x1024xf32>
    %cst_51 = arith.constant 2.000000e-01 : f32
    %122 = vector.broadcast %cst_51 : f32 to vector<8x1024xf32>
    %123 = arith.mulf %122, %119 : vector<8x1024xf32>
    %124 = arith.select %121, %119, %123 : vector<8x1024xi1>, vector<8x1024xf32>
    %125 = arith.truncf %124 : vector<8x1024xf32> to vector<8x1024xbf16>
    %c0_52 = arith.constant 0 : index
    %c0_53 = arith.constant 0 : index
    %126 = vector.load %arg8[%c0_52, %c0_53] : memref<1024x128xbf16, #tpu.memory_space<vmem>>, vector<1024x128xbf16>
    %cst_54 = arith.constant dense<0.000000e+00> : vector<8x128xf32>
    %127 = tpu.matmul %125, %126, %cst_54 {dimension_numbers = #tpu.dot_dimension_numbers<[1], [0], [0], [1], [0, 0, 1, 1], [], []>} : vector<8x1024xbf16>, vector<1024x128xbf16>, vector<8x128xf32> -> vector<8x128xf32>
    %128 = vector.broadcast %10 : vector<1x128xf32> to vector<8x128xf32>
    %129 = arith.addf %127, %128 : vector<8x128xf32>
    %130 = math.tanh %129 : vector<8x128xf32>
    %c0_55 = arith.constant 0 : index
    %c0_56 = arith.constant 0 : index
    %131 = vector.load %arg9[%c0_55, %c0_56] : memref<8x128xf32, #tpu.memory_space<vmem>>, vector<8x128xf32>
    tpu.vector_store %arg9[%c0_55, %c0_56], %130 {strides = array<i32>} : memref<8x128xf32, #tpu.memory_space<vmem>>, vector<8x128xf32>,
    return
  }
}

</mosaic_0001>

<llo_original>
// kernel: tpu_custom_call.1
$region0: #{tpu_custom_call.1}
  #allocation0 [shape = 'u32[]', space=smem, size = 0x4, offset = 0x4, fixed_abs, tag = 'smem constant byte address 0x4 - core index']
  #allocation1 [shape = 'u32[144,128]{1,0:T(1,128)}', space=vmem, size = 0x12000, scoped, tag = 'internal scratch']
  %s0 = inlined_call_operand.vmem [shape: s32[8,1], index: 0, kind: input, shape index: {}]
  %s1 = inlined_call_operand.vmem [shape: f32[8,128], index: 1, kind: input, shape index: {}]
  %s2 = inlined_call_operand.hbm [shape: f32[16,1024], index: 2, kind: input, shape index: {}]
  %s3 = inlined_call_operand.hbm [shape: bf16[128,128], index: 3, kind: input, shape index: {}]
  %s4 = inlined_call_operand.hbm [shape: bf16[128,128], index: 4, kind: input, shape index: {}]
  %s5 = inlined_call_operand.hbm [shape: bf16[128,256], index: 5, kind: input, shape index: {}]
  %s6 = inlined_call_operand.hbm [shape: bf16[256,512], index: 6, kind: input, shape index: {}]
  %s7 = inlined_call_operand.hbm [shape: bf16[512,1024], index: 7, kind: input, shape index: {}]
  %s8 = inlined_call_operand.hbm [shape: bf16[1024,128], index: 8, kind: input, shape index: {}]
  %s9 = inlined_call_operand.hbm [shape: f32[8,128], index: 9, kind: output, shape index: {}]
  %s10 = sld [smem:[#allocation0]]
  $region74: #{tpu_custom_call.1} parent=0
    _
  %s12 = ssub.s32 1, %s10
  %s13 = scalar_select 0, %s12, %s10
  $region1: #{tpu_custom_call.1} parent=0
    #allocation2 [shape = 'u8[65536]{0}', space=vmem, size = 0x10000, scoped, tag = 'input window, operand 2, single buffered']
    #allocation3 [shape = 's32[1]{0}', space=sflag, size = 0x4, scoped, tag = 'scoped memory for tpu_custom_call.1']
    #allocation4 [shape = 's32[1]{0}', space=sflag, size = 0x4, scoped, tag = 'scoped memory for tpu_custom_call.1']
    #allocation5 [shape = 'u8[32768]{0}', space=vmem, size = 0x8000, scoped, tag = 'input window, operand 3, single buffered']
    #allocation6 [shape = 's32[1]{0}', space=sflag, size = 0x4, scoped, tag = 'scoped memory for tpu_custom_call.1']
    #allocation7 [shape = 'u8[32768]{0}', space=vmem, size = 0x8000, scoped, tag = 'input window, operand 4, single buffered']
    #allocation8 [shape = 'u8[65536]{0}', space=vmem, size = 0x10000, scoped, tag = 'input window, operand 5, single buffered']
    #allocation9 [shape = 's32[1]{0}', space=sflag, size = 0x4, scoped, tag = 'scoped memory for tpu_custom_call.1']
    #allocation10 [shape = 'u8[262144]{0}', space=vmem, size = 0x40000, scoped, tag = 'input window, operand 6, single buffered']
    #allocation11 [shape = 'u8[1048576]{0}', space=vmem, size = 0x100000, scoped, tag = 'input window, operand 7, single buffered']
    #allocation12 [shape = 's32[1]{0}', space=sflag, size = 0x4, scoped, tag = 'scoped memory for tpu_custom_call.1']
    #allocation13 [shape = 'u8[262144]{0}', space=vmem, size = 0x40000, scoped, tag = 'input window, operand 8, single buffered']
    #allocation14 [shape = 'u8[4096]{0}', space=vmem, size = 0x1000, scoped, tag = 'output window, operand 0, single buffered']
    %14 = vsyncpa [#allocation3], 0
    %15 = vsyncpa [#allocation6], 0
    %16 = vsyncpa [#allocation9], 0
    %17 = vsyncpa [#allocation12], 0
    %18 = vsyncpa [#allocation4], 0
    // Predicated region
    $region2: #{tpu_custom_call.1} parent=1 // pred_check
      _
    $region3: #{tpu_custom_call.1} parent=1 // pred_check_branch
      %20 = sbr.rel (0) target = $region5
    $region4: #{tpu_custom_call.1} parent=1 // pred_region
      _
    $region5: #{tpu_custom_call.1} parent=1 // pred_fallthru
      _
    // Predicated region
    $region6: #{tpu_custom_call.1} parent=1 // pred_check
      _
    $region7: #{tpu_custom_call.1} parent=1 // pred_check_branch
      %22 = sbr.rel (0) target = $region9
    $region8: #{tpu_custom_call.1} parent=1 // pred_region
      _
    $region9: #{tpu_custom_call.1} parent=1 // pred_fallthru
      _
    // Predicated region
    $region10: #{tpu_custom_call.1} parent=1 // pred_check
      _
    $region11: #{tpu_custom_call.1} parent=1 // pred_check_branch
      %24 = sbr.rel (0) target = $region13
    $region12: #{tpu_custom_call.1} parent=1 // pred_region
      %s26 = ssub.s32 2048, 2048
      %27 = vsyncadd [#allocation3], %s26
      %s28 = sshll.u32 [#allocation2], 4
      %s29 = int_to_ptr.vmem [resolvable:$true] %s28
      %34 = dma.hbm_to_vmem [thread:$0]  %s2, 2048, %s29, [#allocation3], 1024, 1024, 64
    $region13: #{tpu_custom_call.1} parent=1 // pred_fallthru
      _
    // Predicated region
    $region14: #{tpu_custom_call.1} parent=1 // pred_check
      _
    $region15: #{tpu_custom_call.1} parent=1 // pred_check_branch
      %36 = sbr.rel (0) target = $region17
    $region16: #{tpu_custom_call.1} parent=1 // pred_region
      %s38 = ssub.s32 1024, 1024
      %39 = vsyncadd [#allocation6], %s38
      %s40 = sshll.u32 [#allocation5], 4
      %s41 = int_to_ptr.vmem [resolvable:$true] %s40
      %46 = dma.hbm_to_vmem [thread:$0]  %s3, 1024, %s41, [#allocation6], 64, 64, 4
    $region17: #{tpu_custom_call.1} parent=1 // pred_fallthru
      _
    // Predicated region
    $region18: #{tpu_custom_call.1} parent=1 // pred_check
      _
    $region19: #{tpu_custom_call.1} parent=1 // pred_check_branch
      %48 = sbr.rel (0) target = $region21
    $region20: #{tpu_custom_call.1} parent=1 // pred_region
      %s50 = ssub.s32 1024, 1024
      %51 = vsyncadd [#allocation6], %s50
      %s52 = sshll.u32 [#allocation7], 4
      %s53 = int_to_ptr.vmem [resolvable:$true] %s52
      %58 = dma.hbm_to_vmem [thread:$0]  %s4, 1024, %s53, [#allocation6], 64, 64, 4
    $region21: #{tpu_custom_call.1} parent=1 // pred_fallthru
      _
    // Predicated region
    $region22: #{tpu_custom_call.1} parent=1 // pred_check
      _
    $region23: #{tpu_custom_call.1} parent=1 // pred_check_branch
      %60 = sbr.rel (0) target = $region25
    $region24: #{tpu_custom_call.1} parent=1 // pred_region
      %s62 = ssub.s32 2048, 2048
      %63 = vsyncadd [#allocation9], %s62
      %s64 = sshll.u32 [#allocation8], 4
      %s65 = int_to_ptr.vmem [resolvable:$true] %s64
      %70 = dma.hbm_to_vmem [thread:$0]  %s5, 2048, %s65, [#allocation9], 128, 128, 8
    $region25: #{tpu_custom_call.1} parent=1 // pred_fallthru
      _
    // Predicated region
    $region26: #{tpu_custom_call.1} parent=1 // pred_check
      _
    $region27: #{tpu_custom_call.1} parent=1 // pred_check_branch
      %72 = sbr.rel (0) target = $region29
    $region28: #{tpu_custom_call.1} parent=1 // pred_region
      %s74 = ssub.s32 8192, 8192
      %75 = vsyncadd [#allocation9], %s74
      %s76 = sshll.u32 [#allocation10], 4
      %s77 = int_to_ptr.vmem [resolvable:$true] %s76
      %82 = dma.hbm_to_vmem [thread:$0]  %s6, 8192, %s77, [#allocation9], 256, 256, 16
    $region29: #{tpu_custom_call.1} parent=1 // pred_fallthru
      _
    // Predicated region
    $region30: #{tpu_custom_call.1} parent=1 // pred_check
      _
    $region31: #{tpu_custom_call.1} parent=1 // pred_check_branch
      %84 = sbr.rel (0) target = $region33
    $region32: #{tpu_custom_call.1} parent=1 // pred_region
      %s86 = ssub.s32 32768, 32768
      %87 = vsyncadd [#allocation12], %s86
      %s88 = sshll.u32 [#allocation11], 4
      %s89 = int_to_ptr.vmem [resolvable:$true] %s88
      %94 = dma.hbm_to_vmem [thread:$0]  %s7, 32768, %s89, [#allocation12], 512, 512, 32
    $region33: #{tpu_custom_call.1} parent=1 // pred_fallthru
      _
    // Predicated region
    $region34: #{tpu_custom_call.1} parent=1 // pred_check
      _
    $region35: #{tpu_custom_call.1} parent=1 // pred_check_branch
      %96 = sbr.rel (0) target = $region37
    $region36: #{tpu_custom_call.1} parent=1 // pred_region
      %s98 = ssub.s32 8192, 8192
      %99 = vsyncadd [#allocation12], %s98
      %s100 = sshll.u32 [#allocation13], 4
      %s101 = int_to_ptr.vmem [resolvable:$true] %s100
      %106 = dma.hbm_to_vmem [thread:$0]  %s8, 8192, %s101, [#allocation12], 64, 64, 4
    $region37: #{tpu_custom_call.1} parent=1 // pred_fallthru
      _
    // Predicated region
    $region38: #{tpu_custom_call.1} parent=1 // pred_check
      _
    $region39: #{tpu_custom_call.1} parent=1 // pred_check_branch
      %108 = sbr.rel (0) target = $region41
    $region40: #{tpu_custom_call.1} parent=1 // pred_region
      %109 = dma.done [#allocation3], 2048
    $region41: #{tpu_custom_call.1} parent=1 // pred_fallthru
      _
    // Predicated region
    $region42: #{tpu_custom_call.1} parent=1 // pred_check
      _
    $region43: #{tpu_custom_call.1} parent=1 // pred_check_branch
      %111 = sbr.rel (0) target = $region45
    $region44: #{tpu_custom_call.1} parent=1 // pred_region
      %112 = dma.done [#allocation6], 1024
    $region45: #{tpu_custom_call.1} parent=1 // pred_fallthru
      _
    // Predicated region
    $region46: #{tpu_custom_call.1} parent=1 // pred_check
      _
    $region47: #{tpu_custom_call.1} parent=1 // pred_check_branch
      %114 = sbr.rel (0) target = $region49
    $region48: #{tpu_custom_call.1} parent=1 // pred_region
      %115 = dma.done [#allocation6], 1024
    $region49: #{tpu_custom_call.1} parent=1 // pred_fallthru
      _
    // Predicated region
    $region50: #{tpu_custom_call.1} parent=1 // pred_check
      _
    $region51: #{tpu_custom_call.1} parent=1 // pred_check_branch
      %117 = sbr.rel (0) target = $region53
    $region52: #{tpu_custom_call.1} parent=1 // pred_region
      %118 = dma.done [#allocation9], 2048
    $region53: #{tpu_custom_call.1} parent=1 // pred_fallthru
      _
    // Predicated region
    $region54: #{tpu_custom_call.1} parent=1 // pred_check
      _
    $region55: #{tpu_custom_call.1} parent=1 // pred_check_branch
      %120 = sbr.rel (0) target = $region57
    $region56: #{tpu_custom_call.1} parent=1 // pred_region
      %121 = dma.done [#allocation9], 8192
    $region57: #{tpu_custom_call.1} parent=1 // pred_fallthru
      _
    // Predicated region
    $region58: #{tpu_custom_call.1} parent=1 // pred_check
      _
    $region59: #{tpu_custom_call.1} parent=1 // pred_check_branch
      %123 = sbr.rel (0) target = $region61
    $region60: #{tpu_custom_call.1} parent=1 // pred_region
      %124 = dma.done [#allocation12], 32768
    $region61: #{tpu_custom_call.1} parent=1 // pred_fallthru
      _
    // Predicated region
    $region62: #{tpu_custom_call.1} parent=1 // pred_check
      _
    $region63: #{tpu_custom_call.1} parent=1 // pred_check_branch
      %126 = sbr.rel (0) target = $region65
    $region64: #{tpu_custom_call.1} parent=1 // pred_region
      %127 = dma.done [#allocation12], 8192
    $region65: #{tpu_custom_call.1} parent=1 // pred_fallthru
      _
    %v129 = vld [vmem:[#allocation2] ss:$0 sm:$0xff]
    %s130 = scalar_lea.vmem [#allocation2], 1
    %v131 = vld [vmem:[%s130] ss:$8 sm:$0x3]
    %s132 = scalar_lea.vmem [#allocation2], 2
    %v133 = vld [vmem:[%s132] ss:$8 sm:$0x3]
    %s134 = scalar_lea.vmem [#allocation2], 3
    %v135 = vld [vmem:[%s134] ss:$8 sm:$0x3]
    %s136 = scalar_lea.vmem [#allocation2], 4
    %v137 = vld [vmem:[%s136] ss:$8 sm:$0xf]
    %s138 = scalar_lea.vmem [#allocation2], 5
    %v139 = vld [vmem:[%s138] ss:$8 sm:$0xf]
    %s140 = scalar_lea.vmem [#allocation2], 6
    %v141 = vld [vmem:[%s140] ss:$8 sm:$0xf]
    %s142 = scalar_lea.vmem [#allocation2], 7
    %v143 = vld [vmem:[%s142] ss:$8 sm:$0xf]
    %v144 = vld [vmem:[%s142] ss:$8 sm:$0xf0]
    %v145 = vor.u32 %v143, %v144
    %s146 = scalar_lea.vmem [#allocation2], 64
    %v147 = vld [vmem:[%s146] ss:$8 sm:$0xf]
    %v148 = vld [vmem:[%s146] ss:$8 sm:$0xf0]
    %v149 = vor.u32 %v147, %v148
    %s150 = scalar_lea.vmem [#allocation2], 65
    %v151 = vld [vmem:[%s150] ss:$8 sm:$0xf]
    %v152 = vld [vmem:[%s150] ss:$8 sm:$0xf0]
    %v153 = vor.u32 %v151, %v152
    %v154 = vld [vmem:[#allocation2 + $0x42] ss:$0 sm:$0xff]
    %v155 = vld [vmem:[%s0] sm:$0xff]
    %v156 = vlaneseq
    %v157 = vand.u32 %v156, 127
    %158 = vset.pattern.permute.xlu0 0
    %159 = vperm.xlu0 %158, %v155
    %v160 = vpop.permute.xlu0 %159
    %vm161 = vcmp.eq.s32.totalorder %v157, %v160
    %v162 = vsel %vm161, 1, 0
    %v163 = vcvt.s32.f32 %v162
    %v164 = vpack.c.bf16 %v163, %v163
    %v165 = vld [vmem:[#allocation5] sm:$0xf]
    %v166 = vld [vmem:[#allocation5 + $0x4] sm:$0xf]
    %v167 = vld [vmem:[#allocation5 + $0x8] sm:$0xf]
    %v168 = vld [vmem:[#allocation5 + $0xc] sm:$0xf]
    %v169 = vld [vmem:[#allocation5 + $0x10] sm:$0xf]
    %v170 = vld [vmem:[#allocation5 + $0x14] sm:$0xf]
    %v171 = vld [vmem:[#allocation5 + $0x18] sm:$0xf]
    %v172 = vld [vmem:[#allocation5 + $0x1c] sm:$0xf]
    %v173 = vld [vmem:[#allocation5 + $0x20] sm:$0xf]
    %v174 = vld [vmem:[#allocation5 + $0x24] sm:$0xf]
    %v175 = vld [vmem:[#allocation5 + $0x28] sm:$0xf]
    %v176 = vld [vmem:[#allocation5 + $0x2c] sm:$0xf]
    %v177 = vld [vmem:[#allocation5 + $0x30] sm:$0xf]
    %v178 = vld [vmem:[#allocation5 + $0x34] sm:$0xf]
    %v179 = vld [vmem:[#allocation5 + $0x38] sm:$0xf]
    %v180 = vld [vmem:[#allocation5 + $0x3c] sm:$0xf]
    %v181 = vld [vmem:[%s1] sm:$0xff]
    %v182 = vpack.c.bf16 %v181, %v181
    %v183 = vld [vmem:[#allocation7] sm:$0xf]
    %v184 = vld [vmem:[#allocation7 + $0x4] sm:$0xf]
    %v185 = vld [vmem:[#allocation7 + $0x8] sm:$0xf]
    %v186 = vld [vmem:[#allocation7 + $0xc] sm:$0xf]
    %v187 = vld [vmem:[#allocation7 + $0x10] sm:$0xf]
    %v188 = vld [vmem:[#allocation7 + $0x14] sm:$0xf]
    %v189 = vld [vmem:[#allocation7 + $0x18] sm:$0xf]
    %v190 = vld [vmem:[#allocation7 + $0x1c] sm:$0xf]
    %v191 = vld [vmem:[#allocation7 + $0x20] sm:$0xf]
    %v192 = vld [vmem:[#allocation7 + $0x24] sm:$0xf]
    %v193 = vld [vmem:[#allocation7 + $0x28] sm:$0xf]
    %v194 = vld [vmem:[#allocation7 + $0x2c] sm:$0xf]
    %v195 = vld [vmem:[#allocation7 + $0x30] sm:$0xf]
    %v196 = vld [vmem:[#allocation7 + $0x34] sm:$0xf]
    %v197 = vld [vmem:[#allocation7 + $0x38] sm:$0xf]
    %v198 = vld [vmem:[#allocation7 + $0x3c] sm:$0xf]
    %v215 = vunpack.c.l.b16 %v183
    %v216 = vunpack.c.l.b16 %v184
    %v217 = vunpack.c.l.b16 %v185
    %v218 = vunpack.c.l.b16 %v186
    %v219 = vunpack.c.l.b16 %v187
    %v220 = vunpack.c.l.b16 %v188
    %v221 = vunpack.c.l.b16 %v189
    %v222 = vunpack.c.l.b16 %v190
    %v223 = vunpack.c.l.b16 %v191
    %v224 = vunpack.c.l.b16 %v192
    %v225 = vunpack.c.l.b16 %v193
    %v226 = vunpack.c.l.b16 %v194
    %v227 = vunpack.c.l.b16 %v195
    %v228 = vunpack.c.l.b16 %v196
    %v229 = vunpack.c.l.b16 %v197
    %v230 = vunpack.c.l.b16 %v198
    %v231 = vpack.c.b16 %v216, %v215
    %v232 = vpack.c.b16 %v218, %v217
    %v233 = vpack.c.b16 %v220, %v219
    %v234 = vpack.c.b16 %v222, %v221
    %v235 = vpack.c.b16 %v224, %v223
    %v236 = vpack.c.b16 %v226, %v225
    %v237 = vpack.c.b16 %v228, %v227
    %v238 = vpack.c.b16 %v230, %v229
    %247 = vmatprep.subr.bf16.mxu0 0
    %248 = vmatpush1.bf16.msra.mxu0 %v238
    %249 = vmatprep.subr.bf16.mxu0 0
    %250 = vmatpush1.bf16.msra.mxu0 %v237
    %251 = vmatprep.subr.bf16.mxu0 0
    %252 = vmatpush1.bf16.msra.mxu0 %v236
    %253 = vmatprep.subr.bf16.mxu0 0
    %254 = vmatpush1.bf16.msra.mxu0 %v235
    %255 = vmatprep.subr.bf16.mxu0 0
    %256 = vmatpush1.bf16.msra.mxu0 %v234
    %257 = vmatprep.subr.bf16.mxu0 0
    %258 = vmatpush1.bf16.msra.mxu0 %v233
    %259 = vmatprep.subr.bf16.mxu0 0
    %260 = vmatpush1.bf16.msra.mxu0 %v232
    %261 = vmatprep.subr.bf16.mxu0 0
    %262 = vmatpush1.bf16.msra.mxu0 %v231
    %263 = vmatprep.subr.bf16.mxu0 0
    %264 = vmatpush2.bf16.msra.mxu0 0
    %265 = vmatprep.subr.bf16.mxu0 0
    %266 = vmatpush2.bf16.msra.mxu0 0
    %267 = vmatprep.subr.bf16.mxu0 0
    %268 = vmatpush2.bf16.msra.mxu0 0
    %269 = vmatprep.subr.bf16.mxu0 0
    %270 = vmatpush2.bf16.msra.mxu0 0
    %271 = vmatprep.subr.bf16.mxu0 0
    %272 = vmatpush2.bf16.msra.mxu0 0
    %273 = vmatprep.subr.bf16.mxu0 0
    %274 = vmatpush2.bf16.msra.mxu0 0
    %275 = vmatprep.subr.bf16.mxu0 0
    %276 = vmatpush2.bf16.msra.mxu0 0
    %277 = vmatprep.subr.bf16.mxu0 0
    %278 = vmatpush2.bf16.msra.mxu0 0
    %279 = vmatprep.mubr.bf16.mxu0 0
    %280 = vmatmul.mubr.bf16.gmra.mxu0 %v182
    %v281 = vpop.f32.mrf.mxu0
    %v282 = vadd.f32 0.0, %v281
    %v283 = vpop.f32.mrf.mxu0
    %v284 = vpop.f32.mrf.mxu0
    %v285 = vpop.f32.mrf.mxu0
    %286 = vdwg.mxu0
    %v303 = vunpack.c.l.b16 %v165
    %v304 = vunpack.c.l.b16 %v166
    %v305 = vunpack.c.l.b16 %v167
    %v306 = vunpack.c.l.b16 %v168
    %v307 = vunpack.c.l.b16 %v169
    %v308 = vunpack.c.l.b16 %v170
    %v309 = vunpack.c.l.b16 %v171
    %v310 = vunpack.c.l.b16 %v172
    %v311 = vunpack.c.l.b16 %v173
    %v312 = vunpack.c.l.b16 %v174
    %v313 = vunpack.c.l.b16 %v175
    %v314 = vunpack.c.l.b16 %v176
    %v315 = vunpack.c.l.b16 %v177
    %v316 = vunpack.c.l.b16 %v178
    %v317 = vunpack.c.l.b16 %v179
    %v318 = vunpack.c.l.b16 %v180
    %v319 = vpack.c.b16 %v304, %v303
    %v320 = vpack.c.b16 %v306, %v305
    %v321 = vpack.c.b16 %v308, %v307
    %v322 = vpack.c.b16 %v310, %v309
    %v323 = vpack.c.b16 %v312, %v311
    %v324 = vpack.c.b16 %v314, %v313
    %v325 = vpack.c.b16 %v316, %v315
    %v326 = vpack.c.b16 %v318, %v317
    %335 = vmatprep.subr.bf16.mxu0 0
    %336 = vmatpush1.bf16.msra.mxu0 %v326
    %337 = vmatprep.subr.bf16.mxu0 0
    %338 = vmatpush1.bf16.msra.mxu0 %v325
    %339 = vmatprep.subr.bf16.mxu0 0
    %340 = vmatpush1.bf16.msra.mxu0 %v324
    %341 = vmatprep.subr.bf16.mxu0 0
    %342 = vmatpush1.bf16.msra.mxu0 %v323
    %343 = vmatprep.subr.bf16.mxu0 0
    %344 = vmatpush1.bf16.msra.mxu0 %v322
    %345 = vmatprep.subr.bf16.mxu0 0
    %346 = vmatpush1.bf16.msra.mxu0 %v321
    %347 = vmatprep.subr.bf16.mxu0 0
    %348 = vmatpush1.bf16.msra.mxu0 %v320
    %349 = vmatprep.subr.bf16.mxu0 0
    %350 = vmatpush1.bf16.msra.mxu0 %v319
    %351 = vmatprep.subr.bf16.mxu0 0
    %352 = vmatpush2.bf16.msra.mxu0 0
    %353 = vmatprep.subr.bf16.mxu0 0
    %354 = vmatpush2.bf16.msra.mxu0 0
    %355 = vmatprep.subr.bf16.mxu0 0
    %356 = vmatpush2.bf16.msra.mxu0 0
    %357 = vmatprep.subr.bf16.mxu0 0
    %358 = vmatpush2.bf16.msra.mxu0 0
    %359 = vmatprep.subr.bf16.mxu0 0
    %360 = vmatpush2.bf16.msra.mxu0 0
    %361 = vmatprep.subr.bf16.mxu0 0
    %362 = vmatpush2.bf16.msra.mxu0 0
    %363 = vmatprep.subr.bf16.mxu0 0
    %364 = vmatpush2.bf16.msra.mxu0 0
    %365 = vmatprep.subr.bf16.mxu0 0
    %366 = vmatpush2.bf16.msra.mxu0 0
    %367 = vmatprep.mubr.bf16.mxu0 0
    %368 = vmatmul.mubr.bf16.gmra.mxu0 %v164
    %v369 = vpop.f32.mrf.mxu0
    %v370 = vadd.f32 %v282, %v369
    %v371 = vpop.f32.mrf.mxu0
    %v372 = vpop.f32.mrf.mxu0
    %v373 = vpop.f32.mrf.mxu0
    %374 = vdwg.mxu0
    %v375 = vadd.f32 %v370, %v129
    %vm376 = vcmp.ge.f32.partialorder %v375, 0.0
    %v377 = vmul.f32 %v375, 0.2
    %v378 = vsel %vm376, %v375, %v377
    %v379 = vpack.c.bf16 %v378, %v378
    %v380 = vld [vmem:[#allocation8] sm:$0xff]
    %v381 = vld [vmem:[#allocation8 + $0x8] sm:$0xff]
    %v382 = vld [vmem:[#allocation8 + $0x10] sm:$0xff]
    %v383 = vld [vmem:[#allocation8 + $0x18] sm:$0xff]
    %v384 = vld [vmem:[#allocation8 + $0x20] sm:$0xff]
    %v385 = vld [vmem:[#allocation8 + $0x28] sm:$0xff]
    %v386 = vld [vmem:[#allocation8 + $0x30] sm:$0xff]
    %v387 = vld [vmem:[#allocation8 + $0x38] sm:$0xff]
    %v388 = vld [vmem:[#allocation8 + $0x40] sm:$0xff]
    %v389 = vld [vmem:[#allocation8 + $0x48] sm:$0xff]
    %v390 = vld [vmem:[#allocation8 + $0x50] sm:$0xff]
    %v391 = vld [vmem:[#allocation8 + $0x58] sm:$0xff]
    %v392 = vld [vmem:[#allocation8 + $0x60] sm:$0xff]
    %v393 = vld [vmem:[#allocation8 + $0x68] sm:$0xff]
    %v394 = vld [vmem:[#allocation8 + $0x70] sm:$0xff]
    %v395 = vld [vmem:[#allocation8 + $0x78] sm:$0xff]
    %v397 = vlaneseq
    %v398 = vshrl.u32 %v397, 7
    %v399 = vsub.s32 0, %v398
    %v400 = vrot.slane %v131, %v399
    %v401 = vlaneseq
    %v402 = vshrl.u32 %v401, 7
    %v403 = vsub.s32 1, %v402
    %v404 = vrot.slane %v131, %v403
    %v423 = vunpack.c.l.b16 %v380
    %v424 = vunpack.c.h.b16 %v380
    %v425 = vunpack.c.l.b16 %v381
    %v426 = vunpack.c.h.b16 %v381
    %v427 = vunpack.c.l.b16 %v382
    %v428 = vunpack.c.h.b16 %v382
    %v429 = vunpack.c.l.b16 %v383
    %v430 = vunpack.c.h.b16 %v383
    %v431 = vunpack.c.l.b16 %v384
    %v432 = vunpack.c.h.b16 %v384
    %v433 = vunpack.c.l.b16 %v385
    %v434 = vunpack.c.h.b16 %v385
    %v435 = vunpack.c.l.b16 %v386
    %v436 = vunpack.c.h.b16 %v386
    %v437 = vunpack.c.l.b16 %v387
    %v438 = vunpack.c.h.b16 %v387
    %v439 = vunpack.c.l.b16 %v388
    %v440 = vunpack.c.h.b16 %v388
    %v441 = vunpack.c.l.b16 %v389
    %v442 = vunpack.c.h.b16 %v389
    %v443 = vunpack.c.l.b16 %v390
    %v444 = vunpack.c.h.b16 %v390
    %v445 = vunpack.c.l.b16 %v391
    %v446 = vunpack.c.h.b16 %v391
    %v447 = vunpack.c.l.b16 %v392
    %v448 = vunpack.c.h.b16 %v392
    %v449 = vunpack.c.l.b16 %v393
    %v450 = vunpack.c.h.b16 %v393
    %v451 = vunpack.c.l.b16 %v394
    %v452 = vunpack.c.h.b16 %v394
    %v453 = vunpack.c.l.b16 %v395
    %v454 = vunpack.c.h.b16 %v395
    %v455 = vpack.c.b16 %v425, %v423
    %v456 = vpack.c.b16 %v426, %v424
    %v457 = vpack.c.b16 %v429, %v427
    %v458 = vpack.c.b16 %v430, %v428
    %v459 = vpack.c.b16 %v433, %v431
    %v460 = vpack.c.b16 %v434, %v432
    %v461 = vpack.c.b16 %v437, %v435
    %v462 = vpack.c.b16 %v438, %v436
    %v463 = vpack.c.b16 %v441, %v439
    %v464 = vpack.c.b16 %v442, %v440
    %v465 = vpack.c.b16 %v445, %v443
    %v466 = vpack.c.b16 %v446, %v444
    %v467 = vpack.c.b16 %v449, %v447
    %v468 = vpack.c.b16 %v450, %v448
    %v469 = vpack.c.b16 %v453, %v451
    %v470 = vpack.c.b16 %v454, %v452
    %487 = vmatprep.subr.bf16.mxu0 %v470
    %488 = vmatpush1.bf16.msra.mxu0 %v469
    %489 = vmatprep.subr.bf16.mxu0 %v468
    %490 = vmatpush1.bf16.msra.mxu0 %v467
    %491 = vmatprep.subr.bf16.mxu0 %v466
    %492 = vmatpush1.bf16.msra.mxu0 %v465
    %493 = vmatprep.subr.bf16.mxu0 %v464
    %494 = vmatpush1.bf16.msra.mxu0 %v463
    %495 = vmatprep.subr.bf16.mxu0 %v462
    %496 = vmatpush1.bf16.msra.mxu0 %v461
    %497 = vmatprep.subr.bf16.mxu0 %v460
    %498 = vmatpush1.bf16.msra.mxu0 %v459
    %499 = vmatprep.subr.bf16.mxu0 %v458
    %500 = vmatpush1.bf16.msra.mxu0 %v457
    %501 = vmatprep.subr.bf16.mxu0 %v456
    %502 = vmatpush1.bf16.msra.mxu0 %v455
    %503 = vmatprep.subr.bf16.mxu0 0
    %504 = vmatpush2.bf16.msra.mxu0 0
    %505 = vmatprep.subr.bf16.mxu0 0
    %506 = vmatpush2.bf16.msra.mxu0 0
    %507 = vmatprep.subr.bf16.mxu0 0
    %508 = vmatpush2.bf16.msra.mxu0 0
    %509 = vmatprep.subr.bf16.mxu0 0
    %510 = vmatpush2.bf16.msra.mxu0 0
    %511 = vmatprep.subr.bf16.mxu0 0
    %512 = vmatpush2.bf16.msra.mxu0 0
    %513 = vmatprep.subr.bf16.mxu0 0
    %514 = vmatpush2.bf16.msra.mxu0 0
    %515 = vmatprep.subr.bf16.mxu0 0
    %516 = vmatpush2.bf16.msra.mxu0 0
    %517 = vmatprep.subr.bf16.mxu0 0
    %518 = vmatpush2.bf16.msra.mxu0 0
    %519 = vmatprep.mubr.bf16.mxu0 0
    %520 = vmatmul.mubr.bf16.gmra.mxu0 %v379
    %v521 = vpop.f32.mrf.mxu0
    %v522 = vadd.f32 %v400, %v521
    %v523 = vpop.f32.mrf.mxu0
    %v524 = vadd.f32 %v404, %v523
    %v525 = vpop.f32.mrf.mxu0
    %v526 = vpop.f32.mrf.mxu0
    %527 = vdwg.mxu0
    %v528 = vrot.slane %v522, 4
    %v529 = vadd.f32 %v522, %v528
    %v530 = vrot.slane %v529, 2
    %v531 = vadd.f32 %v529, %v530
    %v532 = vrot.slane %v531, 1
    %v533 = vadd.f32 %v531, %v532
    %v534 = vrot.slane %v524, 4
    %v535 = vadd.f32 %v524, %v534
    %v536 = vrot.slane %v535, 2
    %v537 = vadd.f32 %v535, %v536
    %v538 = vrot.slane %v537, 1
    %v539 = vadd.f32 %v537, %v538
    %v540 = vrcp.pop 8.0
    %v541 = vmul.f32 %v533, %v540
    %v542 = vmul.f32 %v539, %v540
    %v543 = vsub.f32 %v522, %v541
    %v544 = vsub.f32 %v524, %v542
    %v545 = vmul.f32 %v543, %v543
    %v546 = vmul.f32 %v544, %v544
    %v547 = vrot.slane %v545, 4
    %v548 = vadd.f32 %v545, %v547
    %v549 = vrot.slane %v548, 2
    %v550 = vadd.f32 %v548, %v549
    %v551 = vrot.slane %v550, 1
    %v552 = vadd.f32 %v550, %v551
    %v553 = vrot.slane %v546, 4
    %v554 = vadd.f32 %v546, %v553
    %v555 = vrot.slane %v554, 2
    %v556 = vadd.f32 %v554, %v555
    %v557 = vrot.slane %v556, 1
    %v558 = vadd.f32 %v556, %v557
    %v559 = vmul.f32 %v552, %v540
    %v560 = vmul.f32 %v558, %v540
    %v561 = vadd.f32 %v559, 0.8
    %v562 = vadd.f32 %v560, 0.8
    %v563 = vrsqrt.pop %v561
    %v564 = vrsqrt.pop %v562
    %v567 = vcombine.low %v563, %v564
    %v569 = vunpack.c.l.s4 1966171168
    %v570 = vunpack.c.0.s8 %v569
    %v571 = vlaneseq
    %v572 = vshrl.u32 %v571, 7
    %v573 = vsub.s32 %v570, %v572
    %v574 = vrot.slane %v567, %v573
    %v576 = vunpack.c.l.s4 1966171168
    %v577 = vunpack.c.0.s8 %v576
    %v578 = vlaneseq
    %v579 = vshrl.u32 %v578, 7
    %v580 = vsub.s32 %v577, %v579
    %v581 = vrot.slane %v574, %v580
    %v583 = vmul.f32 %v133, %v581
    %v585 = vlaneseq
    %v586 = vshrl.u32 %v585, 7
    %v587 = vsub.s32 0, %v586
    %v588 = vrot.slane %v583, %v587
    %v589 = vlaneseq
    %v590 = vshrl.u32 %v589, 7
    %v591 = vsub.s32 1, %v590
    %v592 = vrot.slane %v583, %v591
    %v595 = vmul.f32 %v541, %v588
    %v596 = vmul.f32 %v542, %v592
    %v599 = vcombine.low %v595, %v596
    %v601 = vunpack.c.l.s4 1966171168
    %v602 = vunpack.c.0.s8 %v601
    %v603 = vlaneseq
    %v604 = vshrl.u32 %v603, 7
    %v605 = vsub.s32 %v602, %v604
    %v606 = vrot.slane %v599, %v605
    %v608 = vunpack.c.l.s4 1966171168
    %v609 = vunpack.c.0.s8 %v608
    %v610 = vlaneseq
    %v611 = vshrl.u32 %v610, 7
    %v612 = vsub.s32 %v609, %v611
    %v613 = vrot.slane %v606, %v612
    %v615 = vsub.f32 %v135, %v613
    %v616 = vmul.f32 %v522, %v588
    %v617 = vmul.f32 %v524, %v592
    %v619 = vlaneseq
    %v620 = vshrl.u32 %v619, 7
    %v621 = vsub.s32 0, %v620
    %v622 = vrot.slane %v615, %v621
    %v623 = vlaneseq
    %v624 = vshrl.u32 %v623, 7
    %v625 = vsub.s32 1, %v624
    %v626 = vrot.slane %v615, %v625
    %v629 = vadd.f32 %v616, %v622
    %v630 = vadd.f32 %v617, %v626
    %vm631 = vcmp.ge.f32.partialorder %v629, 0.0
    %vm632 = vcmp.ge.f32.partialorder %v630, 0.0
    %v633 = vmul.f32 %v629, 0.2
    %v634 = vmul.f32 %v630, 0.2
    %v635 = vsel %vm631, %v629, %v633
    %v636 = vsel %vm632, %v630, %v634
    %v637 = vpack.c.bf16 %v635, %v635
    %v638 = vpack.c.bf16 %v636, %v636
    %v639 = vld [vmem:[#allocation10] sm:$0xff]
    %v640 = vld [vmem:[#allocation10 + $0x8] sm:$0xff]
    %v641 = vld [vmem:[#allocation10 + $0x10] sm:$0xff]
    %v642 = vld [vmem:[#allocation10 + $0x18] sm:$0xff]
    %v643 = vld [vmem:[#allocation10 + $0x20] sm:$0xff]
    %v644 = vld [vmem:[#allocation10 + $0x28] sm:$0xff]
    %v645 = vld [vmem:[#allocation10 + $0x30] sm:$0xff]
    %v646 = vld [vmem:[#allocation10 + $0x38] sm:$0xff]
    %v647 = vld [vmem:[#allocation10 + $0x40] sm:$0xff]
    %v648 = vld [vmem:[#allocation10 + $0x48] sm:$0xff]
    %v649 = vld [vmem:[#allocation10 + $0x50] sm:$0xff]
    %v650 = vld [vmem:[#allocation10 + $0x58] sm:$0xff]
    %v651 = vld [vmem:[#allocation10 + $0x60] sm:$0xff]
    %v652 = vld [vmem:[#allocation10 + $0x68] sm:$0xff]
    %v653 = vld [vmem:[#allocation10 + $0x70] sm:$0xff]
    %v654 = vld [vmem:[#allocation10 + $0x78] sm:$0xff]
    %v655 = vld [vmem:[#allocation10 + $0x80] sm:$0xff]
    %v656 = vld [vmem:[#allocation10 + $0x88] sm:$0xff]
    %v657 = vld [vmem:[#allocation10 + $0x90] sm:$0xff]
    %v658 = vld [vmem:[#allocation10 + $0x98] sm:$0xff]
    %v659 = vld [vmem:[#allocation10 + $0xa0] sm:$0xff]
    %v660 = vld [vmem:[#allocation10 + $0xa8] sm:$0xff]
    %v661 = vld [vmem:[#allocation10 + $0xb0] sm:$0xff]
    %v662 = vld [vmem:[#allocation10 + $0xb8] sm:$0xff]
    %v663 = vld [vmem:[#allocation10 + $0xc0] sm:$0xff]
    %v664 = vld [vmem:[#allocation10 + $0xc8] sm:$0xff]
    %v665 = vld [vmem:[#allocation10 + $0xd0] sm:$0xff]
    %v666 = vld [vmem:[#allocation10 + $0xd8] sm:$0xff]
    %v667 = vld [vmem:[#allocation10 + $0xe0] sm:$0xff]
    %v668 = vld [vmem:[#allocation10 + $0xe8] sm:$0xff]
    %v669 = vld [vmem:[#allocation10 + $0xf0] sm:$0xff]
    %v670 = vld [vmem:[#allocation10 + $0xf8] sm:$0xff]
    %v671 = vld [vmem:[#allocation10 + $0x100] sm:$0xff]
    %v672 = vld [vmem:[#allocation10 + $0x108] sm:$0xff]
    %v673 = vld [vmem:[#allocation10 + $0x110] sm:$0xff]
    %v674 = vld [vmem:[#allocation10 + $0x118] sm:$0xff]
    %v675 = vld [vmem:[#allocation10 + $0x120] sm:$0xff]
    %v676 = vld [vmem:[#allocation10 + $0x128] sm:$0xff]
    %v677 = vld [vmem:[#allocation10 + $0x130] sm:$0xff]
    %v678 = vld [vmem:[#allocation10 + $0x138] sm:$0xff]
    %v679 = vld [vmem:[#allocation10 + $0x140] sm:$0xff]
    %v680 = vld [vmem:[#allocation10 + $0x148] sm:$0xff]
    %v681 = vld [vmem:[#allocation10 + $0x150] sm:$0xff]
    %v682 = vld [vmem:[#allocation10 + $0x158] sm:$0xff]
    %v683 = vld [vmem:[#allocation10 + $0x160] sm:$0xff]
    %v684 = vld [vmem:[#allocation10 + $0x168] sm:$0xff]
    %v685 = vld [vmem:[#allocation10 + $0x170] sm:$0xff]
    %v686 = vld [vmem:[#allocation10 + $0x178] sm:$0xff]
    %v687 = vld [vmem:[#allocation10 + $0x180] sm:$0xff]
    %v688 = vld [vmem:[#allocation10 + $0x188] sm:$0xff]
    %v689 = vld [vmem:[#allocation10 + $0x190] sm:$0xff]
    %v690 = vld [vmem:[#allocation10 + $0x198] sm:$0xff]
    %v691 = vld [vmem:[#allocation10 + $0x1a0] sm:$0xff]
    %v692 = vld [vmem:[#allocation10 + $0x1a8] sm:$0xff]
    %v693 = vld [vmem:[#allocation10 + $0x1b0] sm:$0xff]
    %v694 = vld [vmem:[#allocation10 + $0x1b8] sm:$0xff]
    %v695 = vld [vmem:[#allocation10 + $0x1c0] sm:$0xff]
    %v696 = vld [vmem:[#allocation10 + $0x1c8] sm:$0xff]
    %v697 = vld [vmem:[#allocation10 + $0x1d0] sm:$0xff]
    %v698 = vld [vmem:[#allocation10 + $0x1d8] sm:$0xff]
    %v699 = vld [vmem:[#allocation10 + $0x1e0] sm:$0xff]
    %v700 = vld [vmem:[#allocation10 + $0x1e8] sm:$0xff]
    %v701 = vld [vmem:[#allocation10 + $0x1f0] sm:$0xff]
    %v702 = vld [vmem:[#allocation10 + $0x1f8] sm:$0xff]
    %v704 = vlaneseq
    %v705 = vshrl.u32 %v704, 7
    %v706 = vsub.s32 0, %v705
    %v707 = vrot.slane %v137, %v706
    %v708 = vlaneseq
    %v709 = vshrl.u32 %v708, 7
    %v710 = vsub.s32 1, %v709
    %v711 = vrot.slane %v137, %v710
    %v712 = vlaneseq
    %v713 = vshrl.u32 %v712, 7
    %v714 = vsub.s32 2, %v713
    %v715 = vrot.slane %v137, %v714
    %v716 = vlaneseq
    %v717 = vshrl.u32 %v716, 7
    %v718 = vsub.s32 3, %v717
    %v719 = vrot.slane %v137, %v718
    %v788 = vunpack.c.l.b16 %v639
    %v789 = vunpack.c.h.b16 %v639
    %v790 = vunpack.c.l.b16 %v640
    %v791 = vunpack.c.h.b16 %v640
    %v792 = vunpack.c.l.b16 %v641
    %v793 = vunpack.c.h.b16 %v641
    %v794 = vunpack.c.l.b16 %v642
    %v795 = vunpack.c.h.b16 %v642
    %v796 = vunpack.c.l.b16 %v643
    %v797 = vunpack.c.h.b16 %v643
    %v798 = vunpack.c.l.b16 %v644
    %v799 = vunpack.c.h.b16 %v644
    %v800 = vunpack.c.l.b16 %v645
    %v801 = vunpack.c.h.b16 %v645
    %v802 = vunpack.c.l.b16 %v646
    %v803 = vunpack.c.h.b16 %v646
    %v804 = vunpack.c.l.b16 %v647
    %v805 = vunpack.c.h.b16 %v647
    %v806 = vunpack.c.l.b16 %v648
    %v807 = vunpack.c.h.b16 %v648
    %v808 = vunpack.c.l.b16 %v649
    %v809 = vunpack.c.h.b16 %v649
    %v810 = vunpack.c.l.b16 %v650
    %v811 = vunpack.c.h.b16 %v650
    %v812 = vunpack.c.l.b16 %v651
    %v813 = vunpack.c.h.b16 %v651
    %v814 = vunpack.c.l.b16 %v652
    %v815 = vunpack.c.h.b16 %v652
    %v816 = vunpack.c.l.b16 %v653
    %v817 = vunpack.c.h.b16 %v653
    %v818 = vunpack.c.l.b16 %v654
    %v819 = vunpack.c.h.b16 %v654
    %v820 = vunpack.c.l.b16 %v655
    %v821 = vunpack.c.h.b16 %v655
    %v822 = vunpack.c.l.b16 %v656
    %v823 = vunpack.c.h.b16 %v656
    %v824 = vunpack.c.l.b16 %v657
    %v825 = vunpack.c.h.b16 %v657
    %v826 = vunpack.c.l.b16 %v658
    %v827 = vunpack.c.h.b16 %v658
    %v828 = vunpack.c.l.b16 %v659
    %v829 = vunpack.c.h.b16 %v659
    %v830 = vunpack.c.l.b16 %v660
    %v831 = vunpack.c.h.b16 %v660
    %v832 = vunpack.c.l.b16 %v661
    %v833 = vunpack.c.h.b16 %v661
    %v834 = vunpack.c.l.b16 %v662
    %v835 = vunpack.c.h.b16 %v662
    %v836 = vunpack.c.l.b16 %v663
    %v837 = vunpack.c.h.b16 %v663
    %v838 = vunpack.c.l.b16 %v664
    %v839 = vunpack.c.h.b16 %v664
    %v840 = vunpack.c.l.b16 %v665
    %v841 = vunpack.c.h.b16 %v665
    %v842 = vunpack.c.l.b16 %v666
    %v843 = vunpack.c.h.b16 %v666
    %v844 = vunpack.c.l.b16 %v667
    %v845 = vunpack.c.h.b16 %v667
    %v846 = vunpack.c.l.b16 %v668
    %v847 = vunpack.c.h.b16 %v668
    %v848 = vunpack.c.l.b16 %v669
    %v849 = vunpack.c.h.b16 %v669
    %v850 = vunpack.c.l.b16 %v670
    %v851 = vunpack.c.h.b16 %v670
    %v852 = vunpack.c.l.b16 %v671
    %v853 = vunpack.c.h.b16 %v671
    %v854 = vunpack.c.l.b16 %v672
    %v855 = vunpack.c.h.b16 %v672
    %v856 = vunpack.c.l.b16 %v673
    %v857 = vunpack.c.h.b16 %v673
    %v858 = vunpack.c.l.b16 %v674
    %v859 = vunpack.c.h.b16 %v674
    %v860 = vunpack.c.l.b16 %v675
    %v861 = vunpack.c.h.b16 %v675
    %v862 = vunpack.c.l.b16 %v676
    %v863 = vunpack.c.h.b16 %v676
    %v864 = vunpack.c.l.b16 %v677
    %v865 = vunpack.c.h.b16 %v677
    %v866 = vunpack.c.l.b16 %v678
    %v867 = vunpack.c.h.b16 %v678
    %v868 = vunpack.c.l.b16 %v679
    %v869 = vunpack.c.h.b16 %v679
    %v870 = vunpack.c.l.b16 %v680
    %v871 = vunpack.c.h.b16 %v680
    %v872 = vunpack.c.l.b16 %v681
    %v873 = vunpack.c.h.b16 %v681
    %v874 = vunpack.c.l.b16 %v682
    %v875 = vunpack.c.h.b16 %v682
    %v876 = vunpack.c.l.b16 %v683
    %v877 = vunpack.c.h.b16 %v683
    %v878 = vunpack.c.l.b16 %v684
    %v879 = vunpack.c.h.b16 %v684
    %v880 = vunpack.c.l.b16 %v685
    %v881 = vunpack.c.h.b16 %v685
    %v882 = vunpack.c.l.b16 %v686
    %v883 = vunpack.c.h.b16 %v686
    %v884 = vunpack.c.l.b16 %v687
    %v885 = vunpack.c.h.b16 %v687
    %v886 = vunpack.c.l.b16 %v688
    %v887 = vunpack.c.h.b16 %v688
    %v888 = vunpack.c.l.b16 %v689
    %v889 = vunpack.c.h.b16 %v689
    %v890 = vunpack.c.l.b16 %v690
    %v891 = vunpack.c.h.b16 %v690
    %v892 = vunpack.c.l.b16 %v691
    %v893 = vunpack.c.h.b16 %v691
    %v894 = vunpack.c.l.b16 %v692
    %v895 = vunpack.c.h.b16 %v692
    %v896 = vunpack.c.l.b16 %v693
    %v897 = vunpack.c.h.b16 %v693
    %v898 = vunpack.c.l.b16 %v694
    %v899 = vunpack.c.h.b16 %v694
    %v900 = vunpack.c.l.b16 %v695
    %v901 = vunpack.c.h.b16 %v695
    %v902 = vunpack.c.l.b16 %v696
    %v903 = vunpack.c.h.b16 %v696
    %v904 = vunpack.c.l.b16 %v697
    %v905 = vunpack.c.h.b16 %v697
    %v906 = vunpack.c.l.b16 %v698
    %v907 = vunpack.c.h.b16 %v698
    %v908 = vunpack.c.l.b16 %v699
    %v909 = vunpack.c.h.b16 %v699
    %v910 = vunpack.c.l.b16 %v700
    %v911 = vunpack.c.h.b16 %v700
    %v912 = vunpack.c.l.b16 %v701
    %v913 = vunpack.c.h.b16 %v701
    %v914 = vunpack.c.l.b16 %v702
    %v915 = vunpack.c.h.b16 %v702
    %v916 = vpack.c.b16 %v792, %v788
    %v917 = vpack.c.b16 %v793, %v789
    %v918 = vpack.c.b16 %v794, %v790
    %v919 = vpack.c.b16 %v795, %v791
    %v920 = vpack.c.b16 %v800, %v796
    %v921 = vpack.c.b16 %v801, %v797
    %v922 = vpack.c.b16 %v802, %v798
    %v923 = vpack.c.b16 %v803, %v799
    %v924 = vpack.c.b16 %v808, %v804
    %v925 = vpack.c.b16 %v809, %v805
    %v926 = vpack.c.b16 %v810, %v806
    %v927 = vpack.c.b16 %v811, %v807
    %v928 = vpack.c.b16 %v816, %v812
    %v929 = vpack.c.b16 %v817, %v813
    %v930 = vpack.c.b16 %v818, %v814
    %v931 = vpack.c.b16 %v819, %v815
    %v932 = vpack.c.b16 %v824, %v820
    %v933 = vpack.c.b16 %v825, %v821
    %v934 = vpack.c.b16 %v826, %v822
    %v935 = vpack.c.b16 %v827, %v823
    %v936 = vpack.c.b16 %v832, %v828
    %v937 = vpack.c.b16 %v833, %v829
    %v938 = vpack.c.b16 %v834, %v830
    %v939 = vpack.c.b16 %v835, %v831
    %v940 = vpack.c.b16 %v840, %v836
    %v941 = vpack.c.b16 %v841, %v837
    %v942 = vpack.c.b16 %v842, %v838
    %v943 = vpack.c.b16 %v843, %v839
    %v944 = vpack.c.b16 %v848, %v844
    %v945 = vpack.c.b16 %v849, %v845
    %v946 = vpack.c.b16 %v850, %v846
    %v947 = vpack.c.b16 %v851, %v847
    %v948 = vpack.c.b16 %v856, %v852
    %v949 = vpack.c.b16 %v857, %v853
    %v950 = vpack.c.b16 %v858, %v854
    %v951 = vpack.c.b16 %v859, %v855
    %v952 = vpack.c.b16 %v864, %v860
    %v953 = vpack.c.b16 %v865, %v861
    %v954 = vpack.c.b16 %v866, %v862
    %v955 = vpack.c.b16 %v867, %v863
    %v956 = vpack.c.b16 %v872, %v868
    %v957 = vpack.c.b16 %v873, %v869
    %v958 = vpack.c.b16 %v874, %v870
    %v959 = vpack.c.b16 %v875, %v871
    %v960 = vpack.c.b16 %v880, %v876
    %v961 = vpack.c.b16 %v881, %v877
    %v962 = vpack.c.b16 %v882, %v878
    %v963 = vpack.c.b16 %v883, %v879
    %v964 = vpack.c.b16 %v888, %v884
    %v965 = vpack.c.b16 %v889, %v885
    %v966 = vpack.c.b16 %v890, %v886
    %v967 = vpack.c.b16 %v891, %v887
    %v968 = vpack.c.b16 %v896, %v892
    %v969 = vpack.c.b16 %v897, %v893
    %v970 = vpack.c.b16 %v898, %v894
    %v971 = vpack.c.b16 %v899, %v895
    %v972 = vpack.c.b16 %v904, %v900
    %v973 = vpack.c.b16 %v905, %v901
    %v974 = vpack.c.b16 %v906, %v902
    %v975 = vpack.c.b16 %v907, %v903
    %v976 = vpack.c.b16 %v912, %v908
    %v977 = vpack.c.b16 %v913, %v909
    %v978 = vpack.c.b16 %v914, %v910
    %v979 = vpack.c.b16 %v915, %v911
    %1044 = vmatprep.subr.bf16.mxu0 %v945
    %1045 = vmatpush1.bf16.msra.mxu0 %v944
    %1046 = vmatprep.subr.bf16.mxu0 %v941
    %1047 = vmatpush1.bf16.msra.mxu0 %v940
    %1048 = vmatprep.subr.bf16.mxu0 %v937
    %1049 = vmatpush1.bf16.msra.mxu0 %v936
    %1050 = vmatprep.subr.bf16.mxu0 %v933
    %1051 = vmatpush1.bf16.msra.mxu0 %v932
    %1052 = vmatprep.subr.bf16.mxu0 %v929
    %1053 = vmatpush1.bf16.msra.mxu0 %v928
    %1054 = vmatprep.subr.bf16.mxu0 %v925
    %1055 = vmatpush1.bf16.msra.mxu0 %v924
    %1056 = vmatprep.subr.bf16.mxu0 %v921
    %1057 = vmatpush1.bf16.msra.mxu0 %v920
    %1058 = vmatprep.subr.bf16.mxu0 %v917
    %1059 = vmatpush1.bf16.msra.mxu0 %v916
    %1060 = vmatprep.subr.bf16.mxu0 %v977
    %1061 = vmatpush2.bf16.msra.mxu0 %v976
    %1062 = vmatprep.subr.bf16.mxu0 %v973
    %1063 = vmatpush2.bf16.msra.mxu0 %v972
    %1064 = vmatprep.subr.bf16.mxu0 %v969
    %1065 = vmatpush2.bf16.msra.mxu0 %v968
    %1066 = vmatprep.subr.bf16.mxu0 %v965
    %1067 = vmatpush2.bf16.msra.mxu0 %v964
    %1068 = vmatprep.subr.bf16.mxu0 %v961
    %1069 = vmatpush2.bf16.msra.mxu0 %v960
    %1070 = vmatprep.subr.bf16.mxu0 %v957
    %1071 = vmatpush2.bf16.msra.mxu0 %v956
    %1072 = vmatprep.subr.bf16.mxu0 %v953
    %1073 = vmatpush2.bf16.msra.mxu0 %v952
    %1074 = vmatprep.subr.bf16.mxu0 %v949
    %1075 = vmatpush2.bf16.msra.mxu0 %v948
    %1076 = vmatprep.mubr.bf16.mxu0 %v638
    %1077 = vmatmul.mubr.bf16.gmra.mxu0 %v637
    %v1078 = vpop.f32.mrf.mxu0
    %v1079 = vadd.f32 %v707, %v1078
    %v1080 = vpop.f32.mrf.mxu0
    %v1081 = vadd.f32 %v711, %v1080
    %v1082 = vpop.f32.mrf.mxu0
    %v1083 = vpop.f32.mrf.mxu0
    %1084 = vdwg.mxu0
    %1085 = vmatprep.subr.bf16.mxu0 %v947
    %1086 = vmatpush1.bf16.msra.mxu0 %v946
    %1087 = vmatprep.subr.bf16.mxu0 %v943
    %1088 = vmatpush1.bf16.msra.mxu0 %v942
    %1089 = vmatprep.subr.bf16.mxu0 %v939
    %1090 = vmatpush1.bf16.msra.mxu0 %v938
    %1091 = vmatprep.subr.bf16.mxu0 %v935
    %1092 = vmatpush1.bf16.msra.mxu0 %v934
    %1093 = vmatprep.subr.bf16.mxu0 %v931
    %1094 = vmatpush1.bf16.msra.mxu0 %v930
    %1095 = vmatprep.subr.bf16.mxu0 %v927
    %1096 = vmatpush1.bf16.msra.mxu0 %v926
    %1097 = vmatprep.subr.bf16.mxu0 %v923
    %1098 = vmatpush1.bf16.msra.mxu0 %v922
    %1099 = vmatprep.subr.bf16.mxu0 %v919
    %1100 = vmatpush1.bf16.msra.mxu0 %v918
    %1101 = vmatprep.subr.bf16.mxu0 %v979
    %1102 = vmatpush2.bf16.msra.mxu0 %v978
    %1103 = vmatprep.subr.bf16.mxu0 %v975
    %1104 = vmatpush2.bf16.msra.mxu0 %v974
    %1105 = vmatprep.subr.bf16.mxu0 %v971
    %1106 = vmatpush2.bf16.msra.mxu0 %v970
    %1107 = vmatprep.subr.bf16.mxu0 %v967
    %1108 = vmatpush2.bf16.msra.mxu0 %v966
    %1109 = vmatprep.subr.bf16.mxu0 %v963
    %1110 = vmatpush2.bf16.msra.mxu0 %v962
    %1111 = vmatprep.subr.bf16.mxu0 %v959
    %1112 = vmatpush2.bf16.msra.mxu0 %v958
    %1113 = vmatprep.subr.bf16.mxu0 %v955
    %1114 = vmatpush2.bf16.msra.mxu0 %v954
    %1115 = vmatprep.subr.bf16.mxu0 %v951
    %1116 = vmatpush2.bf16.msra.mxu0 %v950
    %1117 = vmatprep.mubr.bf16.mxu0 %v638
    %1118 = vmatmul.mubr.bf16.gmra.mxu0 %v637
    %v1119 = vpop.f32.mrf.mxu0
    %v1120 = vadd.f32 %v715, %v1119
    %v1121 = vpop.f32.mrf.mxu0
    %v1122 = vadd.f32 %v719, %v1121
    %v1123 = vpop.f32.mrf.mxu0
    %v1124 = vpop.f32.mrf.mxu0
    %1125 = vdwg.mxu0
    %v1126 = vrot.slane %v1079, 4
    %v1127 = vadd.f32 %v1079, %v1126
    %v1128 = vrot.slane %v1127, 2
    %v1129 = vadd.f32 %v1127, %v1128
    %v1130 = vrot.slane %v1129, 1
    %v1131 = vadd.f32 %v1129, %v1130
    %v1132 = vrot.slane %v1081, 4
    %v1133 = vadd.f32 %v1081, %v1132
    %v1134 = vrot.slane %v1133, 2
    %v1135 = vadd.f32 %v1133, %v1134
    %v1136 = vrot.slane %v1135, 1
    %v1137 = vadd.f32 %v1135, %v1136
    %v1138 = vrot.slane %v1120, 4
    %v1139 = vadd.f32 %v1120, %v1138
    %v1140 = vrot.slane %v1139, 2
    %v1141 = vadd.f32 %v1139, %v1140
    %v1142 = vrot.slane %v1141, 1
    %v1143 = vadd.f32 %v1141, %v1142
    %v1144 = vrot.slane %v1122, 4
    %v1145 = vadd.f32 %v1122, %v1144
    %v1146 = vrot.slane %v1145, 2
    %v1147 = vadd.f32 %v1145, %v1146
    %v1148 = vrot.slane %v1147, 1
    %v1149 = vadd.f32 %v1147, %v1148
    %v1150 = vmul.f32 %v1131, %v540
    %v1151 = vmul.f32 %v1137, %v540
    %v1152 = vmul.f32 %v1143, %v540
    %v1153 = vmul.f32 %v1149, %v540
    %v1154 = vsub.f32 %v1079, %v1150
    %v1155 = vsub.f32 %v1081, %v1151
    %v1156 = vsub.f32 %v1120, %v1152
    %v1157 = vsub.f32 %v1122, %v1153
    %v1158 = vmul.f32 %v1154, %v1154
    %v1159 = vmul.f32 %v1155, %v1155
    %v1160 = vmul.f32 %v1156, %v1156
    %v1161 = vmul.f32 %v1157, %v1157
    %v1162 = vrot.slane %v1158, 4
    %v1163 = vadd.f32 %v1158, %v1162
    %v1164 = vrot.slane %v1163, 2
    %v1165 = vadd.f32 %v1163, %v1164
    %v1166 = vrot.slane %v1165, 1
    %v1167 = vadd.f32 %v1165, %v1166
    %v1168 = vrot.slane %v1159, 4
    %v1169 = vadd.f32 %v1159, %v1168
    %v1170 = vrot.slane %v1169, 2
    %v1171 = vadd.f32 %v1169, %v1170
    %v1172 = vrot.slane %v1171, 1
    %v1173 = vadd.f32 %v1171, %v1172
    %v1174 = vrot.slane %v1160, 4
    %v1175 = vadd.f32 %v1160, %v1174
    %v1176 = vrot.slane %v1175, 2
    %v1177 = vadd.f32 %v1175, %v1176
    %v1178 = vrot.slane %v1177, 1
    %v1179 = vadd.f32 %v1177, %v1178
    %v1180 = vrot.slane %v1161, 4
    %v1181 = vadd.f32 %v1161, %v1180
    %v1182 = vrot.slane %v1181, 2
    %v1183 = vadd.f32 %v1181, %v1182
    %v1184 = vrot.slane %v1183, 1
    %v1185 = vadd.f32 %v1183, %v1184
    %v1186 = vmul.f32 %v1167, %v540
    %v1187 = vmul.f32 %v1173, %v540
    %v1188 = vmul.f32 %v1179, %v540
    %v1189 = vmul.f32 %v1185, %v540
    %v1190 = vadd.f32 %v1186, 0.8
    %v1191 = vadd.f32 %v1187, 0.8
    %v1192 = vadd.f32 %v1188, 0.8
    %v1193 = vadd.f32 %v1189, 0.8
    %v1194 = vrsqrt.pop %v1190
    %v1195 = vrsqrt.pop %v1191
    %v1196 = vrsqrt.pop %v1192
    %v1197 = vrsqrt.pop %v1193
    %v1202 = vcombine.low %v1194, %v1195
    %v1203 = vcombine.low %v1196, %v1197
    %v1205 = vunpack.c.l.s4 1966171168
    %v1206 = vunpack.c.0.s8 %v1205
    %v1207 = vlaneseq
    %v1208 = vshrl.u32 %v1207, 7
    %v1209 = vsub.s32 %v1206, %v1208
    %v1210 = vrot.slane %v1202, %v1209
    %v1212 = vunpack.c.l.s4 1966171168
    %v1213 = vunpack.c.0.s8 %v1212
    %v1214 = vlaneseq
    %v1215 = vshrl.u32 %v1214, 7
    %v1216 = vsub.s32 %v1213, %v1215
    %v1217 = vrot.slane %v1203, %v1216
    %v1218 = vcombine.low %v1210, %v1217
    %v1220 = vunpack.c.l.s4 1966171168
    %v1221 = vunpack.c.0.s8 %v1220
    %v1222 = vlaneseq
    %v1223 = vshrl.u32 %v1222, 7
    %v1224 = vsub.s32 %v1221, %v1223
    %v1225 = vrot.slane %v1218, %v1224
    %v1227 = vmul.f32 %v139, %v1225
    %v1229 = vlaneseq
    %v1230 = vshrl.u32 %v1229, 7
    %v1231 = vsub.s32 0, %v1230
    %v1232 = vrot.slane %v1227, %v1231
    %v1233 = vlaneseq
    %v1234 = vshrl.u32 %v1233, 7
    %v1235 = vsub.s32 1, %v1234
    %v1236 = vrot.slane %v1227, %v1235
    %v1237 = vlaneseq
    %v1238 = vshrl.u32 %v1237, 7
    %v1239 = vsub.s32 2, %v1238
    %v1240 = vrot.slane %v1227, %v1239
    %v1241 = vlaneseq
    %v1242 = vshrl.u32 %v1241, 7
    %v1243 = vsub.s32 3, %v1242
    %v1244 = vrot.slane %v1227, %v1243
    %v1249 = vmul.f32 %v1150, %v1232
    %v1250 = vmul.f32 %v1151, %v1236
    %v1251 = vmul.f32 %v1152, %v1240
    %v1252 = vmul.f32 %v1153, %v1244
    %v1257 = vcombine.low %v1249, %v1250
    %v1258 = vcombine.low %v1251, %v1252
    %v1260 = vunpack.c.l.s4 1966171168
    %v1261 = vunpack.c.0.s8 %v1260
    %v1262 = vlaneseq
    %v1263 = vshrl.u32 %v1262, 7
    %v1264 = vsub.s32 %v1261, %v1263
    %v1265 = vrot.slane %v1257, %v1264
    %v1267 = vunpack.c.l.s4 1966171168
    %v1268 = vunpack.c.0.s8 %v1267
    %v1269 = vlaneseq
    %v1270 = vshrl.u32 %v1269, 7
    %v1271 = vsub.s32 %v1268, %v1270
    %v1272 = vrot.slane %v1258, %v1271
    %v1273 = vcombine.low %v1265, %v1272
    %v1275 = vunpack.c.l.s4 1966171168
    %v1276 = vunpack.c.0.s8 %v1275
    %v1277 = vlaneseq
    %v1278 = vshrl.u32 %v1277, 7
    %v1279 = vsub.s32 %v1276, %v1278
    %v1280 = vrot.slane %v1273, %v1279
    %v1282 = vsub.f32 %v141, %v1280
    %v1283 = vmul.f32 %v1079, %v1232
    %v1284 = vmul.f32 %v1081, %v1236
    %v1285 = vmul.f32 %v1120, %v1240
    %v1286 = vmul.f32 %v1122, %v1244
    %v1288 = vlaneseq
    %v1289 = vshrl.u32 %v1288, 7
    %v1290 = vsub.s32 0, %v1289
    %v1291 = vrot.slane %v1282, %v1290
    %v1292 = vlaneseq
    %v1293 = vshrl.u32 %v1292, 7
    %v1294 = vsub.s32 1, %v1293
    %v1295 = vrot.slane %v1282, %v1294
    %v1296 = vlaneseq
    %v1297 = vshrl.u32 %v1296, 7
    %v1298 = vsub.s32 2, %v1297
    %v1299 = vrot.slane %v1282, %v1298
    %v1300 = vlaneseq
    %v1301 = vshrl.u32 %v1300, 7
    %v1302 = vsub.s32 3, %v1301
    %v1303 = vrot.slane %v1282, %v1302
    %v1308 = vadd.f32 %v1283, %v1291
    %v1309 = vadd.f32 %v1284, %v1295
    %v1310 = vadd.f32 %v1285, %v1299
    %v1311 = vadd.f32 %v1286, %v1303
    %vm1312 = vcmp.ge.f32.partialorder %v1308, 0.0
    %vm1313 = vcmp.ge.f32.partialorder %v1309, 0.0
    %vm1314 = vcmp.ge.f32.partialorder %v1310, 0.0
    %vm1315 = vcmp.ge.f32.partialorder %v1311, 0.0
    %v1316 = vmul.f32 %v1308, 0.2
    %v1317 = vmul.f32 %v1309, 0.2
    %v1318 = vmul.f32 %v1310, 0.2
    %v1319 = vmul.f32 %v1311, 0.2
    %v1320 = vsel %vm1312, %v1308, %v1316
    %v1321 = vsel %vm1313, %v1309, %v1317
    %v1322 = vsel %vm1314, %v1310, %v1318
    %v1323 = vsel %vm1315, %v1311, %v1319
    %v1324 = vpack.c.bf16 %v1320, %v1320
    %v1325 = vpack.c.bf16 %v1321, %v1321
    %v1326 = vpack.c.bf16 %v1322, %v1322
    %v1327 = vpack.c.bf16 %v1323, %v1323
    %v1328 = vld [vmem:[#allocation11] sm:$0xff]
    %v1329 = vld [vmem:[#allocation11 + $0x8] sm:$0xff]
    %v1330 = vld [vmem:[#allocation11 + $0x10] sm:$0xff]
    %v1331 = vld [vmem:[#allocation11 + $0x18] sm:$0xff]
    %v1332 = vld [vmem:[#allocation11 + $0x20] sm:$0xff]
    %v1333 = vld [vmem:[#allocation11 + $0x28] sm:$0xff]
    %v1334 = vld [vmem:[#allocation11 + $0x30] sm:$0xff]
    %v1335 = vld [vmem:[#allocation11 + $0x38] sm:$0xff]
    %v1336 = vld [vmem:[#allocation11 + $0x40] sm:$0xff]
    %v1337 = vld [vmem:[#allocation11 + $0x48] sm:$0xff]
    %v1338 = vld [vmem:[#allocation11 + $0x50] sm:$0xff]
    %v1339 = vld [vmem:[#allocation11 + $0x58] sm:$0xff]
    %v1340 = vld [vmem:[#allocation11 + $0x60] sm:$0xff]
    %v1341 = vld [vmem:[#allocation11 + $0x68] sm:$0xff]
    %v1342 = vld [vmem:[#allocation11 + $0x70] sm:$0xff]
    %v1343 = vld [vmem:[#allocation11 + $0x78] sm:$0xff]
    %v1344 = vld [vmem:[#allocation11 + $0x80] sm:$0xff]
    %v1345 = vld [vmem:[#allocation11 + $0x88] sm:$0xff]
    %v1346 = vld [vmem:[#allocation11 + $0x90] sm:$0xff]
    %v1347 = vld [vmem:[#allocation11 + $0x98] sm:$0xff]
    %v1348 = vld [vmem:[#allocation11 + $0xa0] sm:$0xff]
    %v1349 = vld [vmem:[#allocation11 + $0xa8] sm:$0xff]
    %v1350 = vld [vmem:[#allocation11 + $0xb0] sm:$0xff]
    %v1351 = vld [vmem:[#allocation11 + $0xb8] sm:$0xff]
    %v1352 = vld [vmem:[#allocation11 + $0xc0] sm:$0xff]
    %v1353 = vld [vmem:[#allocation11 + $0xc8] sm:$0xff]
    %v1354 = vld [vmem:[#allocation11 + $0xd0] sm:$0xff]
    %v1355 = vld [vmem:[#allocation11 + $0xd8] sm:$0xff]
    %v1356 = vld [vmem:[#allocation11 + $0xe0] sm:$0xff]
    %v1357 = vld [vmem:[#allocation11 + $0xe8] sm:$0xff]
    %v1358 = vld [vmem:[#allocation11 + $0xf0] sm:$0xff]
    %v1359 = vld [vmem:[#allocation11 + $0xf8] sm:$0xff]
    %v1360 = vld [vmem:[#allocation11 + $0x100] sm:$0xff]
    %v1361 = vld [vmem:[#allocation11 + $0x108] sm:$0xff]
    %v1362 = vld [vmem:[#allocation11 + $0x110] sm:$0xff]
    %v1363 = vld [vmem:[#allocation11 + $0x118] sm:$0xff]
    %v1364 = vld [vmem:[#allocation11 + $0x120] sm:$0xff]
    %v1365 = vld [vmem:[#allocation11 + $0x128] sm:$0xff]
    %v1366 = vld [vmem:[#allocation11 + $0x130] sm:$0xff]
    %v1367 = vld [vmem:[#allocation11 + $0x138] sm:$0xff]
    %v1368 = vld [vmem:[#allocation11 + $0x140] sm:$0xff]
    %v1369 = vld [vmem:[#allocation11 + $0x148] sm:$0xff]
    %v1370 = vld [vmem:[#allocation11 + $0x150] sm:$0xff]
    %v1371 = vld [vmem:[#allocation11 + $0x158] sm:$0xff]
    %v1372 = vld [vmem:[#allocation11 + $0x160] sm:$0xff]
    %v1373 = vld [vmem:[#allocation11 + $0x168] sm:$0xff]
    %v1374 = vld [vmem:[#allocation11 + $0x170] sm:$0xff]
    %v1375 = vld [vmem:[#allocation11 + $0x178] sm:$0xff]
    %v1376 = vld [vmem:[#allocation11 + $0x180] sm:$0xff]
    %v1377 = vld [vmem:[#allocation11 + $0x188] sm:$0xff]
    %v1378 = vld [vmem:[#allocation11 + $0x190] sm:$0xff]
    %v1379 = vld [vmem:[#allocation11 + $0x198] sm:$0xff]
    %v1380 = vld [vmem:[#allocation11 + $0x1a0] sm:$0xff]
    %v1381 = vld [vmem:[#allocation11 + $0x1a8] sm:$0xff]
    %v1382 = vld [vmem:[#allocation11 + $0x1b0] sm:$0xff]
    %v1383 = vld [vmem:[#allocation11 + $0x1b8] sm:$0xff]
    %v1384 = vld [vmem:[#allocation11 + $0x1c0] sm:$0xff]
    %v1385 = vld [vmem:[#allocation11 + $0x1c8] sm:$0xff]
    %v1386 = vld [vmem:[#allocation11 + $0x1d0] sm:$0xff]
    %v1387 = vld [vmem:[#allocation11 + $0x1d8] sm:$0xff]
    %v1388 = vld [vmem:[#allocation11 + $0x1e0] sm:$0xff]
    %v1389 = vld [vmem:[#allocation11 + $0x1e8] sm:$0xff]
    %v1390 = vld [vmem:[#allocation11 + $0x1f0] sm:$0xff]
    %v1391 = vld [vmem:[#allocation11 + $0x1f8] sm:$0xff]
    %v1392 = vld [vmem:[#allocation11 + $0x200] sm:$0xff]
    %v1393 = vld [vmem:[#allocation11 + $0x208] sm:$0xff]
    %v1394 = vld [vmem:[#allocation11 + $0x210] sm:$0xff]
    %v1395 = vld [vmem:[#allocation11 + $0x218] sm:$0xff]
    %v1396 = vld [vmem:[#allocation11 + $0x220] sm:$0xff]
    %v1397 = vld [vmem:[#allocation11 + $0x228] sm:$0xff]
    %v1398 = vld [vmem:[#allocation11 + $0x230] sm:$0xff]
    %v1399 = vld [vmem:[#allocation11 + $0x238] sm:$0xff]
    %v1400 = vld [vmem:[#allocation11 + $0x240] sm:$0xff]
    %v1401 = vld [vmem:[#allocation11 + $0x248] sm:$0xff]
    %v1402 = vld [vmem:[#allocation11 + $0x250] sm:$0xff]
    %v1403 = vld [vmem:[#allocation11 + $0x258] sm:$0xff]
    %v1404 = vld [vmem:[#allocation11 + $0x260] sm:$0xff]
    %v1405 = vld [vmem:[#allocation11 + $0x268] sm:$0xff]
    %v1406 = vld [vmem:[#allocation11 + $0x270] sm:$0xff]
    %v1407 = vld [vmem:[#allocation11 + $0x278] sm:$0xff]
    %v1408 = vld [vmem:[#allocation11 + $0x280] sm:$0xff]
    %v1409 = vld [vmem:[#allocation11 + $0x288] sm:$0xff]
    %v1410 = vld [vmem:[#allocation11 + $0x290] sm:$0xff]
    %v1411 = vld [vmem:[#allocation11 + $0x298] sm:$0xff]
    %v1412 = vld [vmem:[#allocation11 + $0x2a0] sm:$0xff]
    %v1413 = vld [vmem:[#allocation11 + $0x2a8] sm:$0xff]
    %v1414 = vld [vmem:[#allocation11 + $0x2b0] sm:$0xff]
    %v1415 = vld [vmem:[#allocation11 + $0x2b8] sm:$0xff]
    %v1416 = vld [vmem:[#allocation11 + $0x2c0] sm:$0xff]
    %v1417 = vld [vmem:[#allocation11 + $0x2c8] sm:$0xff]
    %v1418 = vld [vmem:[#allocation11 + $0x2d0] sm:$0xff]
    %v1419 = vld [vmem:[#allocation11 + $0x2d8] sm:$0xff]
    %v1420 = vld [vmem:[#allocation11 + $0x2e0] sm:$0xff]
    %v1421 = vld [vmem:[#allocation11 + $0x2e8] sm:$0xff]
    %v1422 = vld [vmem:[#allocation11 + $0x2f0] sm:$0xff]
    %v1423 = vld [vmem:[#allocation11 + $0x2f8] sm:$0xff]
    %v1424 = vld [vmem:[#allocation11 + $0x300] sm:$0xff]
    %v1425 = vld [vmem:[#allocation11 + $0x308] sm:$0xff]
    %v1426 = vld [vmem:[#allocation11 + $0x310] sm:$0xff]
    %v1427 = vld [vmem:[#allocation11 + $0x318] sm:$0xff]
    %v1428 = vld [vmem:[#allocation11 + $0x320] sm:$0xff]
    %v1429 = vld [vmem:[#allocation11 + $0x328] sm:$0xff]
    %v1430 = vld [vmem:[#allocation11 + $0x330] sm:$0xff]
    %v1431 = vld [vmem:[#allocation11 + $0x338] sm:$0xff]
    %v1432 = vld [vmem:[#allocation11 + $0x340] sm:$0xff]
    %v1433 = vld [vmem:[#allocation11 + $0x348] sm:$0xff]
    %v1434 = vld [vmem:[#allocation11 + $0x350] sm:$0xff]
    %v1435 = vld [vmem:[#allocation11 + $0x358] sm:$0xff]
    %v1436 = vld [vmem:[#allocation11 + $0x360] sm:$0xff]
    %v1437 = vld [vmem:[#allocation11 + $0x368] sm:$0xff]
    %v1438 = vld [vmem:[#allocation11 + $0x370] sm:$0xff]
    %v1439 = vld [vmem:[#allocation11 + $0x378] sm:$0xff]
    %v1440 = vld [vmem:[#allocation11 + $0x380] sm:$0xff]
    %v1441 = vld [vmem:[#allocation11 + $0x388] sm:$0xff]
    %v1442 = vld [vmem:[#allocation11 + $0x390] sm:$0xff]
    %v1443 = vld [vmem:[#allocation11 + $0x398] sm:$0xff]
    %v1444 = vld [vmem:[#allocation11 + $0x3a0] sm:$0xff]
    %v1445 = vld [vmem:[#allocation11 + $0x3a8] sm:$0xff]
    %v1446 = vld [vmem:[#allocation11 + $0x3b0] sm:$0xff]
    %v1447 = vld [vmem:[#allocation11 + $0x3b8] sm:$0xff]
    %v1448 = vld [vmem:[#allocation11 + $0x3c0] sm:$0xff]
    %v1449 = vld [vmem:[#allocation11 + $0x3c8] sm:$0xff]
    %v1450 = vld [vmem:[#allocation11 + $0x3d0] sm:$0xff]
    %v1451 = vld [vmem:[#allocation11 + $0x3d8] sm:$0xff]
    %v1452 = vld [vmem:[#allocation11 + $0x3e0] sm:$0xff]
    %v1453 = vld [vmem:[#allocation11 + $0x3e8] sm:$0xff]
    %v1454 = vld [vmem:[#allocation11 + $0x3f0] sm:$0xff]
    %v1455 = vld [vmem:[#allocation11 + $0x3f8] sm:$0xff]
    %v1456 = vld [vmem:[#allocation11 + $0x400] sm:$0xff]
    %v1457 = vld [vmem:[#allocation11 + $0x408] sm:$0xff]
    %v1458 = vld [vmem:[#allocation11 + $0x410] sm:$0xff]
    %v1459 = vld [vmem:[#allocation11 + $0x418] sm:$0xff]
    %v1460 = vld [vmem:[#allocation11 + $0x420] sm:$0xff]
    %v1461 = vld [vmem:[#allocation11 + $0x428] sm:$0xff]
    %v1462 = vld [vmem:[#allocation11 + $0x430] sm:$0xff]
    %v1463 = vld [vmem:[#allocation11 + $0x438] sm:$0xff]
    %v1464 = vld [vmem:[#allocation11 + $0x440] sm:$0xff]
    %v1465 = vld [vmem:[#allocation11 + $0x448] sm:$0xff]
    %v1466 = vld [vmem:[#allocation11 + $0x450] sm:$0xff]
    %v1467 = vld [vmem:[#allocation11 + $0x458] sm:$0xff]
    %v1468 = vld [vmem:[#allocation11 + $0x460] sm:$0xff]
    %v1469 = vld [vmem:[#allocation11 + $0x468] sm:$0xff]
    %v1470 = vld [vmem:[#allocation11 + $0x470] sm:$0xff]
    %v1471 = vld [vmem:[#allocation11 + $0x478] sm:$0xff]
    %v1472 = vld [vmem:[#allocation11 + $0x480] sm:$0xff]
    %v1473 = vld [vmem:[#allocation11 + $0x488] sm:$0xff]
    %v1474 = vld [vmem:[#allocation11 + $0x490] sm:$0xff]
    %v1475 = vld [vmem:[#allocation11 + $0x498] sm:$0xff]
    %v1476 = vld [vmem:[#allocation11 + $0x4a0] sm:$0xff]
    %v1477 = vld [vmem:[#allocation11 + $0x4a8] sm:$0xff]
    %v1478 = vld [vmem:[#allocation11 + $0x4b0] sm:$0xff]
    %v1479 = vld [vmem:[#allocation11 + $0x4b8] sm:$0xff]
    %v1480 = vld [vmem:[#allocation11 + $0x4c0] sm:$0xff]
    %v1481 = vld [vmem:[#allocation11 + $0x4c8] sm:$0xff]
    %v1482 = vld [vmem:[#allocation11 + $0x4d0] sm:$0xff]
    %v1483 = vld [vmem:[#allocation11 + $0x4d8] sm:$0xff]
    %v1484 = vld [vmem:[#allocation11 + $0x4e0] sm:$0xff]
    %v1485 = vld [vmem:[#allocation11 + $0x4e8] sm:$0xff]
    %v1486 = vld [vmem:[#allocation11 + $0x4f0] sm:$0xff]
    %v1487 = vld [vmem:[#allocation11 + $0x4f8] sm:$0xff]
    %v1488 = vld [vmem:[#allocation11 + $0x500] sm:$0xff]
    %v1489 = vld [vmem:[#allocation11 + $0x508] sm:$0xff]
    %v1490 = vld [vmem:[#allocation11 + $0x510] sm:$0xff]
    %v1491 = vld [vmem:[#allocation11 + $0x518] sm:$0xff]
    %v1492 = vld [vmem:[#allocation11 + $0x520] sm:$0xff]
    %v1493 = vld [vmem:[#allocation11 + $0x528] sm:$0xff]
    %v1494 = vld [vmem:[#allocation11 + $0x530] sm:$0xff]
    %v1495 = vld [vmem:[#allocation11 + $0x538] sm:$0xff]
    %v1496 = vld [vmem:[#allocation11 + $0x540] sm:$0xff]
    %v1497 = vld [vmem:[#allocation11 + $0x548] sm:$0xff]
    %v1498 = vld [vmem:[#allocation11 + $0x550] sm:$0xff]
    %v1499 = vld [vmem:[#allocation11 + $0x558] sm:$0xff]
    %v1500 = vld [vmem:[#allocation11 + $0x560] sm:$0xff]
    %v1501 = vld [vmem:[#allocation11 + $0x568] sm:$0xff]
    %v1502 = vld [vmem:[#allocation11 + $0x570] sm:$0xff]
    %v1503 = vld [vmem:[#allocation11 + $0x578] sm:$0xff]
    %v1504 = vld [vmem:[#allocation11 + $0x580] sm:$0xff]
    %v1505 = vld [vmem:[#allocation11 + $0x588] sm:$0xff]
    %v1506 = vld [vmem:[#allocation11 + $0x590] sm:$0xff]
    %v1507 = vld [vmem:[#allocation11 + $0x598] sm:$0xff]
    %v1508 = vld [vmem:[#allocation11 + $0x5a0] sm:$0xff]
    %v1509 = vld [vmem:[#allocation11 + $0x5a8] sm:$0xff]
    %v1510 = vld [vmem:[#allocation11 + $0x5b0] sm:$0xff]
    %v1511 = vld [vmem:[#allocation11 + $0x5b8] sm:$0xff]
    %v1512 = vld [vmem:[#allocation11 + $0x5c0] sm:$0xff]
    %v1513 = vld [vmem:[#allocation11 + $0x5c8] sm:$0xff]
    %v1514 = vld [vmem:[#allocation11 + $0x5d0] sm:$0xff]
    %v1515 = vld [vmem:[#allocation11 + $0x5d8] sm:$0xff]
    %v1516 = vld [vmem:[#allocation11 + $0x5e0] sm:$0xff]
    %v1517 = vld [vmem:[#allocation11 + $0x5e8] sm:$0xff]
    %v1518 = vld [vmem:[#allocation11 + $0x5f0] sm:$0xff]
    %v1519 = vld [vmem:[#allocation11 + $0x5f8] sm:$0xff]
    %v1520 = vld [vmem:[#allocation11 + $0x600] sm:$0xff]
    %v1521 = vld [vmem:[#allocation11 + $0x608] sm:$0xff]
    %v1522 = vld [vmem:[#allocation11 + $0x610] sm:$0xff]
    %v1523 = vld [vmem:[#allocation11 + $0x618] sm:$0xff]
    %v1524 = vld [vmem:[#allocation11 + $0x620] sm:$0xff]
    %v1525 = vld [vmem:[#allocation11 + $0x628] sm:$0xff]
    %v1526 = vld [vmem:[#allocation11 + $0x630] sm:$0xff]
    %v1527 = vld [vmem:[#allocation11 + $0x638] sm:$0xff]
    %v1528 = vld [vmem:[#allocation11 + $0x640] sm:$0xff]
    %v1529 = vld [vmem:[#allocation11 + $0x648] sm:$0xff]
    %v1530 = vld [vmem:[#allocation11 + $0x650] sm:$0xff]
    %v1531 = vld [vmem:[#allocation11 + $0x658] sm:$0xff]
    %v1532 = vld [vmem:[#allocation11 + $0x660] sm:$0xff]
    %v1533 = vld [vmem:[#allocation11 + $0x668] sm:$0xff]
    %v1534 = vld [vmem:[#allocation11 + $0x670] sm:$0xff]
    %v1535 = vld [vmem:[#allocation11 + $0x678] sm:$0xff]
    %v1536 = vld [vmem:[#allocation11 + $0x680] sm:$0xff]
    %v1537 = vld [vmem:[#allocation11 + $0x688] sm:$0xff]
    %v1538 = vld [vmem:[#allocation11 + $0x690] sm:$0xff]
    %v1539 = vld [vmem:[#allocation11 + $0x698] sm:$0xff]
    %v1540 = vld [vmem:[#allocation11 + $0x6a0] sm:$0xff]
    %v1541 = vld [vmem:[#allocation11 + $0x6a8] sm:$0xff]
    %v1542 = vld [vmem:[#allocation11 + $0x6b0] sm:$0xff]
    %v1543 = vld [vmem:[#allocation11 + $0x6b8] sm:$0xff]
    %v1544 = vld [vmem:[#allocation11 + $0x6c0] sm:$0xff]
    %v1545 = vld [vmem:[#allocation11 + $0x6c8] sm:$0xff]
    %v1546 = vld [vmem:[#allocation11 + $0x6d0] sm:$0xff]
    %v1547 = vld [vmem:[#allocation11 + $0x6d8] sm:$0xff]
    %v1548 = vld [vmem:[#allocation11 + $0x6e0] sm:$0xff]
    %v1549 = vld [vmem:[#allocation11 + $0x6e8] sm:$0xff]
    %v1550 = vld [vmem:[#allocation11 + $0x6f0] sm:$0xff]
    %v1551 = vld [vmem:[#allocation11 + $0x6f8] sm:$0xff]
    %v1552 = vld [vmem:[#allocation11 + $0x700] sm:$0xff]
    %v1553 = vld [vmem:[#allocation11 + $0x708] sm:$0xff]
    %v1554 = vld [vmem:[#allocation11 + $0x710] sm:$0xff]
    %v1555 = vld [vmem:[#allocation11 + $0x718] sm:$0xff]
    %v1556 = vld [vmem:[#allocation11 + $0x720] sm:$0xff]
    %v1557 = vld [vmem:[#allocation11 + $0x728] sm:$0xff]
    %v1558 = vld [vmem:[#allocation11 + $0x730] sm:$0xff]
    %v1559 = vld [vmem:[#allocation11 + $0x738] sm:$0xff]
    %v1560 = vld [vmem:[#allocation11 + $0x740] sm:$0xff]
    %v1561 = vld [vmem:[#allocation11 + $0x748] sm:$0xff]
    %v1562 = vld [vmem:[#allocation11 + $0x750] sm:$0xff]
    %v1563 = vld [vmem:[#allocation11 + $0x758] sm:$0xff]
    %v1564 = vld [vmem:[#allocation11 + $0x760] sm:$0xff]
    %v1565 = vld [vmem:[#allocation11 + $0x768] sm:$0xff]
    %v1566 = vld [vmem:[#allocation11 + $0x770] sm:$0xff]
    %v1567 = vld [vmem:[#allocation11 + $0x778] sm:$0xff]
    %v1568 = vld [vmem:[#allocation11 + $0x780] sm:$0xff]
    %v1569 = vld [vmem:[#allocation11 + $0x788] sm:$0xff]
    %v1570 = vld [vmem:[#allocation11 + $0x790] sm:$0xff]
    %v1571 = vld [vmem:[#allocation11 + $0x798] sm:$0xff]
    %v1572 = vld [vmem:[#allocation11 + $0x7a0] sm:$0xff]
    %v1573 = vld [vmem:[#allocation11 + $0x7a8] sm:$0xff]
    %v1574 = vld [vmem:[#allocation11 + $0x7b0] sm:$0xff]
    %v1575 = vld [vmem:[#allocation11 + $0x7b8] sm:$0xff]
    %v1576 = vld [vmem:[#allocation11 + $0x7c0] sm:$0xff]
    %v1577 = vld [vmem:[#allocation11 + $0x7c8] sm:$0xff]
    %v1578 = vld [vmem:[#allocation11 + $0x7d0] sm:$0xff]
    %v1579 = vld [vmem:[#allocation11 + $0x7d8] sm:$0xff]
    %v1580 = vld [vmem:[#allocation11 + $0x7e0] sm:$0xff]
    %v1581 = vld [vmem:[#allocation11 + $0x7e8] sm:$0xff]
    %v1582 = vld [vmem:[#allocation11 + $0x7f0] sm:$0xff]
    %v1583 = vld [vmem:[#allocation11 + $0x7f8] sm:$0xff]
    %v1585 = vlaneseq
    %v1586 = vshrl.u32 %v1585, 7
    %v1587 = vsub.s32 0, %v1586
    %v1588 = vrot.slane %v145, %v1587
    %v1589 = vlaneseq
    %v1590 = vshrl.u32 %v1589, 7
    %v1591 = vsub.s32 1, %v1590
    %v1592 = vrot.slane %v145, %v1591
    %v1593 = vlaneseq
    %v1594 = vshrl.u32 %v1593, 7
    %v1595 = vsub.s32 2, %v1594
    %v1596 = vrot.slane %v145, %v1595
    %v1597 = vlaneseq
    %v1598 = vshrl.u32 %v1597, 7
    %v1599 = vsub.s32 3, %v1598
    %v1600 = vrot.slane %v145, %v1599
    %v1601 = vlaneseq
    %v1602 = vshrl.u32 %v1601, 7
    %v1603 = vsub.s32 4, %v1602
    %v1604 = vrot.slane %v145, %v1603
    %v1605 = vlaneseq
    %v1606 = vshrl.u32 %v1605, 7
    %v1607 = vsub.s32 5, %v1606
    %v1608 = vrot.slane %v145, %v1607
    %v1609 = vlaneseq
    %v1610 = vshrl.u32 %v1609, 7
    %v1611 = vsub.s32 6, %v1610
    %v1612 = vrot.slane %v145, %v1611
    %v1613 = vlaneseq
    %v1614 = vshrl.u32 %v1613, 7
    %v1615 = vsub.s32 7, %v1614
    %v1616 = vrot.slane %v145, %v1615
    %v1881 = vunpack.c.l.b16 %v1328
    %v1882 = vunpack.c.h.b16 %v1328
    %v1883 = vunpack.c.l.b16 %v1329
    %v1884 = vunpack.c.h.b16 %v1329
    %v1885 = vunpack.c.l.b16 %v1330
    %v1886 = vunpack.c.h.b16 %v1330
    %v1887 = vunpack.c.l.b16 %v1331
    %v1888 = vunpack.c.h.b16 %v1331
    %v1889 = vunpack.c.l.b16 %v1332
    %v1890 = vunpack.c.h.b16 %v1332
    %v1891 = vunpack.c.l.b16 %v1333
    %v1892 = vunpack.c.h.b16 %v1333
    %v1893 = vunpack.c.l.b16 %v1334
    %v1894 = vunpack.c.h.b16 %v1334
    %v1895 = vunpack.c.l.b16 %v1335
    %v1896 = vunpack.c.h.b16 %v1335
    %v1897 = vunpack.c.l.b16 %v1336
    %v1898 = vunpack.c.h.b16 %v1336
    %v1899 = vunpack.c.l.b16 %v1337
    %v1900 = vunpack.c.h.b16 %v1337
    %v1901 = vunpack.c.l.b16 %v1338
    %v1902 = vunpack.c.h.b16 %v1338
    %v1903 = vunpack.c.l.b16 %v1339
    %v1904 = vunpack.c.h.b16 %v1339
    %v1905 = vunpack.c.l.b16 %v1340
    %v1906 = vunpack.c.h.b16 %v1340
    %v1907 = vunpack.c.l.b16 %v1341
    %v1908 = vunpack.c.h.b16 %v1341
    %v1909 = vunpack.c.l.b16 %v1342
    %v1910 = vunpack.c.h.b16 %v1342
    %v1911 = vunpack.c.l.b16 %v1343
    %v1912 = vunpack.c.h.b16 %v1343
    %v1913 = vunpack.c.l.b16 %v1344
    %v1914 = vunpack.c.h.b16 %v1344
    %v1915 = vunpack.c.l.b16 %v1345
    %v1916 = vunpack.c.h.b16 %v1345
    %v1917 = vunpack.c.l.b16 %v1346
    %v1918 = vunpack.c.h.b16 %v1346
    %v1919 = vunpack.c.l.b16 %v1347
    %v1920 = vunpack.c.h.b16 %v1347
    %v1921 = vunpack.c.l.b16 %v1348
    %v1922 = vunpack.c.h.b16 %v1348
    %v1923 = vunpack.c.l.b16 %v1349
    %v1924 = vunpack.c.h.b16 %v1349
    %v1925 = vunpack.c.l.b16 %v1350
    %v1926 = vunpack.c.h.b16 %v1350
    %v1927 = vunpack.c.l.b16 %v1351
    %v1928 = vunpack.c.h.b16 %v1351
    %v1929 = vunpack.c.l.b16 %v1352
    %v1930 = vunpack.c.h.b16 %v1352
    %v1931 = vunpack.c.l.b16 %v1353
    %v1932 = vunpack.c.h.b16 %v1353
    %v1933 = vunpack.c.l.b16 %v1354
    %v1934 = vunpack.c.h.b16 %v1354
    %v1935 = vunpack.c.l.b16 %v1355
    %v1936 = vunpack.c.h.b16 %v1355
    %v1937 = vunpack.c.l.b16 %v1356
    %v1938 = vunpack.c.h.b16 %v1356
    %v1939 = vunpack.c.l.b16 %v1357
    %v1940 = vunpack.c.h.b16 %v1357
    %v1941 = vunpack.c.l.b16 %v1358
    %v1942 = vunpack.c.h.b16 %v1358
    %v1943 = vunpack.c.l.b16 %v1359
    %v1944 = vunpack.c.h.b16 %v1359
    %v1945 = vunpack.c.l.b16 %v1360
    %v1946 = vunpack.c.h.b16 %v1360
    %v1947 = vunpack.c.l.b16 %v1361
    %v1948 = vunpack.c.h.b16 %v1361
    %v1949 = vunpack.c.l.b16 %v1362
    %v1950 = vunpack.c.h.b16 %v1362
    %v1951 = vunpack.c.l.b16 %v1363
    %v1952 = vunpack.c.h.b16 %v1363
    %v1953 = vunpack.c.l.b16 %v1364
    %v1954 = vunpack.c.h.b16 %v1364
    %v1955 = vunpack.c.l.b16 %v1365
    %v1956 = vunpack.c.h.b16 %v1365
    %v1957 = vunpack.c.l.b16 %v1366
    %v1958 = vunpack.c.h.b16 %v1366
    %v1959 = vunpack.c.l.b16 %v1367
    %v1960 = vunpack.c.h.b16 %v1367
    %v1961 = vunpack.c.l.b16 %v1368
    %v1962 = vunpack.c.h.b16 %v1368
    %v1963 = vunpack.c.l.b16 %v1369
    %v1964 = vunpack.c.h.b16 %v1369
    %v1965 = vunpack.c.l.b16 %v1370
    %v1966 = vunpack.c.h.b16 %v1370
    %v1967 = vunpack.c.l.b16 %v1371
    %v1968 = vunpack.c.h.b16 %v1371
    %v1969 = vunpack.c.l.b16 %v1372
    %v1970 = vunpack.c.h.b16 %v1372
    %v1971 = vunpack.c.l.b16 %v1373
    %v1972 = vunpack.c.h.b16 %v1373
    %v1973 = vunpack.c.l.b16 %v1374
    %v1974 = vunpack.c.h.b16 %v1374
    %v1975 = vunpack.c.l.b16 %v1375
    %v1976 = vunpack.c.h.b16 %v1375
    %v1977 = vunpack.c.l.b16 %v1376
    %v1978 = vunpack.c.h.b16 %v1376
    %v1979 = vunpack.c.l.b16 %v1377
    %v1980 = vunpack.c.h.b16 %v1377
    %v1981 = vunpack.c.l.b16 %v1378
    %v1982 = vunpack.c.h.b16 %v1378
    %v1983 = vunpack.c.l.b16 %v1379
    %v1984 = vunpack.c.h.b16 %v1379
    %v1985 = vunpack.c.l.b16 %v1380
    %v1986 = vunpack.c.h.b16 %v1380
    %v1987 = vunpack.c.l.b16 %v1381
    %v1988 = vunpack.c.h.b16 %v1381
    %v1989 = vunpack.c.l.b16 %v1382
    %v1990 = vunpack.c.h.b16 %v1382
    %v1991 = vunpack.c.l.b16 %v1383
    %v1992 = vunpack.c.h.b16 %v1383
    %v1993 = vunpack.c.l.b16 %v1384
    %v1994 = vunpack.c.h.b16 %v1384
    %v1995 = vunpack.c.l.b16 %v1385
    %v1996 = vunpack.c.h.b16 %v1385
    %v1997 = vunpack.c.l.b16 %v1386
    %v1998 = vunpack.c.h.b16 %v1386
    %v1999 = vunpack.c.l.b16 %v1387
    %v2000 = vunpack.c.h.b16 %v1387
    %v2001 = vunpack.c.l.b16 %v1388
    %v2002 = vunpack.c.h.b16 %v1388
    %v2003 = vunpack.c.l.b16 %v1389
    %v2004 = vunpack.c.h.b16 %v1389
    %v2005 = vunpack.c.l.b16 %v1390
    %v2006 = vunpack.c.h.b16 %v1390
    %v2007 = vunpack.c.l.b16 %v1391
    %v2008 = vunpack.c.h.b16 %v1391
    %v2009 = vunpack.c.l.b16 %v1392
    %v2010 = vunpack.c.h.b16 %v1392
    %v2011 = vunpack.c.l.b16 %v1393
    %v2012 = vunpack.c.h.b16 %v1393
    %v2013 = vunpack.c.l.b16 %v1394
    %v2014 = vunpack.c.h.b16 %v1394
    %v2015 = vunpack.c.l.b16 %v1395
    %v2016 = vunpack.c.h.b16 %v1395
    %v2017 = vunpack.c.l.b16 %v1396
    %v2018 = vunpack.c.h.b16 %v1396
    %v2019 = vunpack.c.l.b16 %v1397
    %v2020 = vunpack.c.h.b16 %v1397
    %v2021 = vunpack.c.l.b16 %v1398
    %v2022 = vunpack.c.h.b16 %v1398
    %v2023 = vunpack.c.l.b16 %v1399
    %v2024 = vunpack.c.h.b16 %v1399
    %v2025 = vunpack.c.l.b16 %v1400
    %v2026 = vunpack.c.h.b16 %v1400
    %v2027 = vunpack.c.l.b16 %v1401
    %v2028 = vunpack.c.h.b16 %v1401
    %v2029 = vunpack.c.l.b16 %v1402
    %v2030 = vunpack.c.h.b16 %v1402
    %v2031 = vunpack.c.l.b16 %v1403
    %v2032 = vunpack.c.h.b16 %v1403
    %v2033 = vunpack.c.l.b16 %v1404
    %v2034 = vunpack.c.h.b16 %v1404
    %v2035 = vunpack.c.l.b16 %v1405
    %v2036 = vunpack.c.h.b16 %v1405
    %v2037 = vunpack.c.l.b16 %v1406
    %v2038 = vunpack.c.h.b16 %v1406
    %v2039 = vunpack.c.l.b16 %v1407
    %v2040 = vunpack.c.h.b16 %v1407
    %v2041 = vunpack.c.l.b16 %v1408
    %v2042 = vunpack.c.h.b16 %v1408
    %v2043 = vunpack.c.l.b16 %v1409
    %v2044 = vunpack.c.h.b16 %v1409
    %v2045 = vunpack.c.l.b16 %v1410
    %v2046 = vunpack.c.h.b16 %v1410
    %v2047 = vunpack.c.l.b16 %v1411
    %v2048 = vunpack.c.h.b16 %v1411
    %v2049 = vunpack.c.l.b16 %v1412
    %v2050 = vunpack.c.h.b16 %v1412
    %v2051 = vunpack.c.l.b16 %v1413
    %v2052 = vunpack.c.h.b16 %v1413
    %v2053 = vunpack.c.l.b16 %v1414
    %v2054 = vunpack.c.h.b16 %v1414
    %v2055 = vunpack.c.l.b16 %v1415
    %v2056 = vunpack.c.h.b16 %v1415
    %v2057 = vunpack.c.l.b16 %v1416
    %v2058 = vunpack.c.h.b16 %v1416
    %v2059 = vunpack.c.l.b16 %v1417
    %v2060 = vunpack.c.h.b16 %v1417
    %v2061 = vunpack.c.l.b16 %v1418
    %v2062 = vunpack.c.h.b16 %v1418
    %v2063 = vunpack.c.l.b16 %v1419
    %v2064 = vunpack.c.h.b16 %v1419
    %v2065 = vunpack.c.l.b16 %v1420
    %v2066 = vunpack.c.h.b16 %v1420
    %v2067 = vunpack.c.l.b16 %v1421
    %v2068 = vunpack.c.h.b16 %v1421
    %v2069 = vunpack.c.l.b16 %v1422
    %v2070 = vunpack.c.h.b16 %v1422
    %v2071 = vunpack.c.l.b16 %v1423
    %v2072 = vunpack.c.h.b16 %v1423
    %v2073 = vunpack.c.l.b16 %v1424
    %v2074 = vunpack.c.h.b16 %v1424
    %v2075 = vunpack.c.l.b16 %v1425
    %v2076 = vunpack.c.h.b16 %v1425
    %v2077 = vunpack.c.l.b16 %v1426
    %v2078 = vunpack.c.h.b16 %v1426
    %v2079 = vunpack.c.l.b16 %v1427
    %v2080 = vunpack.c.h.b16 %v1427
    %v2081 = vunpack.c.l.b16 %v1428
    %v2082 = vunpack.c.h.b16 %v1428
    %v2083 = vunpack.c.l.b16 %v1429
    %v2084 = vunpack.c.h.b16 %v1429
    %v2085 = vunpack.c.l.b16 %v1430
    %v2086 = vunpack.c.h.b16 %v1430
    %v2087 = vunpack.c.l.b16 %v1431
    %v2088 = vunpack.c.h.b16 %v1431
    %v2089 = vunpack.c.l.b16 %v1432
    %v2090 = vunpack.c.h.b16 %v1432
    %v2091 = vunpack.c.l.b16 %v1433
    %v2092 = vunpack.c.h.b16 %v1433
    %v2093 = vunpack.c.l.b16 %v1434
    %v2094 = vunpack.c.h.b16 %v1434
    %v2095 = vunpack.c.l.b16 %v1435
    %v2096 = vunpack.c.h.b16 %v1435
    %v2097 = vunpack.c.l.b16 %v1436
    %v2098 = vunpack.c.h.b16 %v1436
    %v2099 = vunpack.c.l.b16 %v1437
    %v2100 = vunpack.c.h.b16 %v1437
    %v2101 = vunpack.c.l.b16 %v1438
    %v2102 = vunpack.c.h.b16 %v1438
    %v2103 = vunpack.c.l.b16 %v1439
    %v2104 = vunpack.c.h.b16 %v1439
    %v2105 = vunpack.c.l.b16 %v1440
    %v2106 = vunpack.c.h.b16 %v1440
    %v2107 = vunpack.c.l.b16 %v1441
    %v2108 = vunpack.c.h.b16 %v1441
    %v2109 = vunpack.c.l.b16 %v1442
    %v2110 = vunpack.c.h.b16 %v1442
    %v2111 = vunpack.c.l.b16 %v1443
    %v2112 = vunpack.c.h.b16 %v1443
    %v2113 = vunpack.c.l.b16 %v1444
    %v2114 = vunpack.c.h.b16 %v1444
    %v2115 = vunpack.c.l.b16 %v1445
    %v2116 = vunpack.c.h.b16 %v1445
    %v2117 = vunpack.c.l.b16 %v1446
    %v2118 = vunpack.c.h.b16 %v1446
    %v2119 = vunpack.c.l.b16 %v1447
    %v2120 = vunpack.c.h.b16 %v1447
    %v2121 = vunpack.c.l.b16 %v1448
    %v2122 = vunpack.c.h.b16 %v1448
    %v2123 = vunpack.c.l.b16 %v1449
    %v2124 = vunpack.c.h.b16 %v1449
    %v2125 = vunpack.c.l.b16 %v1450
    %v2126 = vunpack.c.h.b16 %v1450
    %v2127 = vunpack.c.l.b16 %v1451
    %v2128 = vunpack.c.h.b16 %v1451
    %v2129 = vunpack.c.l.b16 %v1452
    %v2130 = vunpack.c.h.b16 %v1452
    %v2131 = vunpack.c.l.b16 %v1453
    %v2132 = vunpack.c.h.b16 %v1453
    %v2133 = vunpack.c.l.b16 %v1454
    %v2134 = vunpack.c.h.b16 %v1454
    %v2135 = vunpack.c.l.b16 %v1455
    %v2136 = vunpack.c.h.b16 %v1455
    %v2137 = vunpack.c.l.b16 %v1456
    %v2138 = vunpack.c.h.b16 %v1456
    %v2139 = vunpack.c.l.b16 %v1457
    %v2140 = vunpack.c.h.b16 %v1457
    %v2141 = vunpack.c.l.b16 %v1458
    %v2142 = vunpack.c.h.b16 %v1458
    %v2143 = vunpack.c.l.b16 %v1459
    %v2144 = vunpack.c.h.b16 %v1459
    %v2145 = vunpack.c.l.b16 %v1460
    %v2146 = vunpack.c.h.b16 %v1460
    %v2147 = vunpack.c.l.b16 %v1461
    %v2148 = vunpack.c.h.b16 %v1461
    %v2149 = vunpack.c.l.b16 %v1462
    %v2150 = vunpack.c.h.b16 %v1462
    %v2151 = vunpack.c.l.b16 %v1463
    %v2152 = vunpack.c.h.b16 %v1463
    %v2153 = vunpack.c.l.b16 %v1464
    %v2154 = vunpack.c.h.b16 %v1464
    %v2155 = vunpack.c.l.b16 %v1465
    %v2156 = vunpack.c.h.b16 %v1465
    %v2157 = vunpack.c.l.b16 %v1466
    %v2158 = vunpack.c.h.b16 %v1466
    %v2159 = vunpack.c.l.b16 %v1467
    %v2160 = vunpack.c.h.b16 %v1467
    %v2161 = vunpack.c.l.b16 %v1468
    %v2162 = vunpack.c.h.b16 %v1468
    %v2163 = vunpack.c.l.b16 %v1469
    %v2164 = vunpack.c.h.b16 %v1469
    %v2165 = vunpack.c.l.b16 %v1470
    %v2166 = vunpack.c.h.b16 %v1470
    %v2167 = vunpack.c.l.b16 %v1471
    %v2168 = vunpack.c.h.b16 %v1471
    %v2169 = vunpack.c.l.b16 %v1472
    %v2170 = vunpack.c.h.b16 %v1472
    %v2171 = vunpack.c.l.b16 %v1473
    %v2172 = vunpack.c.h.b16 %v1473
    %v2173 = vunpack.c.l.b16 %v1474
    %v2174 = vunpack.c.h.b16 %v1474
    %v2175 = vunpack.c.l.b16 %v1475
    %v2176 = vunpack.c.h.b16 %v1475
    %v2177 = vunpack.c.l.b16 %v1476
    %v2178 = vunpack.c.h.b16 %v1476
    %v2179 = vunpack.c.l.b16 %v1477
    %v2180 = vunpack.c.h.b16 %v1477
    %v2181 = vunpack.c.l.b16 %v1478
    %v2182 = vunpack.c.h.b16 %v1478
    %v2183 = vunpack.c.l.b16 %v1479
    %v2184 = vunpack.c.h.b16 %v1479
    %v2185 = vunpack.c.l.b16 %v1480
    %v2186 = vunpack.c.h.b16 %v1480
    %v2187 = vunpack.c.l.b16 %v1481
    %v2188 = vunpack.c.h.b16 %v1481
    %v2189 = vunpack.c.l.b16 %v1482
    %v2190 = vunpack.c.h.b16 %v1482
    %v2191 = vunpack.c.l.b16 %v1483
    %v2192 = vunpack.c.h.b16 %v1483
    %v2193 = vunpack.c.l.b16 %v1484
    %v2194 = vunpack.c.h.b16 %v1484
    %v2195 = vunpack.c.l.b16 %v1485
    %v2196 = vunpack.c.h.b16 %v1485
    %v2197 = vunpack.c.l.b16 %v1486
    %v2198 = vunpack.c.h.b16 %v1486
    %v2199 = vunpack.c.l.b16 %v1487
    %v2200 = vunpack.c.h.b16 %v1487
    %v2201 = vunpack.c.l.b16 %v1488
    %v2202 = vunpack.c.h.b16 %v1488
    %v2203 = vunpack.c.l.b16 %v1489
    %v2204 = vunpack.c.h.b16 %v1489
    %v2205 = vunpack.c.l.b16 %v1490
    %v2206 = vunpack.c.h.b16 %v1490
    %v2207 = vunpack.c.l.b16 %v1491
    %v2208 = vunpack.c.h.b16 %v1491
    %v2209 = vunpack.c.l.b16 %v1492
    %v2210 = vunpack.c.h.b16 %v1492
    %v2211 = vunpack.c.l.b16 %v1493
    %v2212 = vunpack.c.h.b16 %v1493
    %v2213 = vunpack.c.l.b16 %v1494
    %v2214 = vunpack.c.h.b16 %v1494
    %v2215 = vunpack.c.l.b16 %v1495
    %v2216 = vunpack.c.h.b16 %v1495
    %v2217 = vunpack.c.l.b16 %v1496
    %v2218 = vunpack.c.h.b16 %v1496
    %v2219 = vunpack.c.l.b16 %v1497
    %v2220 = vunpack.c.h.b16 %v1497
    %v2221 = vunpack.c.l.b16 %v1498
    %v2222 = vunpack.c.h.b16 %v1498
    %v2223 = vunpack.c.l.b16 %v1499
    %v2224 = vunpack.c.h.b16 %v1499
    %v2225 = vunpack.c.l.b16 %v1500
    %v2226 = vunpack.c.h.b16 %v1500
    %v2227 = vunpack.c.l.b16 %v1501
    %v2228 = vunpack.c.h.b16 %v1501
    %v2229 = vunpack.c.l.b16 %v1502
    %v2230 = vunpack.c.h.b16 %v1502
    %v2231 = vunpack.c.l.b16 %v1503
    %v2232 = vunpack.c.h.b16 %v1503
    %v2233 = vunpack.c.l.b16 %v1504
    %v2234 = vunpack.c.h.b16 %v1504
    %v2235 = vunpack.c.l.b16 %v1505
    %v2236 = vunpack.c.h.b16 %v1505
    %v2237 = vunpack.c.l.b16 %v1506
    %v2238 = vunpack.c.h.b16 %v1506
    %v2239 = vunpack.c.l.b16 %v1507
    %v2240 = vunpack.c.h.b16 %v1507
    %v2241 = vunpack.c.l.b16 %v1508
    %v2242 = vunpack.c.h.b16 %v1508
    %v2243 = vunpack.c.l.b16 %v1509
    %v2244 = vunpack.c.h.b16 %v1509
    %v2245 = vunpack.c.l.b16 %v1510
    %v2246 = vunpack.c.h.b16 %v1510
    %v2247 = vunpack.c.l.b16 %v1511
    %v2248 = vunpack.c.h.b16 %v1511
    %v2249 = vunpack.c.l.b16 %v1512
    %v2250 = vunpack.c.h.b16 %v1512
    %v2251 = vunpack.c.l.b16 %v1513
    %v2252 = vunpack.c.h.b16 %v1513
    %v2253 = vunpack.c.l.b16 %v1514
    %v2254 = vunpack.c.h.b16 %v1514
    %v2255 = vunpack.c.l.b16 %v1515
    %v2256 = vunpack.c.h.b16 %v1515
    %v2257 = vunpack.c.l.b16 %v1516
    %v2258 = vunpack.c.h.b16 %v1516
    %v2259 = vunpack.c.l.b16 %v1517
    %v2260 = vunpack.c.h.b16 %v1517
    %v2261 = vunpack.c.l.b16 %v1518
    %v2262 = vunpack.c.h.b16 %v1518
    %v2263 = vunpack.c.l.b16 %v1519
    %v2264 = vunpack.c.h.b16 %v1519
    %v2265 = vunpack.c.l.b16 %v1520
    %v2266 = vunpack.c.h.b16 %v1520
    %v2267 = vunpack.c.l.b16 %v1521
    %v2268 = vunpack.c.h.b16 %v1521
    %v2269 = vunpack.c.l.b16 %v1522
    %v2270 = vunpack.c.h.b16 %v1522
    %v2271 = vunpack.c.l.b16 %v1523
    %v2272 = vunpack.c.h.b16 %v1523
    %v2273 = vunpack.c.l.b16 %v1524
    %v2274 = vunpack.c.h.b16 %v1524
    %v2275 = vunpack.c.l.b16 %v1525
    %v2276 = vunpack.c.h.b16 %v1525
    %v2277 = vunpack.c.l.b16 %v1526
    %v2278 = vunpack.c.h.b16 %v1526
    %v2279 = vunpack.c.l.b16 %v1527
    %v2280 = vunpack.c.h.b16 %v1527
    %v2281 = vunpack.c.l.b16 %v1528
    %v2282 = vunpack.c.h.b16 %v1528
    %v2283 = vunpack.c.l.b16 %v1529
    %v2284 = vunpack.c.h.b16 %v1529
    %v2285 = vunpack.c.l.b16 %v1530
    %v2286 = vunpack.c.h.b16 %v1530
    %v2287 = vunpack.c.l.b16 %v1531
    %v2288 = vunpack.c.h.b16 %v1531
    %v2289 = vunpack.c.l.b16 %v1532
    %v2290 = vunpack.c.h.b16 %v1532
    %v2291 = vunpack.c.l.b16 %v1533
    %v2292 = vunpack.c.h.b16 %v1533
    %v2293 = vunpack.c.l.b16 %v1534
    %v2294 = vunpack.c.h.b16 %v1534
    %v2295 = vunpack.c.l.b16 %v1535
    %v2296 = vunpack.c.h.b16 %v1535
    %v2297 = vunpack.c.l.b16 %v1536
    %v2298 = vunpack.c.h.b16 %v1536
    %v2299 = vunpack.c.l.b16 %v1537
    %v2300 = vunpack.c.h.b16 %v1537
    %v2301 = vunpack.c.l.b16 %v1538
    %v2302 = vunpack.c.h.b16 %v1538
    %v2303 = vunpack.c.l.b16 %v1539
    %v2304 = vunpack.c.h.b16 %v1539
    %v2305 = vunpack.c.l.b16 %v1540
    %v2306 = vunpack.c.h.b16 %v1540
    %v2307 = vunpack.c.l.b16 %v1541
    %v2308 = vunpack.c.h.b16 %v1541
    %v2309 = vunpack.c.l.b16 %v1542
    %v2310 = vunpack.c.h.b16 %v1542
    %v2311 = vunpack.c.l.b16 %v1543
    %v2312 = vunpack.c.h.b16 %v1543
    %v2313 = vunpack.c.l.b16 %v1544
    %v2314 = vunpack.c.h.b16 %v1544
    %v2315 = vunpack.c.l.b16 %v1545
    %v2316 = vunpack.c.h.b16 %v1545
    %v2317 = vunpack.c.l.b16 %v1546
    %v2318 = vunpack.c.h.b16 %v1546
    %v2319 = vunpack.c.l.b16 %v1547
    %v2320 = vunpack.c.h.b16 %v1547
    %v2321 = vunpack.c.l.b16 %v1548
    %v2322 = vunpack.c.h.b16 %v1548
    %v2323 = vunpack.c.l.b16 %v1549
    %v2324 = vunpack.c.h.b16 %v1549
    %v2325 = vunpack.c.l.b16 %v1550
    %v2326 = vunpack.c.h.b16 %v1550
    %v2327 = vunpack.c.l.b16 %v1551
    %v2328 = vunpack.c.h.b16 %v1551
    %v2329 = vunpack.c.l.b16 %v1552
    %v2330 = vunpack.c.h.b16 %v1552
    %v2331 = vunpack.c.l.b16 %v1553
    %v2332 = vunpack.c.h.b16 %v1553
    %v2333 = vunpack.c.l.b16 %v1554
    %v2334 = vunpack.c.h.b16 %v1554
    %v2335 = vunpack.c.l.b16 %v1555
    %v2336 = vunpack.c.h.b16 %v1555
    %v2337 = vunpack.c.l.b16 %v1556
    %v2338 = vunpack.c.h.b16 %v1556
    %v2339 = vunpack.c.l.b16 %v1557
    %v2340 = vunpack.c.h.b16 %v1557
    %v2341 = vunpack.c.l.b16 %v1558
    %v2342 = vunpack.c.h.b16 %v1558
    %v2343 = vunpack.c.l.b16 %v1559
    %v2344 = vunpack.c.h.b16 %v1559
    %v2345 = vunpack.c.l.b16 %v1560
    %v2346 = vunpack.c.h.b16 %v1560
    %v2347 = vunpack.c.l.b16 %v1561
    %v2348 = vunpack.c.h.b16 %v1561
    %v2349 = vunpack.c.l.b16 %v1562
    %v2350 = vunpack.c.h.b16 %v1562
    %v2351 = vunpack.c.l.b16 %v1563
    %v2352 = vunpack.c.h.b16 %v1563
    %v2353 = vunpack.c.l.b16 %v1564
    %v2354 = vunpack.c.h.b16 %v1564
    %v2355 = vunpack.c.l.b16 %v1565
    %v2356 = vunpack.c.h.b16 %v1565
    %v2357 = vunpack.c.l.b16 %v1566
    %v2358 = vunpack.c.h.b16 %v1566
    %v2359 = vunpack.c.l.b16 %v1567
    %v2360 = vunpack.c.h.b16 %v1567
    %v2361 = vunpack.c.l.b16 %v1568
    %v2362 = vunpack.c.h.b16 %v1568
    %v2363 = vunpack.c.l.b16 %v1569
    %v2364 = vunpack.c.h.b16 %v1569
    %v2365 = vunpack.c.l.b16 %v1570
    %v2366 = vunpack.c.h.b16 %v1570
    %v2367 = vunpack.c.l.b16 %v1571
    %v2368 = vunpack.c.h.b16 %v1571
    %v2369 = vunpack.c.l.b16 %v1572
    %v2370 = vunpack.c.h.b16 %v1572
    %v2371 = vunpack.c.l.b16 %v1573
    %v2372 = vunpack.c.h.b16 %v1573
    %v2373 = vunpack.c.l.b16 %v1574
    %v2374 = vunpack.c.h.b16 %v1574
    %v2375 = vunpack.c.l.b16 %v1575
    %v2376 = vunpack.c.h.b16 %v1575
    %v2377 = vunpack.c.l.b16 %v1576
    %v2378 = vunpack.c.h.b16 %v1576
    %v2379 = vunpack.c.l.b16 %v1577
    %v2380 = vunpack.c.h.b16 %v1577
    %v2381 = vunpack.c.l.b16 %v1578
    %v2382 = vunpack.c.h.b16 %v1578
    %v2383 = vunpack.c.l.b16 %v1579
    %v2384 = vunpack.c.h.b16 %v1579
    %v2385 = vunpack.c.l.b16 %v1580
    %v2386 = vunpack.c.h.b16 %v1580
    %v2387 = vunpack.c.l.b16 %v1581
    %v2388 = vunpack.c.h.b16 %v1581
    %v2389 = vunpack.c.l.b16 %v1582
    %v2390 = vunpack.c.h.b16 %v1582
    %v2391 = vunpack.c.l.b16 %v1583
    %v2392 = vunpack.c.h.b16 %v1583
    %v2393 = vpack.c.b16 %v1889, %v1881
    %v2394 = vpack.c.b16 %v1890, %v1882
    %v2395 = vpack.c.b16 %v1891, %v1883
    %v2396 = vpack.c.b16 %v1892, %v1884
    %v2397 = vpack.c.b16 %v1893, %v1885
    %v2398 = vpack.c.b16 %v1894, %v1886
    %v2399 = vpack.c.b16 %v1895, %v1887
    %v2400 = vpack.c.b16 %v1896, %v1888
    %v2401 = vpack.c.b16 %v1905, %v1897
    %v2402 = vpack.c.b16 %v1906, %v1898
    %v2403 = vpack.c.b16 %v1907, %v1899
    %v2404 = vpack.c.b16 %v1908, %v1900
    %v2405 = vpack.c.b16 %v1909, %v1901
    %v2406 = vpack.c.b16 %v1910, %v1902
    %v2407 = vpack.c.b16 %v1911, %v1903
    %v2408 = vpack.c.b16 %v1912, %v1904
    %v2409 = vpack.c.b16 %v1921, %v1913
    %v2410 = vpack.c.b16 %v1922, %v1914
    %v2411 = vpack.c.b16 %v1923, %v1915
    %v2412 = vpack.c.b16 %v1924, %v1916
    %v2413 = vpack.c.b16 %v1925, %v1917
    %v2414 = vpack.c.b16 %v1926, %v1918
    %v2415 = vpack.c.b16 %v1927, %v1919
    %v2416 = vpack.c.b16 %v1928, %v1920
    %v2417 = vpack.c.b16 %v1937, %v1929
    %v2418 = vpack.c.b16 %v1938, %v1930
    %v2419 = vpack.c.b16 %v1939, %v1931
    %v2420 = vpack.c.b16 %v1940, %v1932
    %v2421 = vpack.c.b16 %v1941, %v1933
    %v2422 = vpack.c.b16 %v1942, %v1934
    %v2423 = vpack.c.b16 %v1943, %v1935
    %v2424 = vpack.c.b16 %v1944, %v1936
    %v2425 = vpack.c.b16 %v1953, %v1945
    %v2426 = vpack.c.b16 %v1954, %v1946
    %v2427 = vpack.c.b16 %v1955, %v1947
    %v2428 = vpack.c.b16 %v1956, %v1948
    %v2429 = vpack.c.b16 %v1957, %v1949
    %v2430 = vpack.c.b16 %v1958, %v1950
    %v2431 = vpack.c.b16 %v1959, %v1951
    %v2432 = vpack.c.b16 %v1960, %v1952
    %v2433 = vpack.c.b16 %v1969, %v1961
    %v2434 = vpack.c.b16 %v1970, %v1962
    %v2435 = vpack.c.b16 %v1971, %v1963
    %v2436 = vpack.c.b16 %v1972, %v1964
    %v2437 = vpack.c.b16 %v1973, %v1965
    %v2438 = vpack.c.b16 %v1974, %v1966
    %v2439 = vpack.c.b16 %v1975, %v1967
    %v2440 = vpack.c.b16 %v1976, %v1968
    %v2441 = vpack.c.b16 %v1985, %v1977
    %v2442 = vpack.c.b16 %v1986, %v1978
    %v2443 = vpack.c.b16 %v1987, %v1979
    %v2444 = vpack.c.b16 %v1988, %v1980
    %v2445 = vpack.c.b16 %v1989, %v1981
    %v2446 = vpack.c.b16 %v1990, %v1982
    %v2447 = vpack.c.b16 %v1991, %v1983
    %v2448 = vpack.c.b16 %v1992, %v1984
    %v2449 = vpack.c.b16 %v2001, %v1993
    %v2450 = vpack.c.b16 %v2002, %v1994
    %v2451 = vpack.c.b16 %v2003, %v1995
    %v2452 = vpack.c.b16 %v2004, %v1996
    %v2453 = vpack.c.b16 %v2005, %v1997
    %v2454 = vpack.c.b16 %v2006, %v1998
    %v2455 = vpack.c.b16 %v2007, %v1999
    %v2456 = vpack.c.b16 %v2008, %v2000
    %v2457 = vpack.c.b16 %v2017, %v2009
    %v2458 = vpack.c.b16 %v2018, %v2010
    %v2459 = vpack.c.b16 %v2019, %v2011
    %v2460 = vpack.c.b16 %v2020, %v2012
    %v2461 = vpack.c.b16 %v2021, %v2013
    %v2462 = vpack.c.b16 %v2022, %v2014
    %v2463 = vpack.c.b16 %v2023, %v2015
    %v2464 = vpack.c.b16 %v2024, %v2016
    %v2465 = vpack.c.b16 %v2033, %v2025
    %v2466 = vpack.c.b16 %v2034, %v2026
    %v2467 = vpack.c.b16 %v2035, %v2027
    %v2468 = vpack.c.b16 %v2036, %v2028
    %v2469 = vpack.c.b16 %v2037, %v2029
    %v2470 = vpack.c.b16 %v2038, %v2030
    %v2471 = vpack.c.b16 %v2039, %v2031
    %v2472 = vpack.c.b16 %v2040, %v2032
    %v2473 = vpack.c.b16 %v2049, %v2041
    %v2474 = vpack.c.b16 %v2050, %v2042
    %v2475 = vpack.c.b16 %v2051, %v2043
    %v2476 = vpack.c.b16 %v2052, %v2044
    %v2477 = vpack.c.b16 %v2053, %v2045
    %v2478 = vpack.c.b16 %v2054, %v2046
    %v2479 = vpack.c.b16 %v2055, %v2047
    %v2480 = vpack.c.b16 %v2056, %v2048
    %v2481 = vpack.c.b16 %v2065, %v2057
    %v2482 = vpack.c.b16 %v2066, %v2058
    %v2483 = vpack.c.b16 %v2067, %v2059
    %v2484 = vpack.c.b16 %v2068, %v2060
    %v2485 = vpack.c.b16 %v2069, %v2061
    %v2486 = vpack.c.b16 %v2070, %v2062
    %v2487 = vpack.c.b16 %v2071, %v2063
    %v2488 = vpack.c.b16 %v2072, %v2064
    %v2489 = vpack.c.b16 %v2081, %v2073
    %v2490 = vpack.c.b16 %v2082, %v2074
    %v2491 = vpack.c.b16 %v2083, %v2075
    %v2492 = vpack.c.b16 %v2084, %v2076
    %v2493 = vpack.c.b16 %v2085, %v2077
    %v2494 = vpack.c.b16 %v2086, %v2078
    %v2495 = vpack.c.b16 %v2087, %v2079
    %v2496 = vpack.c.b16 %v2088, %v2080
    %v2497 = vpack.c.b16 %v2097, %v2089
    %v2498 = vpack.c.b16 %v2098, %v2090
    %v2499 = vpack.c.b16 %v2099, %v2091
    %v2500 = vpack.c.b16 %v2100, %v2092
    %v2501 = vpack.c.b16 %v2101, %v2093
    %v2502 = vpack.c.b16 %v2102, %v2094
    %v2503 = vpack.c.b16 %v2103, %v2095
    %v2504 = vpack.c.b16 %v2104, %v2096
    %v2505 = vpack.c.b16 %v2113, %v2105
    %v2506 = vpack.c.b16 %v2114, %v2106
    %v2507 = vpack.c.b16 %v2115, %v2107
    %v2508 = vpack.c.b16 %v2116, %v2108
    %v2509 = vpack.c.b16 %v2117, %v2109
    %v2510 = vpack.c.b16 %v2118, %v2110
    %v2511 = vpack.c.b16 %v2119, %v2111
    %v2512 = vpack.c.b16 %v2120, %v2112
    %v2513 = vpack.c.b16 %v2129, %v2121
    %v2514 = vpack.c.b16 %v2130, %v2122
    %v2515 = vpack.c.b16 %v2131, %v2123
    %v2516 = vpack.c.b16 %v2132, %v2124
    %v2517 = vpack.c.b16 %v2133, %v2125
    %v2518 = vpack.c.b16 %v2134, %v2126
    %v2519 = vpack.c.b16 %v2135, %v2127
    %v2520 = vpack.c.b16 %v2136, %v2128
    %v2521 = vpack.c.b16 %v2145, %v2137
    %v2522 = vpack.c.b16 %v2146, %v2138
    %v2523 = vpack.c.b16 %v2147, %v2139
    %v2524 = vpack.c.b16 %v2148, %v2140
    %v2525 = vpack.c.b16 %v2149, %v2141
    %v2526 = vpack.c.b16 %v2150, %v2142
    %v2527 = vpack.c.b16 %v2151, %v2143
    %v2528 = vpack.c.b16 %v2152, %v2144
    %v2529 = vpack.c.b16 %v2161, %v2153
    %v2530 = vpack.c.b16 %v2162, %v2154
    %v2531 = vpack.c.b16 %v2163, %v2155
    %v2532 = vpack.c.b16 %v2164, %v2156
    %v2533 = vpack.c.b16 %v2165, %v2157
    %v2534 = vpack.c.b16 %v2166, %v2158
    %v2535 = vpack.c.b16 %v2167, %v2159
    %v2536 = vpack.c.b16 %v2168, %v2160
    %v2537 = vpack.c.b16 %v2177, %v2169
    %v2538 = vpack.c.b16 %v2178, %v2170
    %v2539 = vpack.c.b16 %v2179, %v2171
    %v2540 = vpack.c.b16 %v2180, %v2172
    %v2541 = vpack.c.b16 %v2181, %v2173
    %v2542 = vpack.c.b16 %v2182, %v2174
    %v2543 = vpack.c.b16 %v2183, %v2175
    %v2544 = vpack.c.b16 %v2184, %v2176
    %v2545 = vpack.c.b16 %v2193, %v2185
    %v2546 = vpack.c.b16 %v2194, %v2186
    %v2547 = vpack.c.b16 %v2195, %v2187
    %v2548 = vpack.c.b16 %v2196, %v2188
    %v2549 = vpack.c.b16 %v2197, %v2189
    %v2550 = vpack.c.b16 %v2198, %v2190
    %v2551 = vpack.c.b16 %v2199, %v2191
    %v2552 = vpack.c.b16 %v2200, %v2192
    %v2553 = vpack.c.b16 %v2209, %v2201
    %v2554 = vpack.c.b16 %v2210, %v2202
    %v2555 = vpack.c.b16 %v2211, %v2203
    %v2556 = vpack.c.b16 %v2212, %v2204
    %v2557 = vpack.c.b16 %v2213, %v2205
    %v2558 = vpack.c.b16 %v2214, %v2206
    %v2559 = vpack.c.b16 %v2215, %v2207
    %v2560 = vpack.c.b16 %v2216, %v2208
    %v2561 = vpack.c.b16 %v2225, %v2217
    %v2562 = vpack.c.b16 %v2226, %v2218
    %v2563 = vpack.c.b16 %v2227, %v2219
    %v2564 = vpack.c.b16 %v2228, %v2220
    %v2565 = vpack.c.b16 %v2229, %v2221
    %v2566 = vpack.c.b16 %v2230, %v2222
    %v2567 = vpack.c.b16 %v2231, %v2223
    %v2568 = vpack.c.b16 %v2232, %v2224
    %v2569 = vpack.c.b16 %v2241, %v2233
    %v2570 = vpack.c.b16 %v2242, %v2234
    %v2571 = vpack.c.b16 %v2243, %v2235
    %v2572 = vpack.c.b16 %v2244, %v2236
    %v2573 = vpack.c.b16 %v2245, %v2237
    %v2574 = vpack.c.b16 %v2246, %v2238
    %v2575 = vpack.c.b16 %v2247, %v2239
    %v2576 = vpack.c.b16 %v2248, %v2240
    %v2577 = vpack.c.b16 %v2257, %v2249
    %v2578 = vpack.c.b16 %v2258, %v2250
    %v2579 = vpack.c.b16 %v2259, %v2251
    %v2580 = vpack.c.b16 %v2260, %v2252
    %v2581 = vpack.c.b16 %v2261, %v2253
    %v2582 = vpack.c.b16 %v2262, %v2254
    %v2583 = vpack.c.b16 %v2263, %v2255
    %v2584 = vpack.c.b16 %v2264, %v2256
    %v2585 = vpack.c.b16 %v2273, %v2265
    %v2586 = vpack.c.b16 %v2274, %v2266
    %v2587 = vpack.c.b16 %v2275, %v2267
    %v2588 = vpack.c.b16 %v2276, %v2268
    %v2589 = vpack.c.b16 %v2277, %v2269
    %v2590 = vpack.c.b16 %v2278, %v2270
    %v2591 = vpack.c.b16 %v2279, %v2271
    %v2592 = vpack.c.b16 %v2280, %v2272
    %v2593 = vpack.c.b16 %v2289, %v2281
    %v2594 = vpack.c.b16 %v2290, %v2282
    %v2595 = vpack.c.b16 %v2291, %v2283
    %v2596 = vpack.c.b16 %v2292, %v2284
    %v2597 = vpack.c.b16 %v2293, %v2285
    %v2598 = vpack.c.b16 %v2294, %v2286
    %v2599 = vpack.c.b16 %v2295, %v2287
    %v2600 = vpack.c.b16 %v2296, %v2288
    %v2601 = vpack.c.b16 %v2305, %v2297
    %v2602 = vpack.c.b16 %v2306, %v2298
    %v2603 = vpack.c.b16 %v2307, %v2299
    %v2604 = vpack.c.b16 %v2308, %v2300
    %v2605 = vpack.c.b16 %v2309, %v2301
    %v2606 = vpack.c.b16 %v2310, %v2302
    %v2607 = vpack.c.b16 %v2311, %v2303
    %v2608 = vpack.c.b16 %v2312, %v2304
    %v2609 = vpack.c.b16 %v2321, %v2313
    %v2610 = vpack.c.b16 %v2322, %v2314
    %v2611 = vpack.c.b16 %v2323, %v2315
    %v2612 = vpack.c.b16 %v2324, %v2316
    %v2613 = vpack.c.b16 %v2325, %v2317
    %v2614 = vpack.c.b16 %v2326, %v2318
    %v2615 = vpack.c.b16 %v2327, %v2319
    %v2616 = vpack.c.b16 %v2328, %v2320
    %v2617 = vpack.c.b16 %v2337, %v2329
    %v2618 = vpack.c.b16 %v2338, %v2330
    %v2619 = vpack.c.b16 %v2339, %v2331
    %v2620 = vpack.c.b16 %v2340, %v2332
    %v2621 = vpack.c.b16 %v2341, %v2333
    %v2622 = vpack.c.b16 %v2342, %v2334
    %v2623 = vpack.c.b16 %v2343, %v2335
    %v2624 = vpack.c.b16 %v2344, %v2336
    %v2625 = vpack.c.b16 %v2353, %v2345
    %v2626 = vpack.c.b16 %v2354, %v2346
    %v2627 = vpack.c.b16 %v2355, %v2347
    %v2628 = vpack.c.b16 %v2356, %v2348
    %v2629 = vpack.c.b16 %v2357, %v2349
    %v2630 = vpack.c.b16 %v2358, %v2350
    %v2631 = vpack.c.b16 %v2359, %v2351
    %v2632 = vpack.c.b16 %v2360, %v2352
    %v2633 = vpack.c.b16 %v2369, %v2361
    %v2634 = vpack.c.b16 %v2370, %v2362
    %v2635 = vpack.c.b16 %v2371, %v2363
    %v2636 = vpack.c.b16 %v2372, %v2364
    %v2637 = vpack.c.b16 %v2373, %v2365
    %v2638 = vpack.c.b16 %v2374, %v2366
    %v2639 = vpack.c.b16 %v2375, %v2367
    %v2640 = vpack.c.b16 %v2376, %v2368
    %v2641 = vpack.c.b16 %v2385, %v2377
    %v2642 = vpack.c.b16 %v2386, %v2378
    %v2643 = vpack.c.b16 %v2387, %v2379
    %v2644 = vpack.c.b16 %v2388, %v2380
    %v2645 = vpack.c.b16 %v2389, %v2381
    %v2646 = vpack.c.b16 %v2390, %v2382
    %v2647 = vpack.c.b16 %v2391, %v2383
    %v2648 = vpack.c.b16 %v2392, %v2384
    %2905 = vmatprep.subr.bf16.mxu0 %v2450
    %2906 = vmatpush1.bf16.msra.mxu0 %v2449
    %2907 = vmatprep.subr.bf16.mxu0 %v2442
    %2908 = vmatpush1.bf16.msra.mxu0 %v2441
    %2909 = vmatprep.subr.bf16.mxu0 %v2434
    %2910 = vmatpush1.bf16.msra.mxu0 %v2433
    %2911 = vmatprep.subr.bf16.mxu0 %v2426
    %2912 = vmatpush1.bf16.msra.mxu0 %v2425
    %2913 = vmatprep.subr.bf16.mxu0 %v2418
    %2914 = vmatpush1.bf16.msra.mxu0 %v2417
    %2915 = vmatprep.subr.bf16.mxu0 %v2410
    %2916 = vmatpush1.bf16.msra.mxu0 %v2409
    %2917 = vmatprep.subr.bf16.mxu0 %v2402
    %2918 = vmatpush1.bf16.msra.mxu0 %v2401
    %2919 = vmatprep.subr.bf16.mxu0 %v2394
    %2920 = vmatpush1.bf16.msra.mxu0 %v2393
    %2921 = vmatprep.subr.bf16.mxu0 %v2514
    %2922 = vmatpush2.bf16.msra.mxu0 %v2513
    %2923 = vmatprep.subr.bf16.mxu0 %v2506
    %2924 = vmatpush2.bf16.msra.mxu0 %v2505
    %2925 = vmatprep.subr.bf16.mxu0 %v2498
    %2926 = vmatpush2.bf16.msra.mxu0 %v2497
    %2927 = vmatprep.subr.bf16.mxu0 %v2490
    %2928 = vmatpush2.bf16.msra.mxu0 %v2489
    %2929 = vmatprep.subr.bf16.mxu0 %v2482
    %2930 = vmatpush2.bf16.msra.mxu0 %v2481
    %2931 = vmatprep.subr.bf16.mxu0 %v2474
    %2932 = vmatpush2.bf16.msra.mxu0 %v2473
    %2933 = vmatprep.subr.bf16.mxu0 %v2466
    %2934 = vmatpush2.bf16.msra.mxu0 %v2465
    %2935 = vmatprep.subr.bf16.mxu0 %v2458
    %2936 = vmatpush2.bf16.msra.mxu0 %v2457
    %2937 = vmatprep.mubr.bf16.mxu0 %v1325
    %2938 = vmatmul.mubr.bf16.gmra.mxu0 %v1324
    %v2939 = vpop.f32.mrf.mxu0
    %v2940 = vadd.f32 %v1588, %v2939
    %v2941 = vpop.f32.mrf.mxu0
    %v2942 = vadd.f32 %v1592, %v2941
    %v2943 = vpop.f32.mrf.mxu0
    %v2944 = vpop.f32.mrf.mxu0
    %2945 = vdwg.mxu0
    %2946 = vmatprep.subr.bf16.mxu0 %v2578
    %2947 = vmatpush1.bf16.msra.mxu0 %v2577
    %2948 = vmatprep.subr.bf16.mxu0 %v2570
    %2949 = vmatpush1.bf16.msra.mxu0 %v2569
    %2950 = vmatprep.subr.bf16.mxu0 %v2562
    %2951 = vmatpush1.bf16.msra.mxu0 %v2561
    %2952 = vmatprep.subr.bf16.mxu0 %v2554
    %2953 = vmatpush1.bf16.msra.mxu0 %v2553
    %2954 = vmatprep.subr.bf16.mxu0 %v2546
    %2955 = vmatpush1.bf16.msra.mxu0 %v2545
    %2956 = vmatprep.subr.bf16.mxu0 %v2538
    %2957 = vmatpush1.bf16.msra.mxu0 %v2537
    %2958 = vmatprep.subr.bf16.mxu0 %v2530
    %2959 = vmatpush1.bf16.msra.mxu0 %v2529
    %2960 = vmatprep.subr.bf16.mxu0 %v2522
    %2961 = vmatpush1.bf16.msra.mxu0 %v2521
    %2962 = vmatprep.subr.bf16.mxu0 %v2642
    %2963 = vmatpush2.bf16.msra.mxu0 %v2641
    %2964 = vmatprep.subr.bf16.mxu0 %v2634
    %2965 = vmatpush2.bf16.msra.mxu0 %v2633
    %2966 = vmatprep.subr.bf16.mxu0 %v2626
    %2967 = vmatpush2.bf16.msra.mxu0 %v2625
    %2968 = vmatprep.subr.bf16.mxu0 %v2618
    %2969 = vmatpush2.bf16.msra.mxu0 %v2617
    %2970 = vmatprep.subr.bf16.mxu0 %v2610
    %2971 = vmatpush2.bf16.msra.mxu0 %v2609
    %2972 = vmatprep.subr.bf16.mxu0 %v2602
    %2973 = vmatpush2.bf16.msra.mxu0 %v2601
    %2974 = vmatprep.subr.bf16.mxu0 %v2594
    %2975 = vmatpush2.bf16.msra.mxu0 %v2593
    %2976 = vmatprep.subr.bf16.mxu0 %v2586
    %2977 = vmatpush2.bf16.msra.mxu0 %v2585
    %2978 = vmatprep.mubr.bf16.mxu0 %v1327
    %2979 = vmatmul.mubr.bf16.gmra.mxu0 %v1326
    %v2980 = vpop.f32.mrf.mxu0
    %v2981 = vadd.f32 %v2940, %v2980
    %v2982 = vpop.f32.mrf.mxu0
    %v2983 = vadd.f32 %v2942, %v2982
    %v2984 = vpop.f32.mrf.mxu0
    %v2985 = vpop.f32.mrf.mxu0
    %2986 = vdwg.mxu0
    %2987 = vmatprep.subr.bf16.mxu0 %v2452
    %2988 = vmatpush1.bf16.msra.mxu0 %v2451
    %2989 = vmatprep.subr.bf16.mxu0 %v2444
    %2990 = vmatpush1.bf16.msra.mxu0 %v2443
    %2991 = vmatprep.subr.bf16.mxu0 %v2436
    %2992 = vmatpush1.bf16.msra.mxu0 %v2435
    %2993 = vmatprep.subr.bf16.mxu0 %v2428
    %2994 = vmatpush1.bf16.msra.mxu0 %v2427
    %2995 = vmatprep.subr.bf16.mxu0 %v2420
    %2996 = vmatpush1.bf16.msra.mxu0 %v2419
    %2997 = vmatprep.subr.bf16.mxu0 %v2412
    %2998 = vmatpush1.bf16.msra.mxu0 %v2411
    %2999 = vmatprep.subr.bf16.mxu0 %v2404
    %3000 = vmatpush1.bf16.msra.mxu0 %v2403
    %3001 = vmatprep.subr.bf16.mxu0 %v2396
    %3002 = vmatpush1.bf16.msra.mxu0 %v2395
    %3003 = vmatprep.subr.bf16.mxu0 %v2516
    %3004 = vmatpush2.bf16.msra.mxu0 %v2515
    %3005 = vmatprep.subr.bf16.mxu0 %v2508
    %3006 = vmatpush2.bf16.msra.mxu0 %v2507
    %3007 = vmatprep.subr.bf16.mxu0 %v2500
    %3008 = vmatpush2.bf16.msra.mxu0 %v2499
    %3009 = vmatprep.subr.bf16.mxu0 %v2492
    %3010 = vmatpush2.bf16.msra.mxu0 %v2491
    %3011 = vmatprep.subr.bf16.mxu0 %v2484
    %3012 = vmatpush2.bf16.msra.mxu0 %v2483
    %3013 = vmatprep.subr.bf16.mxu0 %v2476
    %3014 = vmatpush2.bf16.msra.mxu0 %v2475
    %3015 = vmatprep.subr.bf16.mxu0 %v2468
    %3016 = vmatpush2.bf16.msra.mxu0 %v2467
    %3017 = vmatprep.subr.bf16.mxu0 %v2460
    %3018 = vmatpush2.bf16.msra.mxu0 %v2459
    %3019 = vmatprep.mubr.bf16.mxu0 %v1325
    %3020 = vmatmul.mubr.bf16.gmra.mxu0 %v1324
    %v3021 = vpop.f32.mrf.mxu0
    %v3022 = vadd.f32 %v1596, %v3021
    %v3023 = vpop.f32.mrf.mxu0
    %v3024 = vadd.f32 %v1600, %v3023
    %v3025 = vpop.f32.mrf.mxu0
    %v3026 = vpop.f32.mrf.mxu0
    %3027 = vdwg.mxu0
    %3028 = vmatprep.subr.bf16.mxu0 %v2580
    %3029 = vmatpush1.bf16.msra.mxu0 %v2579
    %3030 = vmatprep.subr.bf16.mxu0 %v2572
    %3031 = vmatpush1.bf16.msra.mxu0 %v2571
    %3032 = vmatprep.subr.bf16.mxu0 %v2564
    %3033 = vmatpush1.bf16.msra.mxu0 %v2563
    %3034 = vmatprep.subr.bf16.mxu0 %v2556
    %3035 = vmatpush1.bf16.msra.mxu0 %v2555
    %3036 = vmatprep.subr.bf16.mxu0 %v2548
    %3037 = vmatpush1.bf16.msra.mxu0 %v2547
    %3038 = vmatprep.subr.bf16.mxu0 %v2540
    %3039 = vmatpush1.bf16.msra.mxu0 %v2539
    %3040 = vmatprep.subr.bf16.mxu0 %v2532
    %3041 = vmatpush1.bf16.msra.mxu0 %v2531
    %3042 = vmatprep.subr.bf16.mxu0 %v2524
    %3043 = vmatpush1.bf16.msra.mxu0 %v2523
    %3044 = vmatprep.subr.bf16.mxu0 %v2644
    %3045 = vmatpush2.bf16.msra.mxu0 %v2643
    %3046 = vmatprep.subr.bf16.mxu0 %v2636
    %3047 = vmatpush2.bf16.msra.mxu0 %v2635
    %3048 = vmatprep.subr.bf16.mxu0 %v2628
    %3049 = vmatpush2.bf16.msra.mxu0 %v2627
    %3050 = vmatprep.subr.bf16.mxu0 %v2620
    %3051 = vmatpush2.bf16.msra.mxu0 %v2619
    %3052 = vmatprep.subr.bf16.mxu0 %v2612
    %3053 = vmatpush2.bf16.msra.mxu0 %v2611
    %3054 = vmatprep.subr.bf16.mxu0 %v2604
    %3055 = vmatpush2.bf16.msra.mxu0 %v2603
    %3056 = vmatprep.subr.bf16.mxu0 %v2596
    %3057 = vmatpush2.bf16.msra.mxu0 %v2595
    %3058 = vmatprep.subr.bf16.mxu0 %v2588
    %3059 = vmatpush2.bf16.msra.mxu0 %v2587
    %3060 = vmatprep.mubr.bf16.mxu0 %v1327
    %3061 = vmatmul.mubr.bf16.gmra.mxu0 %v1326
    %v3062 = vpop.f32.mrf.mxu0
    %v3063 = vadd.f32 %v3022, %v3062
    %v3064 = vpop.f32.mrf.mxu0
    %v3065 = vadd.f32 %v3024, %v3064
    %v3066 = vpop.f32.mrf.mxu0
    %v3067 = vpop.f32.mrf.mxu0
    %3068 = vdwg.mxu0
    %3069 = vmatprep.subr.bf16.mxu0 %v2454
    %3070 = vmatpush1.bf16.msra.mxu0 %v2453
    %3071 = vmatprep.subr.bf16.mxu0 %v2446
    %3072 = vmatpush1.bf16.msra.mxu0 %v2445
    %3073 = vmatprep.subr.bf16.mxu0 %v2438
    %3074 = vmatpush1.bf16.msra.mxu0 %v2437
    %3075 = vmatprep.subr.bf16.mxu0 %v2430
    %3076 = vmatpush1.bf16.msra.mxu0 %v2429
    %3077 = vmatprep.subr.bf16.mxu0 %v2422
    %3078 = vmatpush1.bf16.msra.mxu0 %v2421
    %3079 = vmatprep.subr.bf16.mxu0 %v2414
    %3080 = vmatpush1.bf16.msra.mxu0 %v2413
    %3081 = vmatprep.subr.bf16.mxu0 %v2406
    %3082 = vmatpush1.bf16.msra.mxu0 %v2405
    %3083 = vmatprep.subr.bf16.mxu0 %v2398
    %3084 = vmatpush1.bf16.msra.mxu0 %v2397
    %3085 = vmatprep.subr.bf16.mxu0 %v2518
    %3086 = vmatpush2.bf16.msra.mxu0 %v2517
    %3087 = vmatprep.subr.bf16.mxu0 %v2510
    %3088 = vmatpush2.bf16.msra.mxu0 %v2509
    %3089 = vmatprep.subr.bf16.mxu0 %v2502
    %3090 = vmatpush2.bf16.msra.mxu0 %v2501
    %3091 = vmatprep.subr.bf16.mxu0 %v2494
    %3092 = vmatpush2.bf16.msra.mxu0 %v2493
    %3093 = vmatprep.subr.bf16.mxu0 %v2486
    %3094 = vmatpush2.bf16.msra.mxu0 %v2485
    %3095 = vmatprep.subr.bf16.mxu0 %v2478
    %3096 = vmatpush2.bf16.msra.mxu0 %v2477
    %3097 = vmatprep.subr.bf16.mxu0 %v2470
    %3098 = vmatpush2.bf16.msra.mxu0 %v2469
    %3099 = vmatprep.subr.bf16.mxu0 %v2462
    %3100 = vmatpush2.bf16.msra.mxu0 %v2461
    %3101 = vmatprep.mubr.bf16.mxu0 %v1325
    %3102 = vmatmul.mubr.bf16.gmra.mxu0 %v1324
    %v3103 = vpop.f32.mrf.mxu0
    %v3104 = vadd.f32 %v1604, %v3103
    %v3105 = vpop.f32.mrf.mxu0
    %v3106 = vadd.f32 %v1608, %v3105
    %v3107 = vpop.f32.mrf.mxu0
    %v3108 = vpop.f32.mrf.mxu0
    %3109 = vdwg.mxu0
    %3110 = vmatprep.subr.bf16.mxu0 %v2582
    %3111 = vmatpush1.bf16.msra.mxu0 %v2581
    %3112 = vmatprep.subr.bf16.mxu0 %v2574
    %3113 = vmatpush1.bf16.msra.mxu0 %v2573
    %3114 = vmatprep.subr.bf16.mxu0 %v2566
    %3115 = vmatpush1.bf16.msra.mxu0 %v2565
    %3116 = vmatprep.subr.bf16.mxu0 %v2558
    %3117 = vmatpush1.bf16.msra.mxu0 %v2557
    %3118 = vmatprep.subr.bf16.mxu0 %v2550
    %3119 = vmatpush1.bf16.msra.mxu0 %v2549
    %3120 = vmatprep.subr.bf16.mxu0 %v2542
    %3121 = vmatpush1.bf16.msra.mxu0 %v2541
    %3122 = vmatprep.subr.bf16.mxu0 %v2534
    %3123 = vmatpush1.bf16.msra.mxu0 %v2533
    %3124 = vmatprep.subr.bf16.mxu0 %v2526
    %3125 = vmatpush1.bf16.msra.mxu0 %v2525
    %3126 = vmatprep.subr.bf16.mxu0 %v2646
    %3127 = vmatpush2.bf16.msra.mxu0 %v2645
    %3128 = vmatprep.subr.bf16.mxu0 %v2638
    %3129 = vmatpush2.bf16.msra.mxu0 %v2637
    %3130 = vmatprep.subr.bf16.mxu0 %v2630
    %3131 = vmatpush2.bf16.msra.mxu0 %v2629
    %3132 = vmatprep.subr.bf16.mxu0 %v2622
    %3133 = vmatpush2.bf16.msra.mxu0 %v2621
    %3134 = vmatprep.subr.bf16.mxu0 %v2614
    %3135 = vmatpush2.bf16.msra.mxu0 %v2613
    %3136 = vmatprep.subr.bf16.mxu0 %v2606
    %3137 = vmatpush2.bf16.msra.mxu0 %v2605
    %3138 = vmatprep.subr.bf16.mxu0 %v2598
    %3139 = vmatpush2.bf16.msra.mxu0 %v2597
    %3140 = vmatprep.subr.bf16.mxu0 %v2590
    %3141 = vmatpush2.bf16.msra.mxu0 %v2589
    %3142 = vmatprep.mubr.bf16.mxu0 %v1327
    %3143 = vmatmul.mubr.bf16.gmra.mxu0 %v1326
    %v3144 = vpop.f32.mrf.mxu0
    %v3145 = vadd.f32 %v3104, %v3144
    %v3146 = vpop.f32.mrf.mxu0
    %v3147 = vadd.f32 %v3106, %v3146
    %v3148 = vpop.f32.mrf.mxu0
    %v3149 = vpop.f32.mrf.mxu0
    %3150 = vdwg.mxu0
    %3151 = vmatprep.subr.bf16.mxu0 %v2456
    %3152 = vmatpush1.bf16.msra.mxu0 %v2455
    %3153 = vmatprep.subr.bf16.mxu0 %v2448
    %3154 = vmatpush1.bf16.msra.mxu0 %v2447
    %3155 = vmatprep.subr.bf16.mxu0 %v2440
    %3156 = vmatpush1.bf16.msra.mxu0 %v2439
    %3157 = vmatprep.subr.bf16.mxu0 %v2432
    %3158 = vmatpush1.bf16.msra.mxu0 %v2431
    %3159 = vmatprep.subr.bf16.mxu0 %v2424
    %3160 = vmatpush1.bf16.msra.mxu0 %v2423
    %3161 = vmatprep.subr.bf16.mxu0 %v2416
    %3162 = vmatpush1.bf16.msra.mxu0 %v2415
    %3163 = vmatprep.subr.bf16.mxu0 %v2408
    %3164 = vmatpush1.bf16.msra.mxu0 %v2407
    %3165 = vmatprep.subr.bf16.mxu0 %v2400
    %3166 = vmatpush1.bf16.msra.mxu0 %v2399
    %3167 = vmatprep.subr.bf16.mxu0 %v2520
    %3168 = vmatpush2.bf16.msra.mxu0 %v2519
    %3169 = vmatprep.subr.bf16.mxu0 %v2512
    %3170 = vmatpush2.bf16.msra.mxu0 %v2511
    %3171 = vmatprep.subr.bf16.mxu0 %v2504
    %3172 = vmatpush2.bf16.msra.mxu0 %v2503
    %3173 = vmatprep.subr.bf16.mxu0 %v2496
    %3174 = vmatpush2.bf16.msra.mxu0 %v2495
    %3175 = vmatprep.subr.bf16.mxu0 %v2488
    %3176 = vmatpush2.bf16.msra.mxu0 %v2487
    %3177 = vmatprep.subr.bf16.mxu0 %v2480
    %3178 = vmatpush2.bf16.msra.mxu0 %v2479
    %3179 = vmatprep.subr.bf16.mxu0 %v2472
    %3180 = vmatpush2.bf16.msra.mxu0 %v2471
    %3181 = vmatprep.subr.bf16.mxu0 %v2464
    %3182 = vmatpush2.bf16.msra.mxu0 %v2463
    %3183 = vmatprep.mubr.bf16.mxu0 %v1325
    %3184 = vmatmul.mubr.bf16.gmra.mxu0 %v1324
    %v3185 = vpop.f32.mrf.mxu0
    %v3186 = vadd.f32 %v1612, %v3185
    %v3187 = vpop.f32.mrf.mxu0
    %v3188 = vadd.f32 %v1616, %v3187
    %v3189 = vpop.f32.mrf.mxu0
    %v3190 = vpop.f32.mrf.mxu0
    %3191 = vdwg.mxu0
    %3192 = vmatprep.subr.bf16.mxu0 %v2584
    %3193 = vmatpush1.bf16.msra.mxu0 %v2583
    %3194 = vmatprep.subr.bf16.mxu0 %v2576
    %3195 = vmatpush1.bf16.msra.mxu0 %v2575
    %3196 = vmatprep.subr.bf16.mxu0 %v2568
    %3197 = vmatpush1.bf16.msra.mxu0 %v2567
    %3198 = vmatprep.subr.bf16.mxu0 %v2560
    %3199 = vmatpush1.bf16.msra.mxu0 %v2559
    %3200 = vmatprep.subr.bf16.mxu0 %v2552
    %3201 = vmatpush1.bf16.msra.mxu0 %v2551
    %3202 = vmatprep.subr.bf16.mxu0 %v2544
    %3203 = vmatpush1.bf16.msra.mxu0 %v2543
    %3204 = vmatprep.subr.bf16.mxu0 %v2536
    %3205 = vmatpush1.bf16.msra.mxu0 %v2535
    %3206 = vmatprep.subr.bf16.mxu0 %v2528
    %3207 = vmatpush1.bf16.msra.mxu0 %v2527
    %3208 = vmatprep.subr.bf16.mxu0 %v2648
    %3209 = vmatpush2.bf16.msra.mxu0 %v2647
    %3210 = vmatprep.subr.bf16.mxu0 %v2640
    %3211 = vmatpush2.bf16.msra.mxu0 %v2639
    %3212 = vmatprep.subr.bf16.mxu0 %v2632
    %3213 = vmatpush2.bf16.msra.mxu0 %v2631
    %3214 = vmatprep.subr.bf16.mxu0 %v2624
    %3215 = vmatpush2.bf16.msra.mxu0 %v2623
    %3216 = vmatprep.subr.bf16.mxu0 %v2616
    %3217 = vmatpush2.bf16.msra.mxu0 %v2615
    %3218 = vmatprep.subr.bf16.mxu0 %v2608
    %3219 = vmatpush2.bf16.msra.mxu0 %v2607
    %3220 = vmatprep.subr.bf16.mxu0 %v2600
    %3221 = vmatpush2.bf16.msra.mxu0 %v2599
    %3222 = vmatprep.subr.bf16.mxu0 %v2592
    %3223 = vmatpush2.bf16.msra.mxu0 %v2591
    %3224 = vmatprep.mubr.bf16.mxu0 %v1327
    %3225 = vmatmul.mubr.bf16.gmra.mxu0 %v1326
    %v3226 = vpop.f32.mrf.mxu0
    %v3227 = vadd.f32 %v3186, %v3226
    %v3228 = vpop.f32.mrf.mxu0
    %v3229 = vadd.f32 %v3188, %v3228
    %v3230 = vpop.f32.mrf.mxu0
    %v3231 = vpop.f32.mrf.mxu0
    %3232 = vdwg.mxu0
    %v3233 = vrot.slane %v2981, 4
    %v3234 = vadd.f32 %v2981, %v3233
    %v3235 = vrot.slane %v3234, 2
    %v3236 = vadd.f32 %v3234, %v3235
    %v3237 = vrot.slane %v3236, 1
    %v3238 = vadd.f32 %v3236, %v3237
    %v3239 = vrot.slane %v2983, 4
    %v3240 = vadd.f32 %v2983, %v3239
    %v3241 = vrot.slane %v3240, 2
    %v3242 = vadd.f32 %v3240, %v3241
    %v3243 = vrot.slane %v3242, 1
    %v3244 = vadd.f32 %v3242, %v3243
    %v3245 = vrot.slane %v3063, 4
    %v3246 = vadd.f32 %v3063, %v3245
    %v3247 = vrot.slane %v3246, 2
    %v3248 = vadd.f32 %v3246, %v3247
    %v3249 = vrot.slane %v3248, 1
    %v3250 = vadd.f32 %v3248, %v3249
    %v3251 = vrot.slane %v3065, 4
    %v3252 = vadd.f32 %v3065, %v3251
    %v3253 = vrot.slane %v3252, 2
    %v3254 = vadd.f32 %v3252, %v3253
    %v3255 = vrot.slane %v3254, 1
    %v3256 = vadd.f32 %v3254, %v3255
    %v3257 = vrot.slane %v3145, 4
    %v3258 = vadd.f32 %v3145, %v3257
    %v3259 = vrot.slane %v3258, 2
    %v3260 = vadd.f32 %v3258, %v3259
    %v3261 = vrot.slane %v3260, 1
    %v3262 = vadd.f32 %v3260, %v3261
    %v3263 = vrot.slane %v3147, 4
    %v3264 = vadd.f32 %v3147, %v3263
    %v3265 = vrot.slane %v3264, 2
    %v3266 = vadd.f32 %v3264, %v3265
    %v3267 = vrot.slane %v3266, 1
    %v3268 = vadd.f32 %v3266, %v3267
    %v3269 = vrot.slane %v3227, 4
    %v3270 = vadd.f32 %v3227, %v3269
    %v3271 = vrot.slane %v3270, 2
    %v3272 = vadd.f32 %v3270, %v3271
    %v3273 = vrot.slane %v3272, 1
    %v3274 = vadd.f32 %v3272, %v3273
    %v3275 = vrot.slane %v3229, 4
    %v3276 = vadd.f32 %v3229, %v3275
    %v3277 = vrot.slane %v3276, 2
    %v3278 = vadd.f32 %v3276, %v3277
    %v3279 = vrot.slane %v3278, 1
    %v3280 = vadd.f32 %v3278, %v3279
    %v3281 = vmul.f32 %v3238, %v540
    %v3282 = vmul.f32 %v3244, %v540
    %v3283 = vmul.f32 %v3250, %v540
    %v3284 = vmul.f32 %v3256, %v540
    %v3285 = vmul.f32 %v3262, %v540
    %v3286 = vmul.f32 %v3268, %v540
    %v3287 = vmul.f32 %v3274, %v540
    %v3288 = vmul.f32 %v3280, %v540
    %v3289 = vsub.f32 %v2981, %v3281
    %v3290 = vsub.f32 %v2983, %v3282
    %v3291 = vsub.f32 %v3063, %v3283
    %v3292 = vsub.f32 %v3065, %v3284
    %v3293 = vsub.f32 %v3145, %v3285
    %v3294 = vsub.f32 %v3147, %v3286
    %v3295 = vsub.f32 %v3227, %v3287
    %v3296 = vsub.f32 %v3229, %v3288
    %v3297 = vmul.f32 %v3289, %v3289
    %v3298 = vmul.f32 %v3290, %v3290
    %v3299 = vmul.f32 %v3291, %v3291
    %v3300 = vmul.f32 %v3292, %v3292
    %v3301 = vmul.f32 %v3293, %v3293
    %v3302 = vmul.f32 %v3294, %v3294
    %v3303 = vmul.f32 %v3295, %v3295
    %v3304 = vmul.f32 %v3296, %v3296
    %v3305 = vrot.slane %v3297, 4
    %v3306 = vadd.f32 %v3297, %v3305
    %v3307 = vrot.slane %v3306, 2
    %v3308 = vadd.f32 %v3306, %v3307
    %v3309 = vrot.slane %v3308, 1
    %v3310 = vadd.f32 %v3308, %v3309
    %v3311 = vrot.slane %v3298, 4
    %v3312 = vadd.f32 %v3298, %v3311
    %v3313 = vrot.slane %v3312, 2
    %v3314 = vadd.f32 %v3312, %v3313
    %v3315 = vrot.slane %v3314, 1
    %v3316 = vadd.f32 %v3314, %v3315
    %v3317 = vrot.slane %v3299, 4
    %v3318 = vadd.f32 %v3299, %v3317
    %v3319 = vrot.slane %v3318, 2
    %v3320 = vadd.f32 %v3318, %v3319
    %v3321 = vrot.slane %v3320, 1
    %v3322 = vadd.f32 %v3320, %v3321
    %v3323 = vrot.slane %v3300, 4
    %v3324 = vadd.f32 %v3300, %v3323
    %v3325 = vrot.slane %v3324, 2
    %v3326 = vadd.f32 %v3324, %v3325
    %v3327 = vrot.slane %v3326, 1
    %v3328 = vadd.f32 %v3326, %v3327
    %v3329 = vrot.slane %v3301, 4
    %v3330 = vadd.f32 %v3301, %v3329
    %v3331 = vrot.slane %v3330, 2
    %v3332 = vadd.f32 %v3330, %v3331
    %v3333 = vrot.slane %v3332, 1
    %v3334 = vadd.f32 %v3332, %v3333
    %v3335 = vrot.slane %v3302, 4
    %v3336 = vadd.f32 %v3302, %v3335
    %v3337 = vrot.slane %v3336, 2
    %v3338 = vadd.f32 %v3336, %v3337
    %v3339 = vrot.slane %v3338, 1
    %v3340 = vadd.f32 %v3338, %v3339
    %v3341 = vrot.slane %v3303, 4
    %v3342 = vadd.f32 %v3303, %v3341
    %v3343 = vrot.slane %v3342, 2
    %v3344 = vadd.f32 %v3342, %v3343
    %v3345 = vrot.slane %v3344, 1
    %v3346 = vadd.f32 %v3344, %v3345
    %v3347 = vrot.slane %v3304, 4
    %v3348 = vadd.f32 %v3304, %v3347
    %v3349 = vrot.slane %v3348, 2
    %v3350 = vadd.f32 %v3348, %v3349
    %v3351 = vrot.slane %v3350, 1
    %v3352 = vadd.f32 %v3350, %v3351
    %v3353 = vmul.f32 %v3310, %v540
    %v3354 = vmul.f32 %v3316, %v540
    %v3355 = vmul.f32 %v3322, %v540
    %v3356 = vmul.f32 %v3328, %v540
    %v3357 = vmul.f32 %v3334, %v540
    %v3358 = vmul.f32 %v3340, %v540
    %v3359 = vmul.f32 %v3346, %v540
    %v3360 = vmul.f32 %v3352, %v540
    %v3361 = vadd.f32 %v3353, 0.8
    %v3362 = vadd.f32 %v3354, 0.8
    %v3363 = vadd.f32 %v3355, 0.8
    %v3364 = vadd.f32 %v3356, 0.8
    %v3365 = vadd.f32 %v3357, 0.8
    %v3366 = vadd.f32 %v3358, 0.8
    %v3367 = vadd.f32 %v3359, 0.8
    %v3368 = vadd.f32 %v3360, 0.8
    %v3369 = vrsqrt.pop %v3361
    %v3370 = vrsqrt.pop %v3362
    %v3371 = vrsqrt.pop %v3363
    %v3372 = vrsqrt.pop %v3364
    %v3373 = vrsqrt.pop %v3365
    %v3374 = vrsqrt.pop %v3366
    %v3375 = vrsqrt.pop %v3367
    %v3376 = vrsqrt.pop %v3368
    %v3385 = vcombine.low %v3369, %v3370
    %v3386 = vcombine.low %v3371, %v3372
    %v3387 = vcombine.low %v3373, %v3374
    %v3388 = vcombine.low %v3375, %v3376
    %v3390 = vunpack.c.l.s4 1966171168
    %v3391 = vunpack.c.0.s8 %v3390
    %v3392 = vlaneseq
    %v3393 = vshrl.u32 %v3392, 7
    %v3394 = vsub.s32 %v3391, %v3393
    %v3395 = vrot.slane %v3385, %v3394
    %v3397 = vunpack.c.l.s4 1966171168
    %v3398 = vunpack.c.0.s8 %v3397
    %v3399 = vlaneseq
    %v3400 = vshrl.u32 %v3399, 7
    %v3401 = vsub.s32 %v3398, %v3400
    %v3402 = vrot.slane %v3386, %v3401
    %v3404 = vunpack.c.l.s4 1966171168
    %v3405 = vunpack.c.0.s8 %v3404
    %v3406 = vlaneseq
    %v3407 = vshrl.u32 %v3406, 7
    %v3408 = vsub.s32 %v3405, %v3407
    %v3409 = vrot.slane %v3387, %v3408
    %v3411 = vunpack.c.l.s4 1966171168
    %v3412 = vunpack.c.0.s8 %v3411
    %v3413 = vlaneseq
    %v3414 = vshrl.u32 %v3413, 7
    %v3415 = vsub.s32 %v3412, %v3414
    %v3416 = vrot.slane %v3388, %v3415
    %v3417 = vcombine.low %v3395, %v3402
    %v3418 = vcombine.low %v3409, %v3416
    %v3420 = vunpack.c.l.s4 1966171168
    %v3421 = vunpack.c.0.s8 %v3420
    %v3422 = vlaneseq
    %v3423 = vshrl.u32 %v3422, 7
    %v3424 = vsub.s32 %v3421, %v3423
    %v3425 = vrot.slane %v3417, %v3424
    %v3427 = vunpack.c.l.s4 1966171168
    %v3428 = vunpack.c.0.s8 %v3427
    %v3429 = vlaneseq
    %v3430 = vshrl.u32 %v3429, 7
    %v3431 = vsub.s32 %v3428, %v3430
    %v3432 = vrot.slane %v3418, %v3431
    %v3433 = vcombine.low %v3425, %v3432
    %v3435 = vmul.f32 %v149, %v3433
    %v3437 = vlaneseq
    %v3438 = vshrl.u32 %v3437, 7
    %v3439 = vsub.s32 0, %v3438
    %v3440 = vrot.slane %v3435, %v3439
    %v3441 = vlaneseq
    %v3442 = vshrl.u32 %v3441, 7
    %v3443 = vsub.s32 1, %v3442
    %v3444 = vrot.slane %v3435, %v3443
    %v3445 = vlaneseq
    %v3446 = vshrl.u32 %v3445, 7
    %v3447 = vsub.s32 2, %v3446
    %v3448 = vrot.slane %v3435, %v3447
    %v3449 = vlaneseq
    %v3450 = vshrl.u32 %v3449, 7
    %v3451 = vsub.s32 3, %v3450
    %v3452 = vrot.slane %v3435, %v3451
    %v3453 = vlaneseq
    %v3454 = vshrl.u32 %v3453, 7
    %v3455 = vsub.s32 4, %v3454
    %v3456 = vrot.slane %v3435, %v3455
    %v3457 = vlaneseq
    %v3458 = vshrl.u32 %v3457, 7
    %v3459 = vsub.s32 5, %v3458
    %v3460 = vrot.slane %v3435, %v3459
    %v3461 = vlaneseq
    %v3462 = vshrl.u32 %v3461, 7
    %v3463 = vsub.s32 6, %v3462
    %v3464 = vrot.slane %v3435, %v3463
    %v3465 = vlaneseq
    %v3466 = vshrl.u32 %v3465, 7
    %v3467 = vsub.s32 7, %v3466
    %v3468 = vrot.slane %v3435, %v3467
    %v3477 = vmul.f32 %v3281, %v3440
    %v3478 = vmul.f32 %v3282, %v3444
    %v3479 = vmul.f32 %v3283, %v3448
    %v3480 = vmul.f32 %v3284, %v3452
    %v3481 = vmul.f32 %v3285, %v3456
    %v3482 = vmul.f32 %v3286, %v3460
    %v3483 = vmul.f32 %v3287, %v3464
    %v3484 = vmul.f32 %v3288, %v3468
    %v3493 = vcombine.low %v3477, %v3478
    %v3494 = vcombine.low %v3479, %v3480
    %v3495 = vcombine.low %v3481, %v3482
    %v3496 = vcombine.low %v3483, %v3484
    %v3498 = vunpack.c.l.s4 1966171168
    %v3499 = vunpack.c.0.s8 %v3498
    %v3500 = vlaneseq
    %v3501 = vshrl.u32 %v3500, 7
    %v3502 = vsub.s32 %v3499, %v3501
    %v3503 = vrot.slane %v3493, %v3502
    %v3505 = vunpack.c.l.s4 1966171168
    %v3506 = vunpack.c.0.s8 %v3505
    %v3507 = vlaneseq
    %v3508 = vshrl.u32 %v3507, 7
    %v3509 = vsub.s32 %v3506, %v3508
    %v3510 = vrot.slane %v3494, %v3509
    %v3512 = vunpack.c.l.s4 1966171168
    %v3513 = vunpack.c.0.s8 %v3512
    %v3514 = vlaneseq
    %v3515 = vshrl.u32 %v3514, 7
    %v3516 = vsub.s32 %v3513, %v3515
    %v3517 = vrot.slane %v3495, %v3516
    %v3519 = vunpack.c.l.s4 1966171168
    %v3520 = vunpack.c.0.s8 %v3519
    %v3521 = vlaneseq
    %v3522 = vshrl.u32 %v3521, 7
    %v3523 = vsub.s32 %v3520, %v3522
    %v3524 = vrot.slane %v3496, %v3523
    %v3525 = vcombine.low %v3503, %v3510
    %v3526 = vcombine.low %v3517, %v3524
    %v3528 = vunpack.c.l.s4 1966171168
    %v3529 = vunpack.c.0.s8 %v3528
    %v3530 = vlaneseq
    %v3531 = vshrl.u32 %v3530, 7
    %v3532 = vsub.s32 %v3529, %v3531
    %v3533 = vrot.slane %v3525, %v3532
    %v3535 = vunpack.c.l.s4 1966171168
    %v3536 = vunpack.c.0.s8 %v3535
    %v3537 = vlaneseq
    %v3538 = vshrl.u32 %v3537, 7
    %v3539 = vsub.s32 %v3536, %v3538
    %v3540 = vrot.slane %v3526, %v3539
    %v3541 = vcombine.low %v3533, %v3540
    %v3543 = vsub.f32 %v153, %v3541
    %v3544 = vmul.f32 %v2981, %v3440
    %v3545 = vmul.f32 %v2983, %v3444
    %v3546 = vmul.f32 %v3063, %v3448
    %v3547 = vmul.f32 %v3065, %v3452
    %v3548 = vmul.f32 %v3145, %v3456
    %v3549 = vmul.f32 %v3147, %v3460
    %v3550 = vmul.f32 %v3227, %v3464
    %v3551 = vmul.f32 %v3229, %v3468
    %v3553 = vlaneseq
    %v3554 = vshrl.u32 %v3553, 7
    %v3555 = vsub.s32 0, %v3554
    %v3556 = vrot.slane %v3543, %v3555
    %v3557 = vlaneseq
    %v3558 = vshrl.u32 %v3557, 7
    %v3559 = vsub.s32 1, %v3558
    %v3560 = vrot.slane %v3543, %v3559
    %v3561 = vlaneseq
    %v3562 = vshrl.u32 %v3561, 7
    %v3563 = vsub.s32 2, %v3562
    %v3564 = vrot.slane %v3543, %v3563
    %v3565 = vlaneseq
    %v3566 = vshrl.u32 %v3565, 7
    %v3567 = vsub.s32 3, %v3566
    %v3568 = vrot.slane %v3543, %v3567
    %v3569 = vlaneseq
    %v3570 = vshrl.u32 %v3569, 7
    %v3571 = vsub.s32 4, %v3570
    %v3572 = vrot.slane %v3543, %v3571
    %v3573 = vlaneseq
    %v3574 = vshrl.u32 %v3573, 7
    %v3575 = vsub.s32 5, %v3574
    %v3576 = vrot.slane %v3543, %v3575
    %v3577 = vlaneseq
    %v3578 = vshrl.u32 %v3577, 7
    %v3579 = vsub.s32 6, %v3578
    %v3580 = vrot.slane %v3543, %v3579
    %v3581 = vlaneseq
    %v3582 = vshrl.u32 %v3581, 7
    %v3583 = vsub.s32 7, %v3582
    %v3584 = vrot.slane %v3543, %v3583
    %v3593 = vadd.f32 %v3544, %v3556
    %v3594 = vadd.f32 %v3545, %v3560
    %v3595 = vadd.f32 %v3546, %v3564
    %v3596 = vadd.f32 %v3547, %v3568
    %v3597 = vadd.f32 %v3548, %v3572
    %v3598 = vadd.f32 %v3549, %v3576
    %v3599 = vadd.f32 %v3550, %v3580
    %v3600 = vadd.f32 %v3551, %v3584
    %vm3601 = vcmp.ge.f32.partialorder %v3593, 0.0
    %vm3602 = vcmp.ge.f32.partialorder %v3594, 0.0
    %vm3603 = vcmp.ge.f32.partialorder %v3595, 0.0
    %vm3604 = vcmp.ge.f32.partialorder %v3596, 0.0
    %vm3605 = vcmp.ge.f32.partialorder %v3597, 0.0
    %vm3606 = vcmp.ge.f32.partialorder %v3598, 0.0
    %vm3607 = vcmp.ge.f32.partialorder %v3599, 0.0
    %vm3608 = vcmp.ge.f32.partialorder %v3600, 0.0
    %v3609 = vmul.f32 %v3593, 0.2
    %v3610 = vmul.f32 %v3594, 0.2
    %v3611 = vmul.f32 %v3595, 0.2
    %v3612 = vmul.f32 %v3596, 0.2
    %v3613 = vmul.f32 %v3597, 0.2
    %v3614 = vmul.f32 %v3598, 0.2
    %v3615 = vmul.f32 %v3599, 0.2
    %v3616 = vmul.f32 %v3600, 0.2
    %v3617 = vsel %vm3601, %v3593, %v3609
    %v3618 = vsel %vm3602, %v3594, %v3610
    %v3619 = vsel %vm3603, %v3595, %v3611
    %v3620 = vsel %vm3604, %v3596, %v3612
    %v3621 = vsel %vm3605, %v3597, %v3613
    %v3622 = vsel %vm3606, %v3598, %v3614
    %v3623 = vsel %vm3607, %v3599, %v3615
    %v3624 = vsel %vm3608, %v3600, %v3616
    %v3625 = vpack.c.bf16 %v3617, %v3617
    %v3626 = vpack.c.bf16 %v3618, %v3618
    %v3627 = vpack.c.bf16 %v3619, %v3619
    %v3628 = vpack.c.bf16 %v3620, %v3620
    %v3629 = vpack.c.bf16 %v3621, %v3621
    %v3630 = vpack.c.bf16 %v3622, %v3622
    %v3631 = vpack.c.bf16 %v3623, %v3623
    %v3632 = vpack.c.bf16 %v3624, %v3624
    %v3633 = vld [vmem:[#allocation13] sm:$0xf]
    %v3634 = vld [vmem:[#allocation13 + $0x4] sm:$0xf]
    %v3635 = vld [vmem:[#allocation13 + $0x8] sm:$0xf]
    %v3636 = vld [vmem:[#allocation13 + $0xc] sm:$0xf]
    %v3637 = vld [vmem:[#allocation13 + $0x10] sm:$0xf]
    %v3638 = vld [vmem:[#allocation13 + $0x14] sm:$0xf]
    %v3639 = vld [vmem:[#allocation13 + $0x18] sm:$0xf]
    %v3640 = vld [vmem:[#allocation13 + $0x1c] sm:$0xf]
    %v3641 = vld [vmem:[#allocation13 + $0x20] sm:$0xf]
    %v3642 = vld [vmem:[#allocation13 + $0x24] sm:$0xf]
    %v3643 = vld [vmem:[#allocation13 + $0x28] sm:$0xf]
    %v3644 = vld [vmem:[#allocation13 + $0x2c] sm:$0xf]
    %v3645 = vld [vmem:[#allocation13 + $0x30] sm:$0xf]
    %v3646 = vld [vmem:[#allocation13 + $0x34] sm:$0xf]
    %v3647 = vld [vmem:[#allocation13 + $0x38] sm:$0xf]
    %v3648 = vld [vmem:[#allocation13 + $0x3c] sm:$0xf]
    %v3649 = vld [vmem:[#allocation13 + $0x40] sm:$0xf]
    %v3650 = vld [vmem:[#allocation13 + $0x44] sm:$0xf]
    %v3651 = vld [vmem:[#allocation13 + $0x48] sm:$0xf]
    %v3652 = vld [vmem:[#allocation13 + $0x4c] sm:$0xf]
    %v3653 = vld [vmem:[#allocation13 + $0x50] sm:$0xf]
    %v3654 = vld [vmem:[#allocation13 + $0x54] sm:$0xf]
    %v3655 = vld [vmem:[#allocation13 + $0x58] sm:$0xf]
    %v3656 = vld [vmem:[#allocation13 + $0x5c] sm:$0xf]
    %v3657 = vld [vmem:[#allocation13 + $0x60] sm:$0xf]
    %v3658 = vld [vmem:[#allocation13 + $0x64] sm:$0xf]
    %v3659 = vld [vmem:[#allocation13 + $0x68] sm:$0xf]
    %v3660 = vld [vmem:[#allocation13 + $0x6c] sm:$0xf]
    %v3661 = vld [vmem:[#allocation13 + $0x70] sm:$0xf]
    %v3662 = vld [vmem:[#allocation13 + $0x74] sm:$0xf]
    %v3663 = vld [vmem:[#allocation13 + $0x78] sm:$0xf]
    %v3664 = vld [vmem:[#allocation13 + $0x7c] sm:$0xf]
    %v3665 = vld [vmem:[#allocation13 + $0x80] sm:$0xf]
    %v3666 = vld [vmem:[#allocation13 + $0x84] sm:$0xf]
    %v3667 = vld [vmem:[#allocation13 + $0x88] sm:$0xf]
    %v3668 = vld [vmem:[#allocation13 + $0x8c] sm:$0xf]
    %v3669 = vld [vmem:[#allocation13 + $0x90] sm:$0xf]
    %v3670 = vld [vmem:[#allocation13 + $0x94] sm:$0xf]
    %v3671 = vld [vmem:[#allocation13 + $0x98] sm:$0xf]
    %v3672 = vld [vmem:[#allocation13 + $0x9c] sm:$0xf]
    %v3673 = vld [vmem:[#allocation13 + $0xa0] sm:$0xf]
    %v3674 = vld [vmem:[#allocation13 + $0xa4] sm:$0xf]
    %v3675 = vld [vmem:[#allocation13 + $0xa8] sm:$0xf]
    %v3676 = vld [vmem:[#allocation13 + $0xac] sm:$0xf]
    %v3677 = vld [vmem:[#allocation13 + $0xb0] sm:$0xf]
    %v3678 = vld [vmem:[#allocation13 + $0xb4] sm:$0xf]
    %v3679 = vld [vmem:[#allocation13 + $0xb8] sm:$0xf]
    %v3680 = vld [vmem:[#allocation13 + $0xbc] sm:$0xf]
    %v3681 = vld [vmem:[#allocation13 + $0xc0] sm:$0xf]
    %v3682 = vld [vmem:[#allocation13 + $0xc4] sm:$0xf]
    %v3683 = vld [vmem:[#allocation13 + $0xc8] sm:$0xf]
    %v3684 = vld [vmem:[#allocation13 + $0xcc] sm:$0xf]
    %v3685 = vld [vmem:[#allocation13 + $0xd0] sm:$0xf]
    %v3686 = vld [vmem:[#allocation13 + $0xd4] sm:$0xf]
    %v3687 = vld [vmem:[#allocation13 + $0xd8] sm:$0xf]
    %v3688 = vld [vmem:[#allocation13 + $0xdc] sm:$0xf]
    %v3689 = vld [vmem:[#allocation13 + $0xe0] sm:$0xf]
    %v3690 = vld [vmem:[#allocation13 + $0xe4] sm:$0xf]
    %v3691 = vld [vmem:[#allocation13 + $0xe8] sm:$0xf]
    %v3692 = vld [vmem:[#allocation13 + $0xec] sm:$0xf]
    %v3693 = vld [vmem:[#allocation13 + $0xf0] sm:$0xf]
    %v3694 = vld [vmem:[#allocation13 + $0xf4] sm:$0xf]
    %v3695 = vld [vmem:[#allocation13 + $0xf8] sm:$0xf]
    %v3696 = vld [vmem:[#allocation13 + $0xfc] sm:$0xf]
    %v3697 = vld [vmem:[#allocation13 + $0x100] sm:$0xf]
    %v3698 = vld [vmem:[#allocation13 + $0x104] sm:$0xf]
    %v3699 = vld [vmem:[#allocation13 + $0x108] sm:$0xf]
    %v3700 = vld [vmem:[#allocation13 + $0x10c] sm:$0xf]
    %v3701 = vld [vmem:[#allocation13 + $0x110] sm:$0xf]
    %v3702 = vld [vmem:[#allocation13 + $0x114] sm:$0xf]
    %v3703 = vld [vmem:[#allocation13 + $0x118] sm:$0xf]
    %v3704 = vld [vmem:[#allocation13 + $0x11c] sm:$0xf]
    %v3705 = vld [vmem:[#allocation13 + $0x120] sm:$0xf]
    %v3706 = vld [vmem:[#allocation13 + $0x124] sm:$0xf]
    %v3707 = vld [vmem:[#allocation13 + $0x128] sm:$0xf]
    %v3708 = vld [vmem:[#allocation13 + $0x12c] sm:$0xf]
    %v3709 = vld [vmem:[#allocation13 + $0x130] sm:$0xf]
    %v3710 = vld [vmem:[#allocation13 + $0x134] sm:$0xf]
    %v3711 = vld [vmem:[#allocation13 + $0x138] sm:$0xf]
    %v3712 = vld [vmem:[#allocation13 + $0x13c] sm:$0xf]
    %v3713 = vld [vmem:[#allocation13 + $0x140] sm:$0xf]
    %v3714 = vld [vmem:[#allocation13 + $0x144] sm:$0xf]
    %v3715 = vld [vmem:[#allocation13 + $0x148] sm:$0xf]
    %v3716 = vld [vmem:[#allocation13 + $0x14c] sm:$0xf]
    %v3717 = vld [vmem:[#allocation13 + $0x150] sm:$0xf]
    %v3718 = vld [vmem:[#allocation13 + $0x154] sm:$0xf]
    %v3719 = vld [vmem:[#allocation13 + $0x158] sm:$0xf]
    %v3720 = vld [vmem:[#allocation13 + $0x15c] sm:$0xf]
    %v3721 = vld [vmem:[#allocation13 + $0x160] sm:$0xf]
    %v3722 = vld [vmem:[#allocation13 + $0x164] sm:$0xf]
    %v3723 = vld [vmem:[#allocation13 + $0x168] sm:$0xf]
    %v3724 = vld [vmem:[#allocation13 + $0x16c] sm:$0xf]
    %v3725 = vld [vmem:[#allocation13 + $0x170] sm:$0xf]
    %v3726 = vld [vmem:[#allocation13 + $0x174] sm:$0xf]
    %v3727 = vld [vmem:[#allocation13 + $0x178] sm:$0xf]
    %v3728 = vld [vmem:[#allocation13 + $0x17c] sm:$0xf]
    %v3729 = vld [vmem:[#allocation13 + $0x180] sm:$0xf]
    %v3730 = vld [vmem:[#allocation13 + $0x184] sm:$0xf]
    %v3731 = vld [vmem:[#allocation13 + $0x188] sm:$0xf]
    %v3732 = vld [vmem:[#allocation13 + $0x18c] sm:$0xf]
    %v3733 = vld [vmem:[#allocation13 + $0x190] sm:$0xf]
    %v3734 = vld [vmem:[#allocation13 + $0x194] sm:$0xf]
    %v3735 = vld [vmem:[#allocation13 + $0x198] sm:$0xf]
    %v3736 = vld [vmem:[#allocation13 + $0x19c] sm:$0xf]
    %v3737 = vld [vmem:[#allocation13 + $0x1a0] sm:$0xf]
    %v3738 = vld [vmem:[#allocation13 + $0x1a4] sm:$0xf]
    %v3739 = vld [vmem:[#allocation13 + $0x1a8] sm:$0xf]
    %v3740 = vld [vmem:[#allocation13 + $0x1ac] sm:$0xf]
    %v3741 = vld [vmem:[#allocation13 + $0x1b0] sm:$0xf]
    %v3742 = vld [vmem:[#allocation13 + $0x1b4] sm:$0xf]
    %v3743 = vld [vmem:[#allocation13 + $0x1b8] sm:$0xf]
    %v3744 = vld [vmem:[#allocation13 + $0x1bc] sm:$0xf]
    %v3745 = vld [vmem:[#allocation13 + $0x1c0] sm:$0xf]
    %v3746 = vld [vmem:[#allocation13 + $0x1c4] sm:$0xf]
    %v3747 = vld [vmem:[#allocation13 + $0x1c8] sm:$0xf]
    %v3748 = vld [vmem:[#allocation13 + $0x1cc] sm:$0xf]
    %v3749 = vld [vmem:[#allocation13 + $0x1d0] sm:$0xf]
    %v3750 = vld [vmem:[#allocation13 + $0x1d4] sm:$0xf]
    %v3751 = vld [vmem:[#allocation13 + $0x1d8] sm:$0xf]
    %v3752 = vld [vmem:[#allocation13 + $0x1dc] sm:$0xf]
    %v3753 = vld [vmem:[#allocation13 + $0x1e0] sm:$0xf]
    %v3754 = vld [vmem:[#allocation13 + $0x1e4] sm:$0xf]
    %v3755 = vld [vmem:[#allocation13 + $0x1e8] sm:$0xf]
    %v3756 = vld [vmem:[#allocation13 + $0x1ec] sm:$0xf]
    %v3757 = vld [vmem:[#allocation13 + $0x1f0] sm:$0xf]
    %v3758 = vld [vmem:[#allocation13 + $0x1f4] sm:$0xf]
    %v3759 = vld [vmem:[#allocation13 + $0x1f8] sm:$0xf]
    %v3760 = vld [vmem:[#allocation13 + $0x1fc] sm:$0xf]
    %v3889 = vunpack.c.l.b16 %v3633
    %v3890 = vunpack.c.l.b16 %v3634
    %v3891 = vunpack.c.l.b16 %v3635
    %v3892 = vunpack.c.l.b16 %v3636
    %v3893 = vunpack.c.l.b16 %v3637
    %v3894 = vunpack.c.l.b16 %v3638
    %v3895 = vunpack.c.l.b16 %v3639
    %v3896 = vunpack.c.l.b16 %v3640
    %v3897 = vunpack.c.l.b16 %v3641
    %v3898 = vunpack.c.l.b16 %v3642
    %v3899 = vunpack.c.l.b16 %v3643
    %v3900 = vunpack.c.l.b16 %v3644
    %v3901 = vunpack.c.l.b16 %v3645
    %v3902 = vunpack.c.l.b16 %v3646
    %v3903 = vunpack.c.l.b16 %v3647
    %v3904 = vunpack.c.l.b16 %v3648
    %v3905 = vunpack.c.l.b16 %v3649
    %v3906 = vunpack.c.l.b16 %v3650
    %v3907 = vunpack.c.l.b16 %v3651
    %v3908 = vunpack.c.l.b16 %v3652
    %v3909 = vunpack.c.l.b16 %v3653
    %v3910 = vunpack.c.l.b16 %v3654
    %v3911 = vunpack.c.l.b16 %v3655
    %v3912 = vunpack.c.l.b16 %v3656
    %v3913 = vunpack.c.l.b16 %v3657
    %v3914 = vunpack.c.l.b16 %v3658
    %v3915 = vunpack.c.l.b16 %v3659
    %v3916 = vunpack.c.l.b16 %v3660
    %v3917 = vunpack.c.l.b16 %v3661
    %v3918 = vunpack.c.l.b16 %v3662
    %v3919 = vunpack.c.l.b16 %v3663
    %v3920 = vunpack.c.l.b16 %v3664
    %v3921 = vunpack.c.l.b16 %v3665
    %v3922 = vunpack.c.l.b16 %v3666
    %v3923 = vunpack.c.l.b16 %v3667
    %v3924 = vunpack.c.l.b16 %v3668
    %v3925 = vunpack.c.l.b16 %v3669
    %v3926 = vunpack.c.l.b16 %v3670
    %v3927 = vunpack.c.l.b16 %v3671
    %v3928 = vunpack.c.l.b16 %v3672
    %v3929 = vunpack.c.l.b16 %v3673
    %v3930 = vunpack.c.l.b16 %v3674
    %v3931 = vunpack.c.l.b16 %v3675
    %v3932 = vunpack.c.l.b16 %v3676
    %v3933 = vunpack.c.l.b16 %v3677
    %v3934 = vunpack.c.l.b16 %v3678
    %v3935 = vunpack.c.l.b16 %v3679
    %v3936 = vunpack.c.l.b16 %v3680
    %v3937 = vunpack.c.l.b16 %v3681
    %v3938 = vunpack.c.l.b16 %v3682
    %v3939 = vunpack.c.l.b16 %v3683
    %v3940 = vunpack.c.l.b16 %v3684
    %v3941 = vunpack.c.l.b16 %v3685
    %v3942 = vunpack.c.l.b16 %v3686
    %v3943 = vunpack.c.l.b16 %v3687
    %v3944 = vunpack.c.l.b16 %v3688
    %v3945 = vunpack.c.l.b16 %v3689
    %v3946 = vunpack.c.l.b16 %v3690
    %v3947 = vunpack.c.l.b16 %v3691
    %v3948 = vunpack.c.l.b16 %v3692
    %v3949 = vunpack.c.l.b16 %v3693
    %v3950 = vunpack.c.l.b16 %v3694
    %v3951 = vunpack.c.l.b16 %v3695
    %v3952 = vunpack.c.l.b16 %v3696
    %v3953 = vunpack.c.l.b16 %v3697
    %v3954 = vunpack.c.l.b16 %v3698
    %v3955 = vunpack.c.l.b16 %v3699
    %v3956 = vunpack.c.l.b16 %v3700
    %v3957 = vunpack.c.l.b16 %v3701
    %v3958 = vunpack.c.l.b16 %v3702
    %v3959 = vunpack.c.l.b16 %v3703
    %v3960 = vunpack.c.l.b16 %v3704
    %v3961 = vunpack.c.l.b16 %v3705
    %v3962 = vunpack.c.l.b16 %v3706
    %v3963 = vunpack.c.l.b16 %v3707
    %v3964 = vunpack.c.l.b16 %v3708
    %v3965 = vunpack.c.l.b16 %v3709
    %v3966 = vunpack.c.l.b16 %v3710
    %v3967 = vunpack.c.l.b16 %v3711
    %v3968 = vunpack.c.l.b16 %v3712
    %v3969 = vunpack.c.l.b16 %v3713
    %v3970 = vunpack.c.l.b16 %v3714
    %v3971 = vunpack.c.l.b16 %v3715
    %v3972 = vunpack.c.l.b16 %v3716
    %v3973 = vunpack.c.l.b16 %v3717
    %v3974 = vunpack.c.l.b16 %v3718
    %v3975 = vunpack.c.l.b16 %v3719
    %v3976 = vunpack.c.l.b16 %v3720
    %v3977 = vunpack.c.l.b16 %v3721
    %v3978 = vunpack.c.l.b16 %v3722
    %v3979 = vunpack.c.l.b16 %v3723
    %v3980 = vunpack.c.l.b16 %v3724
    %v3981 = vunpack.c.l.b16 %v3725
    %v3982 = vunpack.c.l.b16 %v3726
    %v3983 = vunpack.c.l.b16 %v3727
    %v3984 = vunpack.c.l.b16 %v3728
    %v3985 = vunpack.c.l.b16 %v3729
    %v3986 = vunpack.c.l.b16 %v3730
    %v3987 = vunpack.c.l.b16 %v3731
    %v3988 = vunpack.c.l.b16 %v3732
    %v3989 = vunpack.c.l.b16 %v3733
    %v3990 = vunpack.c.l.b16 %v3734
    %v3991 = vunpack.c.l.b16 %v3735
    %v3992 = vunpack.c.l.b16 %v3736
    %v3993 = vunpack.c.l.b16 %v3737
    %v3994 = vunpack.c.l.b16 %v3738
    %v3995 = vunpack.c.l.b16 %v3739
    %v3996 = vunpack.c.l.b16 %v3740
    %v3997 = vunpack.c.l.b16 %v3741
    %v3998 = vunpack.c.l.b16 %v3742
    %v3999 = vunpack.c.l.b16 %v3743
    %v4000 = vunpack.c.l.b16 %v3744
    %v4001 = vunpack.c.l.b16 %v3745
    %v4002 = vunpack.c.l.b16 %v3746
    %v4003 = vunpack.c.l.b16 %v3747
    %v4004 = vunpack.c.l.b16 %v3748
    %v4005 = vunpack.c.l.b16 %v3749
    %v4006 = vunpack.c.l.b16 %v3750
    %v4007 = vunpack.c.l.b16 %v3751
    %v4008 = vunpack.c.l.b16 %v3752
    %v4009 = vunpack.c.l.b16 %v3753
    %v4010 = vunpack.c.l.b16 %v3754
    %v4011 = vunpack.c.l.b16 %v3755
    %v4012 = vunpack.c.l.b16 %v3756
    %v4013 = vunpack.c.l.b16 %v3757
    %v4014 = vunpack.c.l.b16 %v3758
    %v4015 = vunpack.c.l.b16 %v3759
    %v4016 = vunpack.c.l.b16 %v3760
    %v4017 = vpack.c.b16 %v3890, %v3889
    %v4018 = vpack.c.b16 %v3892, %v3891
    %v4019 = vpack.c.b16 %v3894, %v3893
    %v4020 = vpack.c.b16 %v3896, %v3895
    %v4021 = vpack.c.b16 %v3898, %v3897
    %v4022 = vpack.c.b16 %v3900, %v3899
    %v4023 = vpack.c.b16 %v3902, %v3901
    %v4024 = vpack.c.b16 %v3904, %v3903
    %v4025 = vpack.c.b16 %v3906, %v3905
    %v4026 = vpack.c.b16 %v3908, %v3907
    %v4027 = vpack.c.b16 %v3910, %v3909
    %v4028 = vpack.c.b16 %v3912, %v3911
    %v4029 = vpack.c.b16 %v3914, %v3913
    %v4030 = vpack.c.b16 %v3916, %v3915
    %v4031 = vpack.c.b16 %v3918, %v3917
    %v4032 = vpack.c.b16 %v3920, %v3919
    %v4033 = vpack.c.b16 %v3922, %v3921
    %v4034 = vpack.c.b16 %v3924, %v3923
    %v4035 = vpack.c.b16 %v3926, %v3925
    %v4036 = vpack.c.b16 %v3928, %v3927
    %v4037 = vpack.c.b16 %v3930, %v3929
    %v4038 = vpack.c.b16 %v3932, %v3931
    %v4039 = vpack.c.b16 %v3934, %v3933
    %v4040 = vpack.c.b16 %v3936, %v3935
    %v4041 = vpack.c.b16 %v3938, %v3937
    %v4042 = vpack.c.b16 %v3940, %v3939
    %v4043 = vpack.c.b16 %v3942, %v3941
    %v4044 = vpack.c.b16 %v3944, %v3943
    %v4045 = vpack.c.b16 %v3946, %v3945
    %v4046 = vpack.c.b16 %v3948, %v3947
    %v4047 = vpack.c.b16 %v3950, %v3949
    %v4048 = vpack.c.b16 %v3952, %v3951
    %v4049 = vpack.c.b16 %v3954, %v3953
    %v4050 = vpack.c.b16 %v3956, %v3955
    %v4051 = vpack.c.b16 %v3958, %v3957
    %v4052 = vpack.c.b16 %v3960, %v3959
    %v4053 = vpack.c.b16 %v3962, %v3961
    %v4054 = vpack.c.b16 %v3964, %v3963
    %v4055 = vpack.c.b16 %v3966, %v3965
    %v4056 = vpack.c.b16 %v3968, %v3967
    %v4057 = vpack.c.b16 %v3970, %v3969
    %v4058 = vpack.c.b16 %v3972, %v3971
    %v4059 = vpack.c.b16 %v3974, %v3973
    %v4060 = vpack.c.b16 %v3976, %v3975
    %v4061 = vpack.c.b16 %v3978, %v3977
    %v4062 = vpack.c.b16 %v3980, %v3979
    %v4063 = vpack.c.b16 %v3982, %v3981
    %v4064 = vpack.c.b16 %v3984, %v3983
    %v4065 = vpack.c.b16 %v3986, %v3985
    %v4066 = vpack.c.b16 %v3988, %v3987
    %v4067 = vpack.c.b16 %v3990, %v3989
    %v4068 = vpack.c.b16 %v3992, %v3991
    %v4069 = vpack.c.b16 %v3994, %v3993
    %v4070 = vpack.c.b16 %v3996, %v3995
    %v4071 = vpack.c.b16 %v3998, %v3997
    %v4072 = vpack.c.b16 %v4000, %v3999
    %v4073 = vpack.c.b16 %v4002, %v4001
    %v4074 = vpack.c.b16 %v4004, %v4003
    %v4075 = vpack.c.b16 %v4006, %v4005
    %v4076 = vpack.c.b16 %v4008, %v4007
    %v4077 = vpack.c.b16 %v4010, %v4009
    %v4078 = vpack.c.b16 %v4012, %v4011
    %v4079 = vpack.c.b16 %v4014, %v4013
    %v4080 = vpack.c.b16 %v4016, %v4015
    %4145 = vmatprep.subr.bf16.mxu0 0
    %4146 = vmatpush1.bf16.msra.mxu0 %v4024
    %4147 = vmatprep.subr.bf16.mxu0 0
    %4148 = vmatpush1.bf16.msra.mxu0 %v4023
    %4149 = vmatprep.subr.bf16.mxu0 0
    %4150 = vmatpush1.bf16.msra.mxu0 %v4022
    %4151 = vmatprep.subr.bf16.mxu0 0
    %4152 = vmatpush1.bf16.msra.mxu0 %v4021
    %4153 = vmatprep.subr.bf16.mxu0 0
    %4154 = vmatpush1.bf16.msra.mxu0 %v4020
    %4155 = vmatprep.subr.bf16.mxu0 0
    %4156 = vmatpush1.bf16.msra.mxu0 %v4019
    %4157 = vmatprep.subr.bf16.mxu0 0
    %4158 = vmatpush1.bf16.msra.mxu0 %v4018
    %4159 = vmatprep.subr.bf16.mxu0 0
    %4160 = vmatpush1.bf16.msra.mxu0 %v4017
    %4161 = vmatprep.subr.bf16.mxu0 0
    %4162 = vmatpush2.bf16.msra.mxu0 %v4032
    %4163 = vmatprep.subr.bf16.mxu0 0
    %4164 = vmatpush2.bf16.msra.mxu0 %v4031
    %4165 = vmatprep.subr.bf16.mxu0 0
    %4166 = vmatpush2.bf16.msra.mxu0 %v4030
    %4167 = vmatprep.subr.bf16.mxu0 0
    %4168 = vmatpush2.bf16.msra.mxu0 %v4029
    %4169 = vmatprep.subr.bf16.mxu0 0
    %4170 = vmatpush2.bf16.msra.mxu0 %v4028
    %4171 = vmatprep.subr.bf16.mxu0 0
    %4172 = vmatpush2.bf16.msra.mxu0 %v4027
    %4173 = vmatprep.subr.bf16.mxu0 0
    %4174 = vmatpush2.bf16.msra.mxu0 %v4026
    %4175 = vmatprep.subr.bf16.mxu0 0
    %4176 = vmatpush2.bf16.msra.mxu0 %v4025
    %4177 = vmatprep.mubr.bf16.mxu0 %v3626
    %4178 = vmatmul.mubr.bf16.gmra.mxu0 %v3625
    %v4179 = vpop.f32.mrf.mxu0
    %v4180 = vadd.f32 %v154, %v4179
    %v4181 = vpop.f32.mrf.mxu0
    %v4182 = vpop.f32.mrf.mxu0
    %v4183 = vpop.f32.mrf.mxu0
    %4184 = vdwg.mxu0
    %4185 = vmatprep.subr.bf16.mxu0 0
    %4186 = vmatpush1.bf16.msra.mxu0 %v4040
    %4187 = vmatprep.subr.bf16.mxu0 0
    %4188 = vmatpush1.bf16.msra.mxu0 %v4039
    %4189 = vmatprep.subr.bf16.mxu0 0
    %4190 = vmatpush1.bf16.msra.mxu0 %v4038
    %4191 = vmatprep.subr.bf16.mxu0 0
    %4192 = vmatpush1.bf16.msra.mxu0 %v4037
    %4193 = vmatprep.subr.bf16.mxu0 0
    %4194 = vmatpush1.bf16.msra.mxu0 %v4036
    %4195 = vmatprep.subr.bf16.mxu0 0
    %4196 = vmatpush1.bf16.msra.mxu0 %v4035
    %4197 = vmatprep.subr.bf16.mxu0 0
    %4198 = vmatpush1.bf16.msra.mxu0 %v4034
    %4199 = vmatprep.subr.bf16.mxu0 0
    %4200 = vmatpush1.bf16.msra.mxu0 %v4033
    %4201 = vmatprep.subr.bf16.mxu0 0
    %4202 = vmatpush2.bf16.msra.mxu0 %v4048
    %4203 = vmatprep.subr.bf16.mxu0 0
    %4204 = vmatpush2.bf16.msra.mxu0 %v4047
    %4205 = vmatprep.subr.bf16.mxu0 0
    %4206 = vmatpush2.bf16.msra.mxu0 %v4046
    %4207 = vmatprep.subr.bf16.mxu0 0
    %4208 = vmatpush2.bf16.msra.mxu0 %v4045
    %4209 = vmatprep.subr.bf16.mxu0 0
    %4210 = vmatpush2.bf16.msra.mxu0 %v4044
    %4211 = vmatprep.subr.bf16.mxu0 0
    %4212 = vmatpush2.bf16.msra.mxu0 %v4043
    %4213 = vmatprep.subr.bf16.mxu0 0
    %4214 = vmatpush2.bf16.msra.mxu0 %v4042
    %4215 = vmatprep.subr.bf16.mxu0 0
    %4216 = vmatpush2.bf16.msra.mxu0 %v4041
    %4217 = vmatprep.mubr.bf16.mxu0 %v3628
    %4218 = vmatmul.mubr.bf16.gmra.mxu0 %v3627
    %v4219 = vpop.f32.mrf.mxu0
    %v4220 = vadd.f32 %v4180, %v4219
    %v4221 = vpop.f32.mrf.mxu0
    %v4222 = vpop.f32.mrf.mxu0
    %v4223 = vpop.f32.mrf.mxu0
    %4224 = vdwg.mxu0
    %4225 = vmatprep.subr.bf16.mxu0 0
    %4226 = vmatpush1.bf16.msra.mxu0 %v4056
    %4227 = vmatprep.subr.bf16.mxu0 0
    %4228 = vmatpush1.bf16.msra.mxu0 %v4055
    %4229 = vmatprep.subr.bf16.mxu0 0
    %4230 = vmatpush1.bf16.msra.mxu0 %v4054
    %4231 = vmatprep.subr.bf16.mxu0 0
    %4232 = vmatpush1.bf16.msra.mxu0 %v4053
    %4233 = vmatprep.subr.bf16.mxu0 0
    %4234 = vmatpush1.bf16.msra.mxu0 %v4052
    %4235 = vmatprep.subr.bf16.mxu0 0
    %4236 = vmatpush1.bf16.msra.mxu0 %v4051
    %4237 = vmatprep.subr.bf16.mxu0 0
    %4238 = vmatpush1.bf16.msra.mxu0 %v4050
    %4239 = vmatprep.subr.bf16.mxu0 0
    %4240 = vmatpush1.bf16.msra.mxu0 %v4049
    %4241 = vmatprep.subr.bf16.mxu0 0
    %4242 = vmatpush2.bf16.msra.mxu0 %v4064
    %4243 = vmatprep.subr.bf16.mxu0 0
    %4244 = vmatpush2.bf16.msra.mxu0 %v4063
    %4245 = vmatprep.subr.bf16.mxu0 0
    %4246 = vmatpush2.bf16.msra.mxu0 %v4062
    %4247 = vmatprep.subr.bf16.mxu0 0
    %4248 = vmatpush2.bf16.msra.mxu0 %v4061
    %4249 = vmatprep.subr.bf16.mxu0 0
    %4250 = vmatpush2.bf16.msra.mxu0 %v4060
    %4251 = vmatprep.subr.bf16.mxu0 0
    %4252 = vmatpush2.bf16.msra.mxu0 %v4059
    %4253 = vmatprep.subr.bf16.mxu0 0
    %4254 = vmatpush2.bf16.msra.mxu0 %v4058
    %4255 = vmatprep.subr.bf16.mxu0 0
    %4256 = vmatpush2.bf16.msra.mxu0 %v4057
    %4257 = vmatprep.mubr.bf16.mxu0 %v3630
    %4258 = vmatmul.mubr.bf16.gmra.mxu0 %v3629
    %v4259 = vpop.f32.mrf.mxu0
    %v4260 = vadd.f32 %v4220, %v4259
    %v4261 = vpop.f32.mrf.mxu0
    %v4262 = vpop.f32.mrf.mxu0
    %v4263 = vpop.f32.mrf.mxu0
    %4264 = vdwg.mxu0
    %4265 = vmatprep.subr.bf16.mxu0 0
    %4266 = vmatpush1.bf16.msra.mxu0 %v4072
    %4267 = vmatprep.subr.bf16.mxu0 0
    %4268 = vmatpush1.bf16.msra.mxu0 %v4071
    %4269 = vmatprep.subr.bf16.mxu0 0
    %4270 = vmatpush1.bf16.msra.mxu0 %v4070
    %4271 = vmatprep.subr.bf16.mxu0 0
    %4272 = vmatpush1.bf16.msra.mxu0 %v4069
    %4273 = vmatprep.subr.bf16.mxu0 0
    %4274 = vmatpush1.bf16.msra.mxu0 %v4068
    %4275 = vmatprep.subr.bf16.mxu0 0
    %4276 = vmatpush1.bf16.msra.mxu0 %v4067
    %4277 = vmatprep.subr.bf16.mxu0 0
    %4278 = vmatpush1.bf16.msra.mxu0 %v4066
    %4279 = vmatprep.subr.bf16.mxu0 0
    %4280 = vmatpush1.bf16.msra.mxu0 %v4065
    %4281 = vmatprep.subr.bf16.mxu0 0
    %4282 = vmatpush2.bf16.msra.mxu0 %v4080
    %4283 = vmatprep.subr.bf16.mxu0 0
    %4284 = vmatpush2.bf16.msra.mxu0 %v4079
    %4285 = vmatprep.subr.bf16.mxu0 0
    %4286 = vmatpush2.bf16.msra.mxu0 %v4078
    %4287 = vmatprep.subr.bf16.mxu0 0
    %4288 = vmatpush2.bf16.msra.mxu0 %v4077
    %4289 = vmatprep.subr.bf16.mxu0 0
    %4290 = vmatpush2.bf16.msra.mxu0 %v4076
    %4291 = vmatprep.subr.bf16.mxu0 0
    %4292 = vmatpush2.bf16.msra.mxu0 %v4075
    %4293 = vmatprep.subr.bf16.mxu0 0
    %4294 = vmatpush2.bf16.msra.mxu0 %v4074
    %4295 = vmatprep.subr.bf16.mxu0 0
    %4296 = vmatpush2.bf16.msra.mxu0 %v4073
    %4297 = vmatprep.mubr.bf16.mxu0 %v3632
    %4298 = vmatmul.mubr.bf16.gmra.mxu0 %v3631
    %v4299 = vpop.f32.mrf.mxu0
    %v4300 = vadd.f32 %v4260, %v4299
    %v4301 = vpop.f32.mrf.mxu0
    %v4302 = vpop.f32.mrf.mxu0
    %v4303 = vpop.f32.mrf.mxu0
    %4304 = vdwg.mxu0
    %v4305 = vtanh.pop %v4300
    %4306 = vst [vmem:[#allocation14] sm:$0xff] %v4305
    // Predicated region
    $region66: #{tpu_custom_call.1} parent=1 // pred_check
      _
    $region67: #{tpu_custom_call.1} parent=1 // pred_check_branch
      %4308 = sbr.rel (0) target = $region69
    $region68: #{tpu_custom_call.1} parent=1 // pred_region
      %s4310 = ssub.s32 128, 128
      %4311 = vsyncadd [#allocation4], %s4310
      %s4313 = sshll.u32 [#allocation14], 4
      %s4314 = int_to_ptr.vmem [resolvable:$true] %s4313
      %4316 = dma.vmem_to_hbm [thread:$0]  %s4314, 128, %s9, [#allocation4]
    $region69: #{tpu_custom_call.1} parent=1 // pred_fallthru
      _
    // Predicated region
    $region70: #{tpu_custom_call.1} parent=1 // pred_check
      _
    $region71: #{tpu_custom_call.1} parent=1 // pred_check_branch
      %4318 = sbr.rel (0) target = $region73
    $region72: #{tpu_custom_call.1} parent=1 // pred_region
      %4319 = dma.done [#allocation4], 128
    $region73: #{tpu_custom_call.1} parent=1 // pred_fallthru
      _
    %4320 = vsyncpa [#allocation3], 1
    %4321 = vsyncpa [#allocation6], 1
    %4322 = vsyncpa [#allocation9], 1
    %4323 = vsyncpa [#allocation12], 1
    %4324 = vsyncpa [#allocation4], 1

</llo_original>
